<compile_context>
chip_gen: v5e
topology: v5e:2x2
jax: 0.10.0
libtpu: 0.0.40
codegen_flags: <defaults>
</compile_context>

<pallas_src>
import numpy as np
import jax
import jax.numpy as jnp
from jax import lax
from jax.experimental import pallas as pl
from jax.experimental.pallas import tpu as pltpu

HIDDEN = 1024        # BERT-large hidden size (RawGlobalPointer(hiddensize=1024, ...))
INNER_DIM = 64       # RawGlobalPointer inner_dim
ENT_TYPES = 4        # ent_type_size (small synthetic value)
BATCH = 2
SEQ = 16
VOCAB = 128
TYPE_VOCAB = 2
MAX_POS = 64
NEG_INF = 1e12
KPAD = 128           # lane-dense padded key axis (multiple of 128)


# ----------------------------------------------------------------------------
# Pallas kernel: RawGlobalPointer forward, all batch elements + entity types in one step
# ----------------------------------------------------------------------------
def gp_kernel(h_ref, w_ref, b_ref, cos_ref, sin_ref, amask_ref, out_ref, kbuf):
    B, E, S, _ = out_ref.shape
    D = kbuf.shape[1]            # inner_dim
    QW = cos_ref.shape[1]        # E * 2D : width of the plain-projection half

    # ONE wide projection for every entity type and both column groups
    # (plain weights | rotation-folded weights). (B*S, H) x (H, 2*E*2D) on the MXU.
    y = jnp.dot(h_ref[...], w_ref[...], preferred_element_type=jnp.float32) + b_ref[...]
    x = y[:, :QW]                # h @ W                 (B*S, E*2D)
    x2 = y[:, QW:]               # h @ rot_cols(W)  ==  pairwise_rotate(x) exactly

    # RoPE for every entity's [q | k] block in a single elementwise pass.
    r = x * cos_ref[...] + x2 * sin_ref[...]             # (B*S, E*2D)

    # zeroed key scratch keeps the logits key axis lane-dense (KPAD) without projecting
    # the padded rows; rows >= S stay zero for the whole kernel.
    kbuf[...] = jnp.zeros_like(kbuf)

    for b in range(B):                                   # static unroll, B and E tiny
        rb = r[b * S:(b + 1) * S]                        # (S, E*2D) rows of batch b
        am = amask_ref[b]                                # (S, KPAD) combined additive mask
        for e in range(E):
            q = rb[:, e * 2 * D: e * 2 * D + D]          # (S, D); carries 1/sqrt(D)
            kbuf[0:S, :] = rb[:, e * 2 * D + D:(e + 1) * 2 * D]
            # logits[m, n] = q[m] . k[n]; key axis lane-dense (KPAD) -> unmasked stores
            logits = lax.dot_general(q, kbuf[...], (((1,), (1,)), ((), ())),
                                     preferred_element_type=jnp.float32)   # (S, KPAD)
            out_ref[b, e] = logits + am


# ----------------------------------------------------------------------------
# One-time (mask-independent) host preparation
# ----------------------------------------------------------------------------
def sinusoidal_half(seq_len, dim):
    # cos/sin(pos * 10000^(-2i/dim)), i.e. the tables before repeat_interleave(2).
    pos = jnp.arange(seq_len, dtype=jnp.float32)[:, None]
    idx = jnp.arange(dim // 2, dtype=jnp.float32)
    theta = jnp.power(10000.0, -2.0 * idx / dim)
    ang = pos * theta
    return jnp.cos(ang), jnp.sin(ang)


def prepare_globalpointer(wsplit, bsplit, batch, seq):
    """wsplit: (E, H, 2D) f32, bsplit: (E, 2D) f32. Returns arrays used every forward."""
    E, H, twoD = wsplit.shape
    D = twoD // 2
    scale = 1.0 / (D ** 0.5)

    # RoPE pairwise rotate ( rot(x)[2i] = -x[2i+1], rot(x)[2i+1] = x[2i] ) is linear,
    # so it is folded into a second weight/bias set:  rot(hW + b) = h*rot_cols(W) + rot(b).
    def rot_cols(w):
        we = w[..., 0::2]
        wo = w[..., 1::2]
        return jnp.stack([-wo, we], axis=-1).reshape(w.shape)

    # fold the 1/sqrt(D) scale into the q half only.
    qk_scale = jnp.concatenate([jnp.full((D,), scale, jnp.float32),
                                jnp.ones((D,), jnp.float32)])
    w1 = wsplit * qk_scale                                   # (E, H, 2D)
    b1 = bsplit * qk_scale                                   # (E, 2D)
    w2 = rot_cols(w1)
    b2 = rot_cols(b1)

    # fuse all projections into one wide matmul: columns = [w1_e0..w1_eE | w2_e0..w2_eE]
    w1f = jnp.transpose(w1, (1, 0, 2)).reshape(H, E * twoD)
    w2f = jnp.transpose(w2, (1, 0, 2)).reshape(H, E * twoD)
    w_all = jnp.concatenate([w1f, w2f], axis=1).astype(jnp.bfloat16)       # (H, 2*E*2D)
    b_all = jnp.concatenate([b1.reshape(-1), b2.reshape(-1)])[None, :]
    b_all = b_all.astype(jnp.float32)                                      # (1, 2*E*2D)

    # interleave-repeated sinusoidal tables, tiled over [q|k], entities, and batch rows.
    cos_h, sin_h = sinusoidal_half(seq, D)                   # (S, D/2)
    cos2 = jnp.concatenate([jnp.repeat(cos_h, 2, axis=-1)] * 2, axis=-1)   # (S, 2D)
    sin2 = jnp.concatenate([jnp.repeat(sin_h, 2, axis=-1)] * 2, axis=-1)
    cos_t = jnp.tile(jnp.tile(cos2, (batch, 1)), (1, E))     # (B*S, E*2D)
    sin_t = jnp.tile(jnp.tile(sin2, (batch, 1)), (1, E))

    # strict lower-triangle additive mask, pre-scaled, padded to KPAD key columns.
    tril = jnp.tril(jnp.ones((seq, seq), jnp.float32), -1)
    tri_neg = jnp.pad(-tril * (NEG_INF * scale), ((0, 0), (0, KPAD - seq)))  # (S, KPAD)

    return {"w_all": w_all, "b_all": b_all, "cos_t": cos_t, "sin_t": sin_t,
            "tri_neg": tri_neg}


# ----------------------------------------------------------------------------
# Per-call wrapper (only pad-mask-dependent prep here)
# ----------------------------------------------------------------------------
def global_pointer(hidden, mask_f, prep):
    """hidden: (B,S,H) f32, mask_f: (B,S) f32."""
    B, S, H = hidden.shape
    E, D = ENT_TYPES, INNER_DIM
    QW = E * 2 * D
    scale = 1.0 / (D ** 0.5)

    h_stack = hidden.reshape(B * S, H).astype(jnp.bfloat16)            # (B*S, H)

    # combined additive mask: padding + strict lower triangle, pre-scaled by 1/sqrt(D).
    pad_neg = jnp.pad(-(1.0 - mask_f) * (NEG_INF * scale),
                      ((0, 0), (0, KPAD - S)))                          # (B, KPAD)
    amask = pad_neg[:, None, :] + prep["tri_neg"][None]                 # (B, S, KPAD)

    out_padded = pl.pallas_call(
        gp_kernel,
        out_shape=jax.ShapeDtypeStruct((B, E, S, KPAD), jnp.float32),
        grid_spec=pltpu.PrefetchScalarGridSpec(
            num_scalar_prefetch=0,
            grid=(1,),
            in_specs=[
                pl.BlockSpec((B * S, H), lambda i: (0, 0)),        # stacked hidden
                pl.BlockSpec((H, 2 * QW), lambda i: (0, 0)),       # fused weights (once)
                pl.BlockSpec((1, 2 * QW), lambda i: (0, 0)),       # fused bias
                pl.BlockSpec((B * S, QW), lambda i: (0, 0)),       # cos table
                pl.BlockSpec((B * S, QW), lambda i: (0, 0)),       # sin table
                pl.BlockSpec((B, S, KPAD), lambda i: (0, 0, 0)),   # combined additive mask
            ],
            out_specs=pl.BlockSpec((B, E, S, KPAD), lambda i: (0, 0, 0, 0)),
            scratch_shapes=[pltpu.VMEM((KPAD, D), jnp.float32)],   # zero-padded key buffer
        ),
        compiler_params=pltpu.CompilerParams(
            dimension_semantics=("arbitrary",)),
    )(h_stack, prep["w_all"], prep["b_all"], prep["cos_t"], prep["sin_t"], amask)

    return out_padded[..., :S]


# ----------------------------------------------------------------------------
# Glue: deterministic encoder stand-in (plain JAX)
# ----------------------------------------------------------------------------
def fake_bert_encoder(params, token_ids, token_type_ids):
    # TODO(synk): pretrained BERT transformer layers not reproduced; embeddings + LN only.
    S = token_ids.shape[1]
    emb = (params["tok_emb"][token_ids]
           + params["seg_emb"][token_type_ids]
           + params["pos_emb"][None, :S, :])
    mu = emb.mean(-1, keepdims=True)
    var = ((emb - mu) ** 2).mean(-1, keepdims=True)
    return (emb - mu) / jnp.sqrt(var + 1e-12)


@jax.jit
def gpnet1_forward(enc_params, gp_prep, token_ids, mask_ids, token_type_ids):
    hidden = fake_bert_encoder(enc_params, token_ids, token_type_ids)
    return global_pointer(hidden, mask_ids.astype(jnp.float32), gp_prep)


# ----------------------------------------------------------------------------
# Pure-JAX reference (mirrors the PyTorch RawGlobalPointer formulas, f32)
# ----------------------------------------------------------------------------
def global_pointer_ref(hidden, mask_f, wsplit, bsplit, cos_pos, sin_pos):
    D = INNER_DIM
    qk = jnp.einsum("bsh,ehd->bsed", hidden, wsplit,
                    precision=lax.Precision.HIGHEST) + bsplit[None, None]
    q, k = qk[..., :D], qk[..., D:]

    def rope(x):
        x2 = jnp.stack([-x[..., 1::2], x[..., ::2]], axis=-1).reshape(x.shape)
        return x * cos_pos[None, :, None, :] + x2 * sin_pos[None, :, None, :]

    q, k = rope(q), rope(k)
    logits = jnp.einsum("bmed,bned->bemn", q, k, precision=lax.Precision.HIGHEST)
    pm = mask_f[:, None, None, :]
    logits = logits * pm - (1.0 - pm) * NEG_INF
    S = hidden.shape[1]
    tril = jnp.tril(jnp.ones((S, S), jnp.float32), -1)
    logits = logits - tril[None, None] * NEG_INF
    return logits / (D ** 0.5)


if __name__ == "__main__":
    key = jax.random.PRNGKey(0)
    k1, k2, k3, k4, k5, k6 = jax.random.split(key, 6)

    enc_params = {
        "tok_emb": jax.random.normal(k1, (VOCAB, HIDDEN), jnp.float32) * 0.02,
        "seg_emb": jax.random.normal(k2, (TYPE_VOCAB, HIDDEN), jnp.float32) * 0.02,
        "pos_emb": jax.random.normal(k3, (MAX_POS, HIDDEN), jnp.float32) * 0.02,
    }
    # nn.Linear(1024, ent_type_size * inner_dim * 2); stored as (H, E*2D) and split per
    # entity type exactly like torch.split(..., inner_dim*2, dim=-1).
    W = jax.random.normal(k4, (HIDDEN, ENT_TYPES * 2 * INNER_DIM), jnp.float32) * 0.02
    bvec = jax.random.normal(k5, (ENT_TYPES * 2 * INNER_DIM,), jnp.float32) * 0.02
    wsplit = W.reshape(HIDDEN, ENT_TYPES, 2 * INNER_DIM).transpose(1, 0, 2)  # (E, H, 2D)
    bsplit = bvec.reshape(ENT_TYPES, 2 * INNER_DIM)                          # (E, 2D)

    # one-time, mask-independent GlobalPointer preparation (hoisted out of the forward)
    gp_prep = prepare_globalpointer(wsplit, bsplit, BATCH, SEQ)

    token_ids = jax.random.randint(k6, (BATCH, SEQ), 0, VOCAB)
    token_type_ids = jnp.zeros((BATCH, SEQ), jnp.int32)
    lens = jnp.array([SEQ, SEQ - 5], jnp.int32)
    mask_ids = (jnp.arange(SEQ)[None, :] < lens[:, None]).astype(jnp.int32)

    out = gpnet1_forward(enc_params, gp_prep, token_ids, mask_ids, token_type_ids)
    out = jax.block_until_ready(out)

    # correctness check against the pure-JAX f32 reference
    hidden = fake_bert_encoder(enc_params, token_ids, token_type_ids)
    cos_h, sin_h = sinusoidal_half(SEQ, INNER_DIM)
    cos_pos = jnp.repeat(cos_h, 2, axis=-1)
    sin_pos = jnp.repeat(sin_h, 2, axis=-1)
    ref = global_pointer_ref(hidden, mask_ids.astype(jnp.float32),
                             wsplit, bsplit, cos_pos, sin_pos)
    np.testing.assert_allclose(np.asarray(out), np.asarray(ref), rtol=2e-2, atol=2e-2)

    print("KERNEL_OK")
</pallas_src>

<mosaic_0001>
module attributes {stable_mosaic.version = 11 : i64} {
  func.func @gp_kernel(%arg0: i32, %arg1: memref<32x1024xbf16, #tpu.memory_space<vmem>>, %arg2: memref<1024x1024xbf16, #tpu.memory_space<vmem>>, %arg3: memref<1x1024xf32, #tpu.memory_space<vmem>>, %arg4: memref<32x512xf32, #tpu.memory_space<vmem>>, %arg5: memref<32x512xf32, #tpu.memory_space<vmem>>, %arg6: memref<2x16x128xf32, #tpu.memory_space<vmem>>, %arg7: memref<2x4x16x128xf32, #tpu.memory_space<vmem>>, %arg8: memref<128x64xf32, #tpu.memory_space<vmem>>) attributes {dimension_semantics = [#tpu.dimension_semantics<arbitrary>], iteration_bounds = array<i64: 1>, scalar_prefetch = 0 : i64, scratch_operands = 1 : i64, tpu.core_type = #tpu.core_type<tc>, window_params = [{pipeline_mode = #tpu.pipeline_mode<synchronous>, transform_indices = @transform_0, window_bounds = array<i64: 32, 1024>}, {pipeline_mode = #tpu.pipeline_mode<synchronous>, transform_indices = @transform_1, window_bounds = array<i64: 1024, 1024>}, {pipeline_mode = #tpu.pipeline_mode<synchronous>, transform_indices = @transform_2, window_bounds = array<i64: 1, 1024>}, {pipeline_mode = #tpu.pipeline_mode<synchronous>, transform_indices = @transform_3, window_bounds = array<i64: 32, 512>}, {pipeline_mode = #tpu.pipeline_mode<synchronous>, transform_indices = @transform_4, window_bounds = array<i64: 32, 512>}, {pipeline_mode = #tpu.pipeline_mode<synchronous>, transform_indices = @transform_5, window_bounds = array<i64: 2, 16, 128>}, {pipeline_mode = #tpu.pipeline_mode<synchronous>, transform_indices = @transform_6, window_bounds = array<i64: 2, 4, 16, 128>}]} {
    %c0 = arith.constant 0 : index
    %c0_0 = arith.constant 0 : index
    %0 = vector.load %arg1[%c0, %c0_0] : memref<32x1024xbf16, #tpu.memory_space<vmem>>, vector<32x1024xbf16>
    %c0_1 = arith.constant 0 : index
    %c0_2 = arith.constant 0 : index
    %1 = vector.load %arg2[%c0_1, %c0_2] : memref<1024x1024xbf16, #tpu.memory_space<vmem>>, vector<1024x1024xbf16>
    %cst = arith.constant dense<0.000000e+00> : vector<32x1024xf32>
    %2 = tpu.matmul %0, %1, %cst {dimension_numbers = #tpu.dot_dimension_numbers<[1], [0], [0], [1], [0, 0, 1, 1], [], []>} : vector<32x1024xbf16>, vector<1024x1024xbf16>, vector<32x1024xf32> -> vector<32x1024xf32>
    %c0_3 = arith.constant 0 : index
    %c0_4 = arith.constant 0 : index
    %3 = vector.load %arg3[%c0_3, %c0_4] : memref<1x1024xf32, #tpu.memory_space<vmem>>, vector<1x1024xf32>
    %4 = vector.broadcast %3 : vector<1x1024xf32> to vector<32x1024xf32>
    %5 = arith.addf %2, %4 : vector<32x1024xf32>
    %6 = vector.extract_strided_slice %5 {offsets = [0, 0], sizes = [32, 512], strides = [1, 1]} : vector<32x1024xf32> to vector<32x512xf32>
    %7 = vector.extract_strided_slice %5 {offsets = [0, 512], sizes = [32, 512], strides = [1, 1]} : vector<32x1024xf32> to vector<32x512xf32>
    %c0_5 = arith.constant 0 : index
    %c0_6 = arith.constant 0 : index
    %8 = vector.load %arg4[%c0_5, %c0_6] : memref<32x512xf32, #tpu.memory_space<vmem>>, vector<32x512xf32>
    %9 = arith.mulf %6, %8 : vector<32x512xf32>
    %c0_7 = arith.constant 0 : index
    %c0_8 = arith.constant 0 : index
    %10 = vector.load %arg5[%c0_7, %c0_8] : memref<32x512xf32, #tpu.memory_space<vmem>>, vector<32x512xf32>
    %11 = arith.mulf %7, %10 : vector<32x512xf32>
    %12 = arith.addf %9, %11 : vector<32x512xf32>
    %cst_9 = arith.constant 0.000000e+00 : f32
    %13 = vector.broadcast %cst_9 : f32 to vector<128x64xf32>
    %c0_10 = arith.constant 0 : index
    %c0_11 = arith.constant 0 : index
    %14 = vector.load %arg8[%c0_10, %c0_11] : memref<128x64xf32, #tpu.memory_space<vmem>>, vector<128x64xf32>
    tpu.vector_store %arg8[%c0_10, %c0_11], %13 {strides = array<i32>} : memref<128x64xf32, #tpu.memory_space<vmem>>, vector<128x64xf32>,
    %15 = vector.extract_strided_slice %12 {offsets = [0, 0], sizes = [16, 512], strides = [1, 1]} : vector<32x512xf32> to vector<16x512xf32>
    %c0_12 = arith.constant 0 : index
    %c0_13 = arith.constant 0 : index
    %c0_14 = arith.constant 0 : index
    %16 = vector.load %arg6[%c0_12, %c0_13, %c0_14] : memref<2x16x128xf32, #tpu.memory_space<vmem>>, vector<1x16x128xf32>
    %17 = vector.shape_cast %16 : vector<1x16x128xf32> to vector<16x128xf32>
    %18 = vector.extract_strided_slice %15 {offsets = [0, 0], sizes = [16, 64], strides = [1, 1]} : vector<16x512xf32> to vector<16x64xf32>
    %19 = vector.extract_strided_slice %15 {offsets = [0, 64], sizes = [16, 64], strides = [1, 1]} : vector<16x512xf32> to vector<16x64xf32>
    %c0_15 = arith.constant 0 : index
    %c0_16 = arith.constant 0 : index
    %20 = vector.load %arg8[%c0_15, %c0_16] : memref<128x64xf32, #tpu.memory_space<vmem>>, vector<16x64xf32>
    tpu.vector_store %arg8[%c0_15, %c0_16], %19 {strides = array<i32>} : memref<128x64xf32, #tpu.memory_space<vmem>>, vector<16x64xf32>,
    %c0_17 = arith.constant 0 : index
    %c0_18 = arith.constant 0 : index
    %21 = vector.load %arg8[%c0_17, %c0_18] : memref<128x64xf32, #tpu.memory_space<vmem>>, vector<128x64xf32>
    %cst_19 = arith.constant dense<0.000000e+00> : vector<16x128xf32>
    %22 = tpu.matmul %18, %21, %cst_19 {dimension_numbers = #tpu.dot_dimension_numbers<[1], [1], [0], [0], [0, 0, 1, 0], [], []>} : vector<16x64xf32>, vector<128x64xf32>, vector<16x128xf32> -> vector<16x128xf32>
    %23 = arith.addf %22, %17 : vector<16x128xf32>
    %c0_20 = arith.constant 0 : index
    %c0_21 = arith.constant 0 : index
    %c0_22 = arith.constant 0 : index
    %c0_23 = arith.constant 0 : index
    %24 = vector.load %arg7[%c0_20, %c0_21, %c0_22, %c0_23] : memref<2x4x16x128xf32, #tpu.memory_space<vmem>>, vector<1x1x16x128xf32>
    %25 = vector.shape_cast %24 : vector<1x1x16x128xf32> to vector<16x128xf32>
    %26 = vector.shape_cast %23 : vector<16x128xf32> to vector<1x1x16x128xf32>
    tpu.vector_store %arg7[%c0_20, %c0_21, %c0_22, %c0_23], %26 {strides = array<i32>} : memref<2x4x16x128xf32, #tpu.memory_space<vmem>>, vector<1x1x16x128xf32>,
    %27 = vector.extract_strided_slice %15 {offsets = [0, 128], sizes = [16, 64], strides = [1, 1]} : vector<16x512xf32> to vector<16x64xf32>
    %28 = vector.extract_strided_slice %15 {offsets = [0, 192], sizes = [16, 64], strides = [1, 1]} : vector<16x512xf32> to vector<16x64xf32>
    %c0_24 = arith.constant 0 : index
    %c0_25 = arith.constant 0 : index
    %29 = vector.load %arg8[%c0_24, %c0_25] : memref<128x64xf32, #tpu.memory_space<vmem>>, vector<16x64xf32>
    tpu.vector_store %arg8[%c0_24, %c0_25], %28 {strides = array<i32>} : memref<128x64xf32, #tpu.memory_space<vmem>>, vector<16x64xf32>,
    %c0_26 = arith.constant 0 : index
    %c0_27 = arith.constant 0 : index
    %30 = vector.load %arg8[%c0_26, %c0_27] : memref<128x64xf32, #tpu.memory_space<vmem>>, vector<128x64xf32>
    %cst_28 = arith.constant dense<0.000000e+00> : vector<16x128xf32>
    %31 = tpu.matmul %27, %30, %cst_28 {dimension_numbers = #tpu.dot_dimension_numbers<[1], [1], [0], [0], [0, 0, 1, 0], [], []>} : vector<16x64xf32>, vector<128x64xf32>, vector<16x128xf32> -> vector<16x128xf32>
    %32 = arith.addf %31, %17 : vector<16x128xf32>
    %c0_29 = arith.constant 0 : index
    %c1 = arith.constant 1 : index
    %c0_30 = arith.constant 0 : index
    %c0_31 = arith.constant 0 : index
    %33 = vector.load %arg7[%c0_29, %c1, %c0_30, %c0_31] : memref<2x4x16x128xf32, #tpu.memory_space<vmem>>, vector<1x1x16x128xf32>
    %34 = vector.shape_cast %33 : vector<1x1x16x128xf32> to vector<16x128xf32>
    %35 = vector.shape_cast %32 : vector<16x128xf32> to vector<1x1x16x128xf32>
    tpu.vector_store %arg7[%c0_29, %c1, %c0_30, %c0_31], %35 {strides = array<i32>} : memref<2x4x16x128xf32, #tpu.memory_space<vmem>>, vector<1x1x16x128xf32>,
    %36 = vector.extract_strided_slice %15 {offsets = [0, 256], sizes = [16, 64], strides = [1, 1]} : vector<16x512xf32> to vector<16x64xf32>
    %37 = vector.extract_strided_slice %15 {offsets = [0, 320], sizes = [16, 64], strides = [1, 1]} : vector<16x512xf32> to vector<16x64xf32>
    %c0_32 = arith.constant 0 : index
    %c0_33 = arith.constant 0 : index
    %38 = vector.load %arg8[%c0_32, %c0_33] : memref<128x64xf32, #tpu.memory_space<vmem>>, vector<16x64xf32>
    tpu.vector_store %arg8[%c0_32, %c0_33], %37 {strides = array<i32>} : memref<128x64xf32, #tpu.memory_space<vmem>>, vector<16x64xf32>,
    %c0_34 = arith.constant 0 : index
    %c0_35 = arith.constant 0 : index
    %39 = vector.load %arg8[%c0_34, %c0_35] : memref<128x64xf32, #tpu.memory_space<vmem>>, vector<128x64xf32>
    %cst_36 = arith.constant dense<0.000000e+00> : vector<16x128xf32>
    %40 = tpu.matmul %36, %39, %cst_36 {dimension_numbers = #tpu.dot_dimension_numbers<[1], [1], [0], [0], [0, 0, 1, 0], [], []>} : vector<16x64xf32>, vector<128x64xf32>, vector<16x128xf32> -> vector<16x128xf32>
    %41 = arith.addf %40, %17 : vector<16x128xf32>
    %c0_37 = arith.constant 0 : index
    %c2 = arith.constant 2 : index
    %c0_38 = arith.constant 0 : index
    %c0_39 = arith.constant 0 : index
    %42 = vector.load %arg7[%c0_37, %c2, %c0_38, %c0_39] : memref<2x4x16x128xf32, #tpu.memory_space<vmem>>, vector<1x1x16x128xf32>
    %43 = vector.shape_cast %42 : vector<1x1x16x128xf32> to vector<16x128xf32>
    %44 = vector.shape_cast %41 : vector<16x128xf32> to vector<1x1x16x128xf32>
    tpu.vector_store %arg7[%c0_37, %c2, %c0_38, %c0_39], %44 {strides = array<i32>} : memref<2x4x16x128xf32, #tpu.memory_space<vmem>>, vector<1x1x16x128xf32>,
    %45 = vector.extract_strided_slice %15 {offsets = [0, 384], sizes = [16, 64], strides = [1, 1]} : vector<16x512xf32> to vector<16x64xf32>
    %46 = vector.extract_strided_slice %15 {offsets = [0, 448], sizes = [16, 64], strides = [1, 1]} : vector<16x512xf32> to vector<16x64xf32>
    %c0_40 = arith.constant 0 : index
    %c0_41 = arith.constant 0 : index
    %47 = vector.load %arg8[%c0_40, %c0_41] : memref<128x64xf32, #tpu.memory_space<vmem>>, vector<16x64xf32>
    tpu.vector_store %arg8[%c0_40, %c0_41], %46 {strides = array<i32>} : memref<128x64xf32, #tpu.memory_space<vmem>>, vector<16x64xf32>,
    %c0_42 = arith.constant 0 : index
    %c0_43 = arith.constant 0 : index
    %48 = vector.load %arg8[%c0_42, %c0_43] : memref<128x64xf32, #tpu.memory_space<vmem>>, vector<128x64xf32>
    %cst_44 = arith.constant dense<0.000000e+00> : vector<16x128xf32>
    %49 = tpu.matmul %45, %48, %cst_44 {dimension_numbers = #tpu.dot_dimension_numbers<[1], [1], [0], [0], [0, 0, 1, 0], [], []>} : vector<16x64xf32>, vector<128x64xf32>, vector<16x128xf32> -> vector<16x128xf32>
    %50 = arith.addf %49, %17 : vector<16x128xf32>
    %c0_45 = arith.constant 0 : index
    %c3 = arith.constant 3 : index
    %c0_46 = arith.constant 0 : index
    %c0_47 = arith.constant 0 : index
    %51 = vector.load %arg7[%c0_45, %c3, %c0_46, %c0_47] : memref<2x4x16x128xf32, #tpu.memory_space<vmem>>, vector<1x1x16x128xf32>
    %52 = vector.shape_cast %51 : vector<1x1x16x128xf32> to vector<16x128xf32>
    %53 = vector.shape_cast %50 : vector<16x128xf32> to vector<1x1x16x128xf32>
    tpu.vector_store %arg7[%c0_45, %c3, %c0_46, %c0_47], %53 {strides = array<i32>} : memref<2x4x16x128xf32, #tpu.memory_space<vmem>>, vector<1x1x16x128xf32>,
    %54 = vector.extract_strided_slice %12 {offsets = [16, 0], sizes = [16, 512], strides = [1, 1]} : vector<32x512xf32> to vector<16x512xf32>
    %c1_48 = arith.constant 1 : index
    %c0_49 = arith.constant 0 : index
    %c0_50 = arith.constant 0 : index
    %55 = vector.load %arg6[%c1_48, %c0_49, %c0_50] : memref<2x16x128xf32, #tpu.memory_space<vmem>>, vector<1x16x128xf32>
    %56 = vector.shape_cast %55 : vector<1x16x128xf32> to vector<16x128xf32>
    %57 = vector.extract_strided_slice %54 {offsets = [0, 0], sizes = [16, 64], strides = [1, 1]} : vector<16x512xf32> to vector<16x64xf32>
    %58 = vector.extract_strided_slice %54 {offsets = [0, 64], sizes = [16, 64], strides = [1, 1]} : vector<16x512xf32> to vector<16x64xf32>
    %c0_51 = arith.constant 0 : index
    %c0_52 = arith.constant 0 : index
    %59 = vector.load %arg8[%c0_51, %c0_52] : memref<128x64xf32, #tpu.memory_space<vmem>>, vector<16x64xf32>
    tpu.vector_store %arg8[%c0_51, %c0_52], %58 {strides = array<i32>} : memref<128x64xf32, #tpu.memory_space<vmem>>, vector<16x64xf32>,
    %c0_53 = arith.constant 0 : index
    %c0_54 = arith.constant 0 : index
    %60 = vector.load %arg8[%c0_53, %c0_54] : memref<128x64xf32, #tpu.memory_space<vmem>>, vector<128x64xf32>
    %cst_55 = arith.constant dense<0.000000e+00> : vector<16x128xf32>
    %61 = tpu.matmul %57, %60, %cst_55 {dimension_numbers = #tpu.dot_dimension_numbers<[1], [1], [0], [0], [0, 0, 1, 0], [], []>} : vector<16x64xf32>, vector<128x64xf32>, vector<16x128xf32> -> vector<16x128xf32>
    %62 = arith.addf %61, %56 : vector<16x128xf32>
    %c1_56 = arith.constant 1 : index
    %c0_57 = arith.constant 0 : index
    %c0_58 = arith.constant 0 : index
    %c0_59 = arith.constant 0 : index
    %63 = vector.load %arg7[%c1_56, %c0_57, %c0_58, %c0_59] : memref<2x4x16x128xf32, #tpu.memory_space<vmem>>, vector<1x1x16x128xf32>
    %64 = vector.shape_cast %63 : vector<1x1x16x128xf32> to vector<16x128xf32>
    %65 = vector.shape_cast %62 : vector<16x128xf32> to vector<1x1x16x128xf32>
    tpu.vector_store %arg7[%c1_56, %c0_57, %c0_58, %c0_59], %65 {strides = array<i32>} : memref<2x4x16x128xf32, #tpu.memory_space<vmem>>, vector<1x1x16x128xf32>,
    %66 = vector.extract_strided_slice %54 {offsets = [0, 128], sizes = [16, 64], strides = [1, 1]} : vector<16x512xf32> to vector<16x64xf32>
    %67 = vector.extract_strided_slice %54 {offsets = [0, 192], sizes = [16, 64], strides = [1, 1]} : vector<16x512xf32> to vector<16x64xf32>
    %c0_60 = arith.constant 0 : index
    %c0_61 = arith.constant 0 : index
    %68 = vector.load %arg8[%c0_60, %c0_61] : memref<128x64xf32, #tpu.memory_space<vmem>>, vector<16x64xf32>
    tpu.vector_store %arg8[%c0_60, %c0_61], %67 {strides = array<i32>} : memref<128x64xf32, #tpu.memory_space<vmem>>, vector<16x64xf32>,
    %c0_62 = arith.constant 0 : index
    %c0_63 = arith.constant 0 : index
    %69 = vector.load %arg8[%c0_62, %c0_63] : memref<128x64xf32, #tpu.memory_space<vmem>>, vector<128x64xf32>
    %cst_64 = arith.constant dense<0.000000e+00> : vector<16x128xf32>
    %70 = tpu.matmul %66, %69, %cst_64 {dimension_numbers = #tpu.dot_dimension_numbers<[1], [1], [0], [0], [0, 0, 1, 0], [], []>} : vector<16x64xf32>, vector<128x64xf32>, vector<16x128xf32> -> vector<16x128xf32>
    %71 = arith.addf %70, %56 : vector<16x128xf32>
    %c1_65 = arith.constant 1 : index
    %c1_66 = arith.constant 1 : index
    %c0_67 = arith.constant 0 : index
    %c0_68 = arith.constant 0 : index
    %72 = vector.load %arg7[%c1_65, %c1_66, %c0_67, %c0_68] : memref<2x4x16x128xf32, #tpu.memory_space<vmem>>, vector<1x1x16x128xf32>
    %73 = vector.shape_cast %72 : vector<1x1x16x128xf32> to vector<16x128xf32>
    %74 = vector.shape_cast %71 : vector<16x128xf32> to vector<1x1x16x128xf32>
    tpu.vector_store %arg7[%c1_65, %c1_66, %c0_67, %c0_68], %74 {strides = array<i32>} : memref<2x4x16x128xf32, #tpu.memory_space<vmem>>, vector<1x1x16x128xf32>,
    %75 = vector.extract_strided_slice %54 {offsets = [0, 256], sizes = [16, 64], strides = [1, 1]} : vector<16x512xf32> to vector<16x64xf32>
    %76 = vector.extract_strided_slice %54 {offsets = [0, 320], sizes = [16, 64], strides = [1, 1]} : vector<16x512xf32> to vector<16x64xf32>
    %c0_69 = arith.constant 0 : index
    %c0_70 = arith.constant 0 : index
    %77 = vector.load %arg8[%c0_69, %c0_70] : memref<128x64xf32, #tpu.memory_space<vmem>>, vector<16x64xf32>
    tpu.vector_store %arg8[%c0_69, %c0_70], %76 {strides = array<i32>} : memref<128x64xf32, #tpu.memory_space<vmem>>, vector<16x64xf32>,
    %c0_71 = arith.constant 0 : index
    %c0_72 = arith.constant 0 : index
    %78 = vector.load %arg8[%c0_71, %c0_72] : memref<128x64xf32, #tpu.memory_space<vmem>>, vector<128x64xf32>
    %cst_73 = arith.constant dense<0.000000e+00> : vector<16x128xf32>
    %79 = tpu.matmul %75, %78, %cst_73 {dimension_numbers = #tpu.dot_dimension_numbers<[1], [1], [0], [0], [0, 0, 1, 0], [], []>} : vector<16x64xf32>, vector<128x64xf32>, vector<16x128xf32> -> vector<16x128xf32>
    %80 = arith.addf %79, %56 : vector<16x128xf32>
    %c1_74 = arith.constant 1 : index
    %c2_75 = arith.constant 2 : index
    %c0_76 = arith.constant 0 : index
    %c0_77 = arith.constant 0 : index
    %81 = vector.load %arg7[%c1_74, %c2_75, %c0_76, %c0_77] : memref<2x4x16x128xf32, #tpu.memory_space<vmem>>, vector<1x1x16x128xf32>
    %82 = vector.shape_cast %81 : vector<1x1x16x128xf32> to vector<16x128xf32>
    %83 = vector.shape_cast %80 : vector<16x128xf32> to vector<1x1x16x128xf32>
    tpu.vector_store %arg7[%c1_74, %c2_75, %c0_76, %c0_77], %83 {strides = array<i32>} : memref<2x4x16x128xf32, #tpu.memory_space<vmem>>, vector<1x1x16x128xf32>,
    %84 = vector.extract_strided_slice %54 {offsets = [0, 384], sizes = [16, 64], strides = [1, 1]} : vector<16x512xf32> to vector<16x64xf32>
    %85 = vector.extract_strided_slice %54 {offsets = [0, 448], sizes = [16, 64], strides = [1, 1]} : vector<16x512xf32> to vector<16x64xf32>
    %c0_78 = arith.constant 0 : index
    %c0_79 = arith.constant 0 : index
    %86 = vector.load %arg8[%c0_78, %c0_79] : memref<128x64xf32, #tpu.memory_space<vmem>>, vector<16x64xf32>
    tpu.vector_store %arg8[%c0_78, %c0_79], %85 {strides = array<i32>} : memref<128x64xf32, #tpu.memory_space<vmem>>, vector<16x64xf32>,
    %c0_80 = arith.constant 0 : index
    %c0_81 = arith.constant 0 : index
    %87 = vector.load %arg8[%c0_80, %c0_81] : memref<128x64xf32, #tpu.memory_space<vmem>>, vector<128x64xf32>
    %cst_82 = arith.constant dense<0.000000e+00> : vector<16x128xf32>
    %88 = tpu.matmul %84, %87, %cst_82 {dimension_numbers = #tpu.dot_dimension_numbers<[1], [1], [0], [0], [0, 0, 1, 0], [], []>} : vector<16x64xf32>, vector<128x64xf32>, vector<16x128xf32> -> vector<16x128xf32>
    %89 = arith.addf %88, %56 : vector<16x128xf32>
    %c1_83 = arith.constant 1 : index
    %c3_84 = arith.constant 3 : index
    %c0_85 = arith.constant 0 : index
    %c0_86 = arith.constant 0 : index
    %90 = vector.load %arg7[%c1_83, %c3_84, %c0_85, %c0_86] : memref<2x4x16x128xf32, #tpu.memory_space<vmem>>, vector<1x1x16x128xf32>
    %91 = vector.shape_cast %90 : vector<1x1x16x128xf32> to vector<16x128xf32>
    %92 = vector.shape_cast %89 : vector<16x128xf32> to vector<1x1x16x128xf32>
    tpu.vector_store %arg7[%c1_83, %c3_84, %c0_85, %c0_86], %92 {strides = array<i32>} : memref<2x4x16x128xf32, #tpu.memory_space<vmem>>, vector<1x1x16x128xf32>,
    return
  }
  func.func @transform_0(%arg0: i32) -> (i32, i32) {
    %c0_i32 = arith.constant 0 : i32
    %c0_i32_0 = arith.constant 0 : i32
    %c0_i32_1 = arith.constant 0 : i32
    return %c0_i32, %c0_i32_0 : i32, i32
  }
  func.func @transform_1(%arg0: i32) -> (i32, i32) {
    %c0_i32 = arith.constant 0 : i32
    %c0_i32_0 = arith.constant 0 : i32
    %c0_i32_1 = arith.constant 0 : i32
    return %c0_i32, %c0_i32_0 : i32, i32
  }
  func.func @transform_2(%arg0: i32) -> (i32, i32) {
    %c0_i32 = arith.constant 0 : i32
    %c0_i32_0 = arith.constant 0 : i32
    %c0_i32_1 = arith.constant 0 : i32
    return %c0_i32, %c0_i32_0 : i32, i32
  }
  func.func @transform_3(%arg0: i32) -> (i32, i32) {
    %c0_i32 = arith.constant 0 : i32
    %c0_i32_0 = arith.constant 0 : i32
    %c0_i32_1 = arith.constant 0 : i32
    return %c0_i32, %c0_i32_0 : i32, i32
  }
  func.func @transform_4(%arg0: i32) -> (i32, i32) {
    %c0_i32 = arith.constant 0 : i32
    %c0_i32_0 = arith.constant 0 : i32
    %c0_i32_1 = arith.constant 0 : i32
    return %c0_i32, %c0_i32_0 : i32, i32
  }
  func.func @transform_5(%arg0: i32) -> (i32, i32, i32) {
    %c0_i32 = arith.constant 0 : i32
    %c0_i32_0 = arith.constant 0 : i32
    %c0_i32_1 = arith.constant 0 : i32
    %c0_i32_2 = arith.constant 0 : i32
    return %c0_i32, %c0_i32_0, %c0_i32_1 : i32, i32, i32
  }
  func.func @transform_6(%arg0: i32) -> (i32, i32, i32, i32) {
    %c0_i32 = arith.constant 0 : i32
    %c0_i32_0 = arith.constant 0 : i32
    %c0_i32_1 = arith.constant 0 : i32
    %c0_i32_2 = arith.constant 0 : i32
    %c0_i32_3 = arith.constant 0 : i32
    return %c0_i32, %c0_i32_0, %c0_i32_1, %c0_i32_2 : i32, i32, i32, i32
  }
}

</mosaic_0001>

<llo_original>
// kernel: gpnet1_forward.1
$region0: #{gpnet1_forward.1}
  #allocation0 [shape = 'u32[]', space=smem, size = 0x4, offset = 0x4, fixed_abs, tag = 'smem constant byte address 0x4 - core index']
  #allocation1 [shape = 'u32[72,128]{1,0:T(1,128)}', space=vmem, size = 0x9000, scoped, tag = 'internal scratch']
  #allocation2 [shape = 'f32[128,64]{1,0:T(8,128)}', space=vmem, size = 0x10000, scoped, tag = 'scratch operand']
  %s0 = inlined_call_operand.vmem [shape: bf16[32,1024], index: 0, kind: input, shape index: {}]
  %s1 = inlined_call_operand.vmem [shape: bf16[1024,1024], index: 1, kind: input, shape index: {}]
  %s2 = inlined_call_operand.vmem [shape: f32[1,1024], index: 2, kind: input, shape index: {}]
  %s3 = inlined_call_operand.vmem [shape: f32[32,512], index: 3, kind: input, shape index: {}]
  %s4 = inlined_call_operand.vmem [shape: f32[32,512], index: 4, kind: input, shape index: {}]
  %s5 = inlined_call_operand.vmem [shape: f32[2,16,128], index: 5, kind: input, shape index: {}]
  %s6 = inlined_call_operand.hbm [shape: f32[2,4,16,128], index: 6, kind: output, shape index: {}]
  %s7 = sld [smem:[#allocation0]]
  $region34: #{gpnet1_forward.1} parent=0
    _
  %s9 = ssub.s32 1, %s7
  %s10 = scalar_select 0, %s9, %s7
  $region1: #{gpnet1_forward.1} parent=0
    #allocation3 [shape = 'u8[65536]{0}', space=vmem, size = 0x10000, scoped, tag = 'output window, operand 0, single buffered']
    #allocation4 [shape = 's32[1]{0}', space=sflag, size = 0x4, scoped, tag = 'scoped memory for gpnet1_forward.1']
    %11 = vsyncpa [#allocation4], 0
    // Predicated region
    $region2: #{gpnet1_forward.1} parent=1 // pred_check
      _
    $region3: #{gpnet1_forward.1} parent=1 // pred_check_branch
      %13 = sbr.rel (0) target = $region5
    $region4: #{gpnet1_forward.1} parent=1 // pred_region
      _
    $region5: #{gpnet1_forward.1} parent=1 // pred_fallthru
      _
    // Predicated region
    $region6: #{gpnet1_forward.1} parent=1 // pred_check
      _
    $region7: #{gpnet1_forward.1} parent=1 // pred_check_branch
      %15 = sbr.rel (0) target = $region9
    $region8: #{gpnet1_forward.1} parent=1 // pred_region
      _
    $region9: #{gpnet1_forward.1} parent=1 // pred_fallthru
      _
    // Predicated region
    $region10: #{gpnet1_forward.1} parent=1 // pred_check
      _
    $region11: #{gpnet1_forward.1} parent=1 // pred_check_branch
      %17 = sbr.rel (0) target = $region13
    $region12: #{gpnet1_forward.1} parent=1 // pred_region
      _
    $region13: #{gpnet1_forward.1} parent=1 // pred_fallthru
      _
    // Predicated region
    $region14: #{gpnet1_forward.1} parent=1 // pred_check
      _
    $region15: #{gpnet1_forward.1} parent=1 // pred_check_branch
      %19 = sbr.rel (0) target = $region17
    $region16: #{gpnet1_forward.1} parent=1 // pred_region
      _
    $region17: #{gpnet1_forward.1} parent=1 // pred_fallthru
      _
    // Predicated region
    $region18: #{gpnet1_forward.1} parent=1 // pred_check
      _
    $region19: #{gpnet1_forward.1} parent=1 // pred_check_branch
      %21 = sbr.rel (0) target = $region21
    $region20: #{gpnet1_forward.1} parent=1 // pred_region
      _
    $region21: #{gpnet1_forward.1} parent=1 // pred_fallthru
      _
    // Predicated region
    $region22: #{gpnet1_forward.1} parent=1 // pred_check
      _
    $region23: #{gpnet1_forward.1} parent=1 // pred_check_branch
      %23 = sbr.rel (0) target = $region25
    $region24: #{gpnet1_forward.1} parent=1 // pred_region
      _
    $region25: #{gpnet1_forward.1} parent=1 // pred_fallthru
      _
    %v24 = vld [vmem:[%s0] sm:$0xff]
    %v25 = vld [vmem:[%s0 + $0x8] sm:$0xff]
    %v26 = vld [vmem:[%s0 + $0x10] sm:$0xff]
    %v27 = vld [vmem:[%s0 + $0x18] sm:$0xff]
    %v28 = vld [vmem:[%s0 + $0x20] sm:$0xff]
    %v29 = vld [vmem:[%s0 + $0x28] sm:$0xff]
    %v30 = vld [vmem:[%s0 + $0x30] sm:$0xff]
    %v31 = vld [vmem:[%s0 + $0x38] sm:$0xff]
    %v32 = vld [vmem:[%s0 + $0x40] sm:$0xff]
    %v33 = vld [vmem:[%s0 + $0x48] sm:$0xff]
    %v34 = vld [vmem:[%s0 + $0x50] sm:$0xff]
    %v35 = vld [vmem:[%s0 + $0x58] sm:$0xff]
    %v36 = vld [vmem:[%s0 + $0x60] sm:$0xff]
    %v37 = vld [vmem:[%s0 + $0x68] sm:$0xff]
    %v38 = vld [vmem:[%s0 + $0x70] sm:$0xff]
    %v39 = vld [vmem:[%s0 + $0x78] sm:$0xff]
    %v40 = vld [vmem:[%s1] sm:$0xff]
    %v41 = vld [vmem:[%s1 + $0x8] sm:$0xff]
    %v42 = vld [vmem:[%s1 + $0x10] sm:$0xff]
    %v43 = vld [vmem:[%s1 + $0x18] sm:$0xff]
    %v44 = vld [vmem:[%s1 + $0x20] sm:$0xff]
    %v45 = vld [vmem:[%s1 + $0x28] sm:$0xff]
    %v46 = vld [vmem:[%s1 + $0x30] sm:$0xff]
    %v47 = vld [vmem:[%s1 + $0x38] sm:$0xff]
    %v48 = vld [vmem:[%s1 + $0x40] sm:$0xff]
    %v49 = vld [vmem:[%s1 + $0x48] sm:$0xff]
    %v50 = vld [vmem:[%s1 + $0x50] sm:$0xff]
    %v51 = vld [vmem:[%s1 + $0x58] sm:$0xff]
    %v52 = vld [vmem:[%s1 + $0x60] sm:$0xff]
    %v53 = vld [vmem:[%s1 + $0x68] sm:$0xff]
    %v54 = vld [vmem:[%s1 + $0x70] sm:$0xff]
    %v55 = vld [vmem:[%s1 + $0x78] sm:$0xff]
    %v56 = vld [vmem:[%s1 + $0x80] sm:$0xff]
    %v57 = vld [vmem:[%s1 + $0x88] sm:$0xff]
    %v58 = vld [vmem:[%s1 + $0x90] sm:$0xff]
    %v59 = vld [vmem:[%s1 + $0x98] sm:$0xff]
    %v60 = vld [vmem:[%s1 + $0xa0] sm:$0xff]
    %v61 = vld [vmem:[%s1 + $0xa8] sm:$0xff]
    %v62 = vld [vmem:[%s1 + $0xb0] sm:$0xff]
    %v63 = vld [vmem:[%s1 + $0xb8] sm:$0xff]
    %v64 = vld [vmem:[%s1 + $0xc0] sm:$0xff]
    %v65 = vld [vmem:[%s1 + $0xc8] sm:$0xff]
    %v66 = vld [vmem:[%s1 + $0xd0] sm:$0xff]
    %v67 = vld [vmem:[%s1 + $0xd8] sm:$0xff]
    %v68 = vld [vmem:[%s1 + $0xe0] sm:$0xff]
    %v69 = vld [vmem:[%s1 + $0xe8] sm:$0xff]
    %v70 = vld [vmem:[%s1 + $0xf0] sm:$0xff]
    %v71 = vld [vmem:[%s1 + $0xf8] sm:$0xff]
    %v72 = vld [vmem:[%s1 + $0x100] sm:$0xff]
    %v73 = vld [vmem:[%s1 + $0x108] sm:$0xff]
    %v74 = vld [vmem:[%s1 + $0x110] sm:$0xff]
    %v75 = vld [vmem:[%s1 + $0x118] sm:$0xff]
    %v76 = vld [vmem:[%s1 + $0x120] sm:$0xff]
    %v77 = vld [vmem:[%s1 + $0x128] sm:$0xff]
    %v78 = vld [vmem:[%s1 + $0x130] sm:$0xff]
    %v79 = vld [vmem:[%s1 + $0x138] sm:$0xff]
    %v80 = vld [vmem:[%s1 + $0x140] sm:$0xff]
    %v81 = vld [vmem:[%s1 + $0x148] sm:$0xff]
    %v82 = vld [vmem:[%s1 + $0x150] sm:$0xff]
    %v83 = vld [vmem:[%s1 + $0x158] sm:$0xff]
    %v84 = vld [vmem:[%s1 + $0x160] sm:$0xff]
    %v85 = vld [vmem:[%s1 + $0x168] sm:$0xff]
    %v86 = vld [vmem:[%s1 + $0x170] sm:$0xff]
    %v87 = vld [vmem:[%s1 + $0x178] sm:$0xff]
    %v88 = vld [vmem:[%s1 + $0x180] sm:$0xff]
    %v89 = vld [vmem:[%s1 + $0x188] sm:$0xff]
    %v90 = vld [vmem:[%s1 + $0x190] sm:$0xff]
    %v91 = vld [vmem:[%s1 + $0x198] sm:$0xff]
    %v92 = vld [vmem:[%s1 + $0x1a0] sm:$0xff]
    %v93 = vld [vmem:[%s1 + $0x1a8] sm:$0xff]
    %v94 = vld [vmem:[%s1 + $0x1b0] sm:$0xff]
    %v95 = vld [vmem:[%s1 + $0x1b8] sm:$0xff]
    %v96 = vld [vmem:[%s1 + $0x1c0] sm:$0xff]
    %v97 = vld [vmem:[%s1 + $0x1c8] sm:$0xff]
    %v98 = vld [vmem:[%s1 + $0x1d0] sm:$0xff]
    %v99 = vld [vmem:[%s1 + $0x1d8] sm:$0xff]
    %v100 = vld [vmem:[%s1 + $0x1e0] sm:$0xff]
    %v101 = vld [vmem:[%s1 + $0x1e8] sm:$0xff]
    %v102 = vld [vmem:[%s1 + $0x1f0] sm:$0xff]
    %v103 = vld [vmem:[%s1 + $0x1f8] sm:$0xff]
    %v104 = vld [vmem:[%s1 + $0x200] sm:$0xff]
    %v105 = vld [vmem:[%s1 + $0x208] sm:$0xff]
    %v106 = vld [vmem:[%s1 + $0x210] sm:$0xff]
    %v107 = vld [vmem:[%s1 + $0x218] sm:$0xff]
    %v108 = vld [vmem:[%s1 + $0x220] sm:$0xff]
    %v109 = vld [vmem:[%s1 + $0x228] sm:$0xff]
    %v110 = vld [vmem:[%s1 + $0x230] sm:$0xff]
    %v111 = vld [vmem:[%s1 + $0x238] sm:$0xff]
    %v112 = vld [vmem:[%s1 + $0x240] sm:$0xff]
    %v113 = vld [vmem:[%s1 + $0x248] sm:$0xff]
    %v114 = vld [vmem:[%s1 + $0x250] sm:$0xff]
    %v115 = vld [vmem:[%s1 + $0x258] sm:$0xff]
    %v116 = vld [vmem:[%s1 + $0x260] sm:$0xff]
    %v117 = vld [vmem:[%s1 + $0x268] sm:$0xff]
    %v118 = vld [vmem:[%s1 + $0x270] sm:$0xff]
    %v119 = vld [vmem:[%s1 + $0x278] sm:$0xff]
    %v120 = vld [vmem:[%s1 + $0x280] sm:$0xff]
    %v121 = vld [vmem:[%s1 + $0x288] sm:$0xff]
    %v122 = vld [vmem:[%s1 + $0x290] sm:$0xff]
    %v123 = vld [vmem:[%s1 + $0x298] sm:$0xff]
    %v124 = vld [vmem:[%s1 + $0x2a0] sm:$0xff]
    %v125 = vld [vmem:[%s1 + $0x2a8] sm:$0xff]
    %v126 = vld [vmem:[%s1 + $0x2b0] sm:$0xff]
    %v127 = vld [vmem:[%s1 + $0x2b8] sm:$0xff]
    %v128 = vld [vmem:[%s1 + $0x2c0] sm:$0xff]
    %v129 = vld [vmem:[%s1 + $0x2c8] sm:$0xff]
    %v130 = vld [vmem:[%s1 + $0x2d0] sm:$0xff]
    %v131 = vld [vmem:[%s1 + $0x2d8] sm:$0xff]
    %v132 = vld [vmem:[%s1 + $0x2e0] sm:$0xff]
    %v133 = vld [vmem:[%s1 + $0x2e8] sm:$0xff]
    %v134 = vld [vmem:[%s1 + $0x2f0] sm:$0xff]
    %v135 = vld [vmem:[%s1 + $0x2f8] sm:$0xff]
    %v136 = vld [vmem:[%s1 + $0x300] sm:$0xff]
    %v137 = vld [vmem:[%s1 + $0x308] sm:$0xff]
    %v138 = vld [vmem:[%s1 + $0x310] sm:$0xff]
    %v139 = vld [vmem:[%s1 + $0x318] sm:$0xff]
    %v140 = vld [vmem:[%s1 + $0x320] sm:$0xff]
    %v141 = vld [vmem:[%s1 + $0x328] sm:$0xff]
    %v142 = vld [vmem:[%s1 + $0x330] sm:$0xff]
    %v143 = vld [vmem:[%s1 + $0x338] sm:$0xff]
    %v144 = vld [vmem:[%s1 + $0x340] sm:$0xff]
    %v145 = vld [vmem:[%s1 + $0x348] sm:$0xff]
    %v146 = vld [vmem:[%s1 + $0x350] sm:$0xff]
    %v147 = vld [vmem:[%s1 + $0x358] sm:$0xff]
    %v148 = vld [vmem:[%s1 + $0x360] sm:$0xff]
    %v149 = vld [vmem:[%s1 + $0x368] sm:$0xff]
    %v150 = vld [vmem:[%s1 + $0x370] sm:$0xff]
    %v151 = vld [vmem:[%s1 + $0x378] sm:$0xff]
    %v152 = vld [vmem:[%s1 + $0x380] sm:$0xff]
    %v153 = vld [vmem:[%s1 + $0x388] sm:$0xff]
    %v154 = vld [vmem:[%s1 + $0x390] sm:$0xff]
    %v155 = vld [vmem:[%s1 + $0x398] sm:$0xff]
    %v156 = vld [vmem:[%s1 + $0x3a0] sm:$0xff]
    %v157 = vld [vmem:[%s1 + $0x3a8] sm:$0xff]
    %v158 = vld [vmem:[%s1 + $0x3b0] sm:$0xff]
    %v159 = vld [vmem:[%s1 + $0x3b8] sm:$0xff]
    %v160 = vld [vmem:[%s1 + $0x3c0] sm:$0xff]
    %v161 = vld [vmem:[%s1 + $0x3c8] sm:$0xff]
    %v162 = vld [vmem:[%s1 + $0x3d0] sm:$0xff]
    %v163 = vld [vmem:[%s1 + $0x3d8] sm:$0xff]
    %v164 = vld [vmem:[%s1 + $0x3e0] sm:$0xff]
    %v165 = vld [vmem:[%s1 + $0x3e8] sm:$0xff]
    %v166 = vld [vmem:[%s1 + $0x3f0] sm:$0xff]
    %v167 = vld [vmem:[%s1 + $0x3f8] sm:$0xff]
    %v168 = vld [vmem:[%s1 + $0x400] sm:$0xff]
    %v169 = vld [vmem:[%s1 + $0x408] sm:$0xff]
    %v170 = vld [vmem:[%s1 + $0x410] sm:$0xff]
    %v171 = vld [vmem:[%s1 + $0x418] sm:$0xff]
    %v172 = vld [vmem:[%s1 + $0x420] sm:$0xff]
    %v173 = vld [vmem:[%s1 + $0x428] sm:$0xff]
    %v174 = vld [vmem:[%s1 + $0x430] sm:$0xff]
    %v175 = vld [vmem:[%s1 + $0x438] sm:$0xff]
    %v176 = vld [vmem:[%s1 + $0x440] sm:$0xff]
    %v177 = vld [vmem:[%s1 + $0x448] sm:$0xff]
    %v178 = vld [vmem:[%s1 + $0x450] sm:$0xff]
    %v179 = vld [vmem:[%s1 + $0x458] sm:$0xff]
    %v180 = vld [vmem:[%s1 + $0x460] sm:$0xff]
    %v181 = vld [vmem:[%s1 + $0x468] sm:$0xff]
    %v182 = vld [vmem:[%s1 + $0x470] sm:$0xff]
    %v183 = vld [vmem:[%s1 + $0x478] sm:$0xff]
    %v184 = vld [vmem:[%s1 + $0x480] sm:$0xff]
    %v185 = vld [vmem:[%s1 + $0x488] sm:$0xff]
    %v186 = vld [vmem:[%s1 + $0x490] sm:$0xff]
    %v187 = vld [vmem:[%s1 + $0x498] sm:$0xff]
    %v188 = vld [vmem:[%s1 + $0x4a0] sm:$0xff]
    %v189 = vld [vmem:[%s1 + $0x4a8] sm:$0xff]
    %v190 = vld [vmem:[%s1 + $0x4b0] sm:$0xff]
    %v191 = vld [vmem:[%s1 + $0x4b8] sm:$0xff]
    %v192 = vld [vmem:[%s1 + $0x4c0] sm:$0xff]
    %v193 = vld [vmem:[%s1 + $0x4c8] sm:$0xff]
    %v194 = vld [vmem:[%s1 + $0x4d0] sm:$0xff]
    %v195 = vld [vmem:[%s1 + $0x4d8] sm:$0xff]
    %v196 = vld [vmem:[%s1 + $0x4e0] sm:$0xff]
    %v197 = vld [vmem:[%s1 + $0x4e8] sm:$0xff]
    %v198 = vld [vmem:[%s1 + $0x4f0] sm:$0xff]
    %v199 = vld [vmem:[%s1 + $0x4f8] sm:$0xff]
    %v200 = vld [vmem:[%s1 + $0x500] sm:$0xff]
    %v201 = vld [vmem:[%s1 + $0x508] sm:$0xff]
    %v202 = vld [vmem:[%s1 + $0x510] sm:$0xff]
    %v203 = vld [vmem:[%s1 + $0x518] sm:$0xff]
    %v204 = vld [vmem:[%s1 + $0x520] sm:$0xff]
    %v205 = vld [vmem:[%s1 + $0x528] sm:$0xff]
    %v206 = vld [vmem:[%s1 + $0x530] sm:$0xff]
    %v207 = vld [vmem:[%s1 + $0x538] sm:$0xff]
    %v208 = vld [vmem:[%s1 + $0x540] sm:$0xff]
    %v209 = vld [vmem:[%s1 + $0x548] sm:$0xff]
    %v210 = vld [vmem:[%s1 + $0x550] sm:$0xff]
    %v211 = vld [vmem:[%s1 + $0x558] sm:$0xff]
    %v212 = vld [vmem:[%s1 + $0x560] sm:$0xff]
    %v213 = vld [vmem:[%s1 + $0x568] sm:$0xff]
    %v214 = vld [vmem:[%s1 + $0x570] sm:$0xff]
    %v215 = vld [vmem:[%s1 + $0x578] sm:$0xff]
    %v216 = vld [vmem:[%s1 + $0x580] sm:$0xff]
    %v217 = vld [vmem:[%s1 + $0x588] sm:$0xff]
    %v218 = vld [vmem:[%s1 + $0x590] sm:$0xff]
    %v219 = vld [vmem:[%s1 + $0x598] sm:$0xff]
    %v220 = vld [vmem:[%s1 + $0x5a0] sm:$0xff]
    %v221 = vld [vmem:[%s1 + $0x5a8] sm:$0xff]
    %v222 = vld [vmem:[%s1 + $0x5b0] sm:$0xff]
    %v223 = vld [vmem:[%s1 + $0x5b8] sm:$0xff]
    %v224 = vld [vmem:[%s1 + $0x5c0] sm:$0xff]
    %v225 = vld [vmem:[%s1 + $0x5c8] sm:$0xff]
    %v226 = vld [vmem:[%s1 + $0x5d0] sm:$0xff]
    %v227 = vld [vmem:[%s1 + $0x5d8] sm:$0xff]
    %v228 = vld [vmem:[%s1 + $0x5e0] sm:$0xff]
    %v229 = vld [vmem:[%s1 + $0x5e8] sm:$0xff]
    %v230 = vld [vmem:[%s1 + $0x5f0] sm:$0xff]
    %v231 = vld [vmem:[%s1 + $0x5f8] sm:$0xff]
    %v232 = vld [vmem:[%s1 + $0x600] sm:$0xff]
    %v233 = vld [vmem:[%s1 + $0x608] sm:$0xff]
    %v234 = vld [vmem:[%s1 + $0x610] sm:$0xff]
    %v235 = vld [vmem:[%s1 + $0x618] sm:$0xff]
    %v236 = vld [vmem:[%s1 + $0x620] sm:$0xff]
    %v237 = vld [vmem:[%s1 + $0x628] sm:$0xff]
    %v238 = vld [vmem:[%s1 + $0x630] sm:$0xff]
    %v239 = vld [vmem:[%s1 + $0x638] sm:$0xff]
    %v240 = vld [vmem:[%s1 + $0x640] sm:$0xff]
    %v241 = vld [vmem:[%s1 + $0x648] sm:$0xff]
    %v242 = vld [vmem:[%s1 + $0x650] sm:$0xff]
    %v243 = vld [vmem:[%s1 + $0x658] sm:$0xff]
    %v244 = vld [vmem:[%s1 + $0x660] sm:$0xff]
    %v245 = vld [vmem:[%s1 + $0x668] sm:$0xff]
    %v246 = vld [vmem:[%s1 + $0x670] sm:$0xff]
    %v247 = vld [vmem:[%s1 + $0x678] sm:$0xff]
    %v248 = vld [vmem:[%s1 + $0x680] sm:$0xff]
    %v249 = vld [vmem:[%s1 + $0x688] sm:$0xff]
    %v250 = vld [vmem:[%s1 + $0x690] sm:$0xff]
    %v251 = vld [vmem:[%s1 + $0x698] sm:$0xff]
    %v252 = vld [vmem:[%s1 + $0x6a0] sm:$0xff]
    %v253 = vld [vmem:[%s1 + $0x6a8] sm:$0xff]
    %v254 = vld [vmem:[%s1 + $0x6b0] sm:$0xff]
    %v255 = vld [vmem:[%s1 + $0x6b8] sm:$0xff]
    %v256 = vld [vmem:[%s1 + $0x6c0] sm:$0xff]
    %v257 = vld [vmem:[%s1 + $0x6c8] sm:$0xff]
    %v258 = vld [vmem:[%s1 + $0x6d0] sm:$0xff]
    %v259 = vld [vmem:[%s1 + $0x6d8] sm:$0xff]
    %v260 = vld [vmem:[%s1 + $0x6e0] sm:$0xff]
    %v261 = vld [vmem:[%s1 + $0x6e8] sm:$0xff]
    %v262 = vld [vmem:[%s1 + $0x6f0] sm:$0xff]
    %v263 = vld [vmem:[%s1 + $0x6f8] sm:$0xff]
    %v264 = vld [vmem:[%s1 + $0x700] sm:$0xff]
    %v265 = vld [vmem:[%s1 + $0x708] sm:$0xff]
    %v266 = vld [vmem:[%s1 + $0x710] sm:$0xff]
    %v267 = vld [vmem:[%s1 + $0x718] sm:$0xff]
    %v268 = vld [vmem:[%s1 + $0x720] sm:$0xff]
    %v269 = vld [vmem:[%s1 + $0x728] sm:$0xff]
    %v270 = vld [vmem:[%s1 + $0x730] sm:$0xff]
    %v271 = vld [vmem:[%s1 + $0x738] sm:$0xff]
    %v272 = vld [vmem:[%s1 + $0x740] sm:$0xff]
    %v273 = vld [vmem:[%s1 + $0x748] sm:$0xff]
    %v274 = vld [vmem:[%s1 + $0x750] sm:$0xff]
    %v275 = vld [vmem:[%s1 + $0x758] sm:$0xff]
    %v276 = vld [vmem:[%s1 + $0x760] sm:$0xff]
    %v277 = vld [vmem:[%s1 + $0x768] sm:$0xff]
    %v278 = vld [vmem:[%s1 + $0x770] sm:$0xff]
    %v279 = vld [vmem:[%s1 + $0x778] sm:$0xff]
    %v280 = vld [vmem:[%s1 + $0x780] sm:$0xff]
    %v281 = vld [vmem:[%s1 + $0x788] sm:$0xff]
    %v282 = vld [vmem:[%s1 + $0x790] sm:$0xff]
    %v283 = vld [vmem:[%s1 + $0x798] sm:$0xff]
    %v284 = vld [vmem:[%s1 + $0x7a0] sm:$0xff]
    %v285 = vld [vmem:[%s1 + $0x7a8] sm:$0xff]
    %v286 = vld [vmem:[%s1 + $0x7b0] sm:$0xff]
    %v287 = vld [vmem:[%s1 + $0x7b8] sm:$0xff]
    %v288 = vld [vmem:[%s1 + $0x7c0] sm:$0xff]
    %v289 = vld [vmem:[%s1 + $0x7c8] sm:$0xff]
    %v290 = vld [vmem:[%s1 + $0x7d0] sm:$0xff]
    %v291 = vld [vmem:[%s1 + $0x7d8] sm:$0xff]
    %v292 = vld [vmem:[%s1 + $0x7e0] sm:$0xff]
    %v293 = vld [vmem:[%s1 + $0x7e8] sm:$0xff]
    %v294 = vld [vmem:[%s1 + $0x7f0] sm:$0xff]
    %v295 = vld [vmem:[%s1 + $0x7f8] sm:$0xff]
    %v296 = vld [vmem:[%s1 + $0x800] sm:$0xff]
    %v297 = vld [vmem:[%s1 + $0x808] sm:$0xff]
    %v298 = vld [vmem:[%s1 + $0x810] sm:$0xff]
    %v299 = vld [vmem:[%s1 + $0x818] sm:$0xff]
    %v300 = vld [vmem:[%s1 + $0x820] sm:$0xff]
    %v301 = vld [vmem:[%s1 + $0x828] sm:$0xff]
    %v302 = vld [vmem:[%s1 + $0x830] sm:$0xff]
    %v303 = vld [vmem:[%s1 + $0x838] sm:$0xff]
    %v304 = vld [vmem:[%s1 + $0x840] sm:$0xff]
    %v305 = vld [vmem:[%s1 + $0x848] sm:$0xff]
    %v306 = vld [vmem:[%s1 + $0x850] sm:$0xff]
    %v307 = vld [vmem:[%s1 + $0x858] sm:$0xff]
    %v308 = vld [vmem:[%s1 + $0x860] sm:$0xff]
    %v309 = vld [vmem:[%s1 + $0x868] sm:$0xff]
    %v310 = vld [vmem:[%s1 + $0x870] sm:$0xff]
    %v311 = vld [vmem:[%s1 + $0x878] sm:$0xff]
    %v312 = vld [vmem:[%s1 + $0x880] sm:$0xff]
    %v313 = vld [vmem:[%s1 + $0x888] sm:$0xff]
    %v314 = vld [vmem:[%s1 + $0x890] sm:$0xff]
    %v315 = vld [vmem:[%s1 + $0x898] sm:$0xff]
    %v316 = vld [vmem:[%s1 + $0x8a0] sm:$0xff]
    %v317 = vld [vmem:[%s1 + $0x8a8] sm:$0xff]
    %v318 = vld [vmem:[%s1 + $0x8b0] sm:$0xff]
    %v319 = vld [vmem:[%s1 + $0x8b8] sm:$0xff]
    %v320 = vld [vmem:[%s1 + $0x8c0] sm:$0xff]
    %v321 = vld [vmem:[%s1 + $0x8c8] sm:$0xff]
    %v322 = vld [vmem:[%s1 + $0x8d0] sm:$0xff]
    %v323 = vld [vmem:[%s1 + $0x8d8] sm:$0xff]
    %v324 = vld [vmem:[%s1 + $0x8e0] sm:$0xff]
    %v325 = vld [vmem:[%s1 + $0x8e8] sm:$0xff]
    %v326 = vld [vmem:[%s1 + $0x8f0] sm:$0xff]
    %v327 = vld [vmem:[%s1 + $0x8f8] sm:$0xff]
    %v328 = vld [vmem:[%s1 + $0x900] sm:$0xff]
    %v329 = vld [vmem:[%s1 + $0x908] sm:$0xff]
    %v330 = vld [vmem:[%s1 + $0x910] sm:$0xff]
    %v331 = vld [vmem:[%s1 + $0x918] sm:$0xff]
    %v332 = vld [vmem:[%s1 + $0x920] sm:$0xff]
    %v333 = vld [vmem:[%s1 + $0x928] sm:$0xff]
    %v334 = vld [vmem:[%s1 + $0x930] sm:$0xff]
    %v335 = vld [vmem:[%s1 + $0x938] sm:$0xff]
    %v336 = vld [vmem:[%s1 + $0x940] sm:$0xff]
    %v337 = vld [vmem:[%s1 + $0x948] sm:$0xff]
    %v338 = vld [vmem:[%s1 + $0x950] sm:$0xff]
    %v339 = vld [vmem:[%s1 + $0x958] sm:$0xff]
    %v340 = vld [vmem:[%s1 + $0x960] sm:$0xff]
    %v341 = vld [vmem:[%s1 + $0x968] sm:$0xff]
    %v342 = vld [vmem:[%s1 + $0x970] sm:$0xff]
    %v343 = vld [vmem:[%s1 + $0x978] sm:$0xff]
    %v344 = vld [vmem:[%s1 + $0x980] sm:$0xff]
    %v345 = vld [vmem:[%s1 + $0x988] sm:$0xff]
    %v346 = vld [vmem:[%s1 + $0x990] sm:$0xff]
    %v347 = vld [vmem:[%s1 + $0x998] sm:$0xff]
    %v348 = vld [vmem:[%s1 + $0x9a0] sm:$0xff]
    %v349 = vld [vmem:[%s1 + $0x9a8] sm:$0xff]
    %v350 = vld [vmem:[%s1 + $0x9b0] sm:$0xff]
    %v351 = vld [vmem:[%s1 + $0x9b8] sm:$0xff]
    %v352 = vld [vmem:[%s1 + $0x9c0] sm:$0xff]
    %v353 = vld [vmem:[%s1 + $0x9c8] sm:$0xff]
    %v354 = vld [vmem:[%s1 + $0x9d0] sm:$0xff]
    %v355 = vld [vmem:[%s1 + $0x9d8] sm:$0xff]
    %v356 = vld [vmem:[%s1 + $0x9e0] sm:$0xff]
    %v357 = vld [vmem:[%s1 + $0x9e8] sm:$0xff]
    %v358 = vld [vmem:[%s1 + $0x9f0] sm:$0xff]
    %v359 = vld [vmem:[%s1 + $0x9f8] sm:$0xff]
    %v360 = vld [vmem:[%s1 + $0xa00] sm:$0xff]
    %v361 = vld [vmem:[%s1 + $0xa08] sm:$0xff]
    %v362 = vld [vmem:[%s1 + $0xa10] sm:$0xff]
    %v363 = vld [vmem:[%s1 + $0xa18] sm:$0xff]
    %v364 = vld [vmem:[%s1 + $0xa20] sm:$0xff]
    %v365 = vld [vmem:[%s1 + $0xa28] sm:$0xff]
    %v366 = vld [vmem:[%s1 + $0xa30] sm:$0xff]
    %v367 = vld [vmem:[%s1 + $0xa38] sm:$0xff]
    %v368 = vld [vmem:[%s1 + $0xa40] sm:$0xff]
    %v369 = vld [vmem:[%s1 + $0xa48] sm:$0xff]
    %v370 = vld [vmem:[%s1 + $0xa50] sm:$0xff]
    %v371 = vld [vmem:[%s1 + $0xa58] sm:$0xff]
    %v372 = vld [vmem:[%s1 + $0xa60] sm:$0xff]
    %v373 = vld [vmem:[%s1 + $0xa68] sm:$0xff]
    %v374 = vld [vmem:[%s1 + $0xa70] sm:$0xff]
    %v375 = vld [vmem:[%s1 + $0xa78] sm:$0xff]
    %v376 = vld [vmem:[%s1 + $0xa80] sm:$0xff]
    %v377 = vld [vmem:[%s1 + $0xa88] sm:$0xff]
    %v378 = vld [vmem:[%s1 + $0xa90] sm:$0xff]
    %v379 = vld [vmem:[%s1 + $0xa98] sm:$0xff]
    %v380 = vld [vmem:[%s1 + $0xaa0] sm:$0xff]
    %v381 = vld [vmem:[%s1 + $0xaa8] sm:$0xff]
    %v382 = vld [vmem:[%s1 + $0xab0] sm:$0xff]
    %v383 = vld [vmem:[%s1 + $0xab8] sm:$0xff]
    %v384 = vld [vmem:[%s1 + $0xac0] sm:$0xff]
    %v385 = vld [vmem:[%s1 + $0xac8] sm:$0xff]
    %v386 = vld [vmem:[%s1 + $0xad0] sm:$0xff]
    %v387 = vld [vmem:[%s1 + $0xad8] sm:$0xff]
    %v388 = vld [vmem:[%s1 + $0xae0] sm:$0xff]
    %v389 = vld [vmem:[%s1 + $0xae8] sm:$0xff]
    %v390 = vld [vmem:[%s1 + $0xaf0] sm:$0xff]
    %v391 = vld [vmem:[%s1 + $0xaf8] sm:$0xff]
    %v392 = vld [vmem:[%s1 + $0xb00] sm:$0xff]
    %v393 = vld [vmem:[%s1 + $0xb08] sm:$0xff]
    %v394 = vld [vmem:[%s1 + $0xb10] sm:$0xff]
    %v395 = vld [vmem:[%s1 + $0xb18] sm:$0xff]
    %v396 = vld [vmem:[%s1 + $0xb20] sm:$0xff]
    %v397 = vld [vmem:[%s1 + $0xb28] sm:$0xff]
    %v398 = vld [vmem:[%s1 + $0xb30] sm:$0xff]
    %v399 = vld [vmem:[%s1 + $0xb38] sm:$0xff]
    %v400 = vld [vmem:[%s1 + $0xb40] sm:$0xff]
    %v401 = vld [vmem:[%s1 + $0xb48] sm:$0xff]
    %v402 = vld [vmem:[%s1 + $0xb50] sm:$0xff]
    %v403 = vld [vmem:[%s1 + $0xb58] sm:$0xff]
    %v404 = vld [vmem:[%s1 + $0xb60] sm:$0xff]
    %v405 = vld [vmem:[%s1 + $0xb68] sm:$0xff]
    %v406 = vld [vmem:[%s1 + $0xb70] sm:$0xff]
    %v407 = vld [vmem:[%s1 + $0xb78] sm:$0xff]
    %v408 = vld [vmem:[%s1 + $0xb80] sm:$0xff]
    %v409 = vld [vmem:[%s1 + $0xb88] sm:$0xff]
    %v410 = vld [vmem:[%s1 + $0xb90] sm:$0xff]
    %v411 = vld [vmem:[%s1 + $0xb98] sm:$0xff]
    %v412 = vld [vmem:[%s1 + $0xba0] sm:$0xff]
    %v413 = vld [vmem:[%s1 + $0xba8] sm:$0xff]
    %v414 = vld [vmem:[%s1 + $0xbb0] sm:$0xff]
    %v415 = vld [vmem:[%s1 + $0xbb8] sm:$0xff]
    %v416 = vld [vmem:[%s1 + $0xbc0] sm:$0xff]
    %v417 = vld [vmem:[%s1 + $0xbc8] sm:$0xff]
    %v418 = vld [vmem:[%s1 + $0xbd0] sm:$0xff]
    %v419 = vld [vmem:[%s1 + $0xbd8] sm:$0xff]
    %v420 = vld [vmem:[%s1 + $0xbe0] sm:$0xff]
    %v421 = vld [vmem:[%s1 + $0xbe8] sm:$0xff]
    %v422 = vld [vmem:[%s1 + $0xbf0] sm:$0xff]
    %v423 = vld [vmem:[%s1 + $0xbf8] sm:$0xff]
    %v424 = vld [vmem:[%s1 + $0xc00] sm:$0xff]
    %v425 = vld [vmem:[%s1 + $0xc08] sm:$0xff]
    %v426 = vld [vmem:[%s1 + $0xc10] sm:$0xff]
    %v427 = vld [vmem:[%s1 + $0xc18] sm:$0xff]
    %v428 = vld [vmem:[%s1 + $0xc20] sm:$0xff]
    %v429 = vld [vmem:[%s1 + $0xc28] sm:$0xff]
    %v430 = vld [vmem:[%s1 + $0xc30] sm:$0xff]
    %v431 = vld [vmem:[%s1 + $0xc38] sm:$0xff]
    %v432 = vld [vmem:[%s1 + $0xc40] sm:$0xff]
    %v433 = vld [vmem:[%s1 + $0xc48] sm:$0xff]
    %v434 = vld [vmem:[%s1 + $0xc50] sm:$0xff]
    %v435 = vld [vmem:[%s1 + $0xc58] sm:$0xff]
    %v436 = vld [vmem:[%s1 + $0xc60] sm:$0xff]
    %v437 = vld [vmem:[%s1 + $0xc68] sm:$0xff]
    %v438 = vld [vmem:[%s1 + $0xc70] sm:$0xff]
    %v439 = vld [vmem:[%s1 + $0xc78] sm:$0xff]
    %v440 = vld [vmem:[%s1 + $0xc80] sm:$0xff]
    %v441 = vld [vmem:[%s1 + $0xc88] sm:$0xff]
    %v442 = vld [vmem:[%s1 + $0xc90] sm:$0xff]
    %v443 = vld [vmem:[%s1 + $0xc98] sm:$0xff]
    %v444 = vld [vmem:[%s1 + $0xca0] sm:$0xff]
    %v445 = vld [vmem:[%s1 + $0xca8] sm:$0xff]
    %v446 = vld [vmem:[%s1 + $0xcb0] sm:$0xff]
    %v447 = vld [vmem:[%s1 + $0xcb8] sm:$0xff]
    %v448 = vld [vmem:[%s1 + $0xcc0] sm:$0xff]
    %v449 = vld [vmem:[%s1 + $0xcc8] sm:$0xff]
    %v450 = vld [vmem:[%s1 + $0xcd0] sm:$0xff]
    %v451 = vld [vmem:[%s1 + $0xcd8] sm:$0xff]
    %v452 = vld [vmem:[%s1 + $0xce0] sm:$0xff]
    %v453 = vld [vmem:[%s1 + $0xce8] sm:$0xff]
    %v454 = vld [vmem:[%s1 + $0xcf0] sm:$0xff]
    %v455 = vld [vmem:[%s1 + $0xcf8] sm:$0xff]
    %v456 = vld [vmem:[%s1 + $0xd00] sm:$0xff]
    %v457 = vld [vmem:[%s1 + $0xd08] sm:$0xff]
    %v458 = vld [vmem:[%s1 + $0xd10] sm:$0xff]
    %v459 = vld [vmem:[%s1 + $0xd18] sm:$0xff]
    %v460 = vld [vmem:[%s1 + $0xd20] sm:$0xff]
    %v461 = vld [vmem:[%s1 + $0xd28] sm:$0xff]
    %v462 = vld [vmem:[%s1 + $0xd30] sm:$0xff]
    %v463 = vld [vmem:[%s1 + $0xd38] sm:$0xff]
    %v464 = vld [vmem:[%s1 + $0xd40] sm:$0xff]
    %v465 = vld [vmem:[%s1 + $0xd48] sm:$0xff]
    %v466 = vld [vmem:[%s1 + $0xd50] sm:$0xff]
    %v467 = vld [vmem:[%s1 + $0xd58] sm:$0xff]
    %v468 = vld [vmem:[%s1 + $0xd60] sm:$0xff]
    %v469 = vld [vmem:[%s1 + $0xd68] sm:$0xff]
    %v470 = vld [vmem:[%s1 + $0xd70] sm:$0xff]
    %v471 = vld [vmem:[%s1 + $0xd78] sm:$0xff]
    %v472 = vld [vmem:[%s1 + $0xd80] sm:$0xff]
    %v473 = vld [vmem:[%s1 + $0xd88] sm:$0xff]
    %v474 = vld [vmem:[%s1 + $0xd90] sm:$0xff]
    %v475 = vld [vmem:[%s1 + $0xd98] sm:$0xff]
    %v476 = vld [vmem:[%s1 + $0xda0] sm:$0xff]
    %v477 = vld [vmem:[%s1 + $0xda8] sm:$0xff]
    %v478 = vld [vmem:[%s1 + $0xdb0] sm:$0xff]
    %v479 = vld [vmem:[%s1 + $0xdb8] sm:$0xff]
    %v480 = vld [vmem:[%s1 + $0xdc0] sm:$0xff]
    %v481 = vld [vmem:[%s1 + $0xdc8] sm:$0xff]
    %v482 = vld [vmem:[%s1 + $0xdd0] sm:$0xff]
    %v483 = vld [vmem:[%s1 + $0xdd8] sm:$0xff]
    %v484 = vld [vmem:[%s1 + $0xde0] sm:$0xff]
    %v485 = vld [vmem:[%s1 + $0xde8] sm:$0xff]
    %v486 = vld [vmem:[%s1 + $0xdf0] sm:$0xff]
    %v487 = vld [vmem:[%s1 + $0xdf8] sm:$0xff]
    %v488 = vld [vmem:[%s1 + $0xe00] sm:$0xff]
    %v489 = vld [vmem:[%s1 + $0xe08] sm:$0xff]
    %v490 = vld [vmem:[%s1 + $0xe10] sm:$0xff]
    %v491 = vld [vmem:[%s1 + $0xe18] sm:$0xff]
    %v492 = vld [vmem:[%s1 + $0xe20] sm:$0xff]
    %v493 = vld [vmem:[%s1 + $0xe28] sm:$0xff]
    %v494 = vld [vmem:[%s1 + $0xe30] sm:$0xff]
    %v495 = vld [vmem:[%s1 + $0xe38] sm:$0xff]
    %v496 = vld [vmem:[%s1 + $0xe40] sm:$0xff]
    %v497 = vld [vmem:[%s1 + $0xe48] sm:$0xff]
    %v498 = vld [vmem:[%s1 + $0xe50] sm:$0xff]
    %v499 = vld [vmem:[%s1 + $0xe58] sm:$0xff]
    %v500 = vld [vmem:[%s1 + $0xe60] sm:$0xff]
    %v501 = vld [vmem:[%s1 + $0xe68] sm:$0xff]
    %v502 = vld [vmem:[%s1 + $0xe70] sm:$0xff]
    %v503 = vld [vmem:[%s1 + $0xe78] sm:$0xff]
    %v504 = vld [vmem:[%s1 + $0xe80] sm:$0xff]
    %v505 = vld [vmem:[%s1 + $0xe88] sm:$0xff]
    %v506 = vld [vmem:[%s1 + $0xe90] sm:$0xff]
    %v507 = vld [vmem:[%s1 + $0xe98] sm:$0xff]
    %v508 = vld [vmem:[%s1 + $0xea0] sm:$0xff]
    %v509 = vld [vmem:[%s1 + $0xea8] sm:$0xff]
    %v510 = vld [vmem:[%s1 + $0xeb0] sm:$0xff]
    %v511 = vld [vmem:[%s1 + $0xeb8] sm:$0xff]
    %v512 = vld [vmem:[%s1 + $0xec0] sm:$0xff]
    %v513 = vld [vmem:[%s1 + $0xec8] sm:$0xff]
    %v514 = vld [vmem:[%s1 + $0xed0] sm:$0xff]
    %v515 = vld [vmem:[%s1 + $0xed8] sm:$0xff]
    %v516 = vld [vmem:[%s1 + $0xee0] sm:$0xff]
    %v517 = vld [vmem:[%s1 + $0xee8] sm:$0xff]
    %v518 = vld [vmem:[%s1 + $0xef0] sm:$0xff]
    %v519 = vld [vmem:[%s1 + $0xef8] sm:$0xff]
    %v520 = vld [vmem:[%s1 + $0xf00] sm:$0xff]
    %v521 = vld [vmem:[%s1 + $0xf08] sm:$0xff]
    %v522 = vld [vmem:[%s1 + $0xf10] sm:$0xff]
    %v523 = vld [vmem:[%s1 + $0xf18] sm:$0xff]
    %v524 = vld [vmem:[%s1 + $0xf20] sm:$0xff]
    %v525 = vld [vmem:[%s1 + $0xf28] sm:$0xff]
    %v526 = vld [vmem:[%s1 + $0xf30] sm:$0xff]
    %v527 = vld [vmem:[%s1 + $0xf38] sm:$0xff]
    %v528 = vld [vmem:[%s1 + $0xf40] sm:$0xff]
    %v529 = vld [vmem:[%s1 + $0xf48] sm:$0xff]
    %v530 = vld [vmem:[%s1 + $0xf50] sm:$0xff]
    %v531 = vld [vmem:[%s1 + $0xf58] sm:$0xff]
    %v532 = vld [vmem:[%s1 + $0xf60] sm:$0xff]
    %v533 = vld [vmem:[%s1 + $0xf68] sm:$0xff]
    %v534 = vld [vmem:[%s1 + $0xf70] sm:$0xff]
    %v535 = vld [vmem:[%s1 + $0xf78] sm:$0xff]
    %v536 = vld [vmem:[%s1 + $0xf80] sm:$0xff]
    %v537 = vld [vmem:[%s1 + $0xf88] sm:$0xff]
    %v538 = vld [vmem:[%s1 + $0xf90] sm:$0xff]
    %v539 = vld [vmem:[%s1 + $0xf98] sm:$0xff]
    %v540 = vld [vmem:[%s1 + $0xfa0] sm:$0xff]
    %v541 = vld [vmem:[%s1 + $0xfa8] sm:$0xff]
    %v542 = vld [vmem:[%s1 + $0xfb0] sm:$0xff]
    %v543 = vld [vmem:[%s1 + $0xfb8] sm:$0xff]
    %v544 = vld [vmem:[%s1 + $0xfc0] sm:$0xff]
    %v545 = vld [vmem:[%s1 + $0xfc8] sm:$0xff]
    %v546 = vld [vmem:[%s1 + $0xfd0] sm:$0xff]
    %v547 = vld [vmem:[%s1 + $0xfd8] sm:$0xff]
    %v548 = vld [vmem:[%s1 + $0xfe0] sm:$0xff]
    %v549 = vld [vmem:[%s1 + $0xfe8] sm:$0xff]
    %v550 = vld [vmem:[%s1 + $0xff0] sm:$0xff]
    %v551 = vld [vmem:[%s1 + $0xff8] sm:$0xff]
    %v552 = vld [vmem:[%s2] sm:$0xff]
    %v554 = vperm.slane %v552, 0
    %v555 = vperm.slane %v552, 1
    %v556 = vperm.slane %v552, 2
    %v557 = vperm.slane %v552, 3
    %v558 = vperm.slane %v552, 4
    %v559 = vperm.slane %v552, 5
    %v560 = vperm.slane %v552, 6
    %v561 = vperm.slane %v552, 7
    %v586 = vunpack.c.l.b16 %v24
    %v587 = vunpack.c.h.b16 %v24
    %v588 = vunpack.c.l.b16 %v25
    %v589 = vunpack.c.h.b16 %v25
    %v590 = vunpack.c.l.b16 %v26
    %v591 = vunpack.c.h.b16 %v26
    %v592 = vunpack.c.l.b16 %v27
    %v593 = vunpack.c.h.b16 %v27
    %v594 = vunpack.c.l.b16 %v28
    %v595 = vunpack.c.h.b16 %v28
    %v596 = vunpack.c.l.b16 %v29
    %v597 = vunpack.c.h.b16 %v29
    %v598 = vunpack.c.l.b16 %v30
    %v599 = vunpack.c.h.b16 %v30
    %v600 = vunpack.c.l.b16 %v31
    %v601 = vunpack.c.h.b16 %v31
    %v602 = vunpack.c.l.b16 %v32
    %v603 = vunpack.c.h.b16 %v32
    %v604 = vunpack.c.l.b16 %v33
    %v605 = vunpack.c.h.b16 %v33
    %v606 = vunpack.c.l.b16 %v34
    %v607 = vunpack.c.h.b16 %v34
    %v608 = vunpack.c.l.b16 %v35
    %v609 = vunpack.c.h.b16 %v35
    %v610 = vunpack.c.l.b16 %v36
    %v611 = vunpack.c.h.b16 %v36
    %v612 = vunpack.c.l.b16 %v37
    %v613 = vunpack.c.h.b16 %v37
    %v614 = vunpack.c.l.b16 %v38
    %v615 = vunpack.c.h.b16 %v38
    %v616 = vunpack.c.l.b16 %v39
    %v617 = vunpack.c.h.b16 %v39
    %v618 = vpack.c.b16 %v594, %v586
    %v619 = vpack.c.b16 %v595, %v587
    %v620 = vpack.c.b16 %v596, %v588
    %v621 = vpack.c.b16 %v597, %v589
    %v622 = vpack.c.b16 %v598, %v590
    %v623 = vpack.c.b16 %v599, %v591
    %v624 = vpack.c.b16 %v600, %v592
    %v625 = vpack.c.b16 %v601, %v593
    %v626 = vpack.c.b16 %v610, %v602
    %v627 = vpack.c.b16 %v611, %v603
    %v628 = vpack.c.b16 %v612, %v604
    %v629 = vpack.c.b16 %v613, %v605
    %v630 = vpack.c.b16 %v614, %v606
    %v631 = vpack.c.b16 %v615, %v607
    %v632 = vpack.c.b16 %v616, %v608
    %v633 = vpack.c.b16 %v617, %v609
    %v1162 = vunpack.c.l.b16 %v40
    %v1163 = vunpack.c.h.b16 %v40
    %v1164 = vunpack.c.l.b16 %v41
    %v1165 = vunpack.c.h.b16 %v41
    %v1166 = vunpack.c.l.b16 %v42
    %v1167 = vunpack.c.h.b16 %v42
    %v1168 = vunpack.c.l.b16 %v43
    %v1169 = vunpack.c.h.b16 %v43
    %v1170 = vunpack.c.l.b16 %v44
    %v1171 = vunpack.c.h.b16 %v44
    %v1172 = vunpack.c.l.b16 %v45
    %v1173 = vunpack.c.h.b16 %v45
    %v1174 = vunpack.c.l.b16 %v46
    %v1175 = vunpack.c.h.b16 %v46
    %v1176 = vunpack.c.l.b16 %v47
    %v1177 = vunpack.c.h.b16 %v47
    %v1178 = vunpack.c.l.b16 %v48
    %v1179 = vunpack.c.h.b16 %v48
    %v1180 = vunpack.c.l.b16 %v49
    %v1181 = vunpack.c.h.b16 %v49
    %v1182 = vunpack.c.l.b16 %v50
    %v1183 = vunpack.c.h.b16 %v50
    %v1184 = vunpack.c.l.b16 %v51
    %v1185 = vunpack.c.h.b16 %v51
    %v1186 = vunpack.c.l.b16 %v52
    %v1187 = vunpack.c.h.b16 %v52
    %v1188 = vunpack.c.l.b16 %v53
    %v1189 = vunpack.c.h.b16 %v53
    %v1190 = vunpack.c.l.b16 %v54
    %v1191 = vunpack.c.h.b16 %v54
    %v1192 = vunpack.c.l.b16 %v55
    %v1193 = vunpack.c.h.b16 %v55
    %v1194 = vunpack.c.l.b16 %v56
    %v1195 = vunpack.c.h.b16 %v56
    %v1196 = vunpack.c.l.b16 %v57
    %v1197 = vunpack.c.h.b16 %v57
    %v1198 = vunpack.c.l.b16 %v58
    %v1199 = vunpack.c.h.b16 %v58
    %v1200 = vunpack.c.l.b16 %v59
    %v1201 = vunpack.c.h.b16 %v59
    %v1202 = vunpack.c.l.b16 %v60
    %v1203 = vunpack.c.h.b16 %v60
    %v1204 = vunpack.c.l.b16 %v61
    %v1205 = vunpack.c.h.b16 %v61
    %v1206 = vunpack.c.l.b16 %v62
    %v1207 = vunpack.c.h.b16 %v62
    %v1208 = vunpack.c.l.b16 %v63
    %v1209 = vunpack.c.h.b16 %v63
    %v1210 = vunpack.c.l.b16 %v64
    %v1211 = vunpack.c.h.b16 %v64
    %v1212 = vunpack.c.l.b16 %v65
    %v1213 = vunpack.c.h.b16 %v65
    %v1214 = vunpack.c.l.b16 %v66
    %v1215 = vunpack.c.h.b16 %v66
    %v1216 = vunpack.c.l.b16 %v67
    %v1217 = vunpack.c.h.b16 %v67
    %v1218 = vunpack.c.l.b16 %v68
    %v1219 = vunpack.c.h.b16 %v68
    %v1220 = vunpack.c.l.b16 %v69
    %v1221 = vunpack.c.h.b16 %v69
    %v1222 = vunpack.c.l.b16 %v70
    %v1223 = vunpack.c.h.b16 %v70
    %v1224 = vunpack.c.l.b16 %v71
    %v1225 = vunpack.c.h.b16 %v71
    %v1226 = vunpack.c.l.b16 %v72
    %v1227 = vunpack.c.h.b16 %v72
    %v1228 = vunpack.c.l.b16 %v73
    %v1229 = vunpack.c.h.b16 %v73
    %v1230 = vunpack.c.l.b16 %v74
    %v1231 = vunpack.c.h.b16 %v74
    %v1232 = vunpack.c.l.b16 %v75
    %v1233 = vunpack.c.h.b16 %v75
    %v1234 = vunpack.c.l.b16 %v76
    %v1235 = vunpack.c.h.b16 %v76
    %v1236 = vunpack.c.l.b16 %v77
    %v1237 = vunpack.c.h.b16 %v77
    %v1238 = vunpack.c.l.b16 %v78
    %v1239 = vunpack.c.h.b16 %v78
    %v1240 = vunpack.c.l.b16 %v79
    %v1241 = vunpack.c.h.b16 %v79
    %v1242 = vunpack.c.l.b16 %v80
    %v1243 = vunpack.c.h.b16 %v80
    %v1244 = vunpack.c.l.b16 %v81
    %v1245 = vunpack.c.h.b16 %v81
    %v1246 = vunpack.c.l.b16 %v82
    %v1247 = vunpack.c.h.b16 %v82
    %v1248 = vunpack.c.l.b16 %v83
    %v1249 = vunpack.c.h.b16 %v83
    %v1250 = vunpack.c.l.b16 %v84
    %v1251 = vunpack.c.h.b16 %v84
    %v1252 = vunpack.c.l.b16 %v85
    %v1253 = vunpack.c.h.b16 %v85
    %v1254 = vunpack.c.l.b16 %v86
    %v1255 = vunpack.c.h.b16 %v86
    %v1256 = vunpack.c.l.b16 %v87
    %v1257 = vunpack.c.h.b16 %v87
    %v1258 = vunpack.c.l.b16 %v88
    %v1259 = vunpack.c.h.b16 %v88
    %v1260 = vunpack.c.l.b16 %v89
    %v1261 = vunpack.c.h.b16 %v89
    %v1262 = vunpack.c.l.b16 %v90
    %v1263 = vunpack.c.h.b16 %v90
    %v1264 = vunpack.c.l.b16 %v91
    %v1265 = vunpack.c.h.b16 %v91
    %v1266 = vunpack.c.l.b16 %v92
    %v1267 = vunpack.c.h.b16 %v92
    %v1268 = vunpack.c.l.b16 %v93
    %v1269 = vunpack.c.h.b16 %v93
    %v1270 = vunpack.c.l.b16 %v94
    %v1271 = vunpack.c.h.b16 %v94
    %v1272 = vunpack.c.l.b16 %v95
    %v1273 = vunpack.c.h.b16 %v95
    %v1274 = vunpack.c.l.b16 %v96
    %v1275 = vunpack.c.h.b16 %v96
    %v1276 = vunpack.c.l.b16 %v97
    %v1277 = vunpack.c.h.b16 %v97
    %v1278 = vunpack.c.l.b16 %v98
    %v1279 = vunpack.c.h.b16 %v98
    %v1280 = vunpack.c.l.b16 %v99
    %v1281 = vunpack.c.h.b16 %v99
    %v1282 = vunpack.c.l.b16 %v100
    %v1283 = vunpack.c.h.b16 %v100
    %v1284 = vunpack.c.l.b16 %v101
    %v1285 = vunpack.c.h.b16 %v101
    %v1286 = vunpack.c.l.b16 %v102
    %v1287 = vunpack.c.h.b16 %v102
    %v1288 = vunpack.c.l.b16 %v103
    %v1289 = vunpack.c.h.b16 %v103
    %v1290 = vunpack.c.l.b16 %v104
    %v1291 = vunpack.c.h.b16 %v104
    %v1292 = vunpack.c.l.b16 %v105
    %v1293 = vunpack.c.h.b16 %v105
    %v1294 = vunpack.c.l.b16 %v106
    %v1295 = vunpack.c.h.b16 %v106
    %v1296 = vunpack.c.l.b16 %v107
    %v1297 = vunpack.c.h.b16 %v107
    %v1298 = vunpack.c.l.b16 %v108
    %v1299 = vunpack.c.h.b16 %v108
    %v1300 = vunpack.c.l.b16 %v109
    %v1301 = vunpack.c.h.b16 %v109
    %v1302 = vunpack.c.l.b16 %v110
    %v1303 = vunpack.c.h.b16 %v110
    %v1304 = vunpack.c.l.b16 %v111
    %v1305 = vunpack.c.h.b16 %v111
    %v1306 = vunpack.c.l.b16 %v112
    %v1307 = vunpack.c.h.b16 %v112
    %v1308 = vunpack.c.l.b16 %v113
    %v1309 = vunpack.c.h.b16 %v113
    %v1310 = vunpack.c.l.b16 %v114
    %v1311 = vunpack.c.h.b16 %v114
    %v1312 = vunpack.c.l.b16 %v115
    %v1313 = vunpack.c.h.b16 %v115
    %v1314 = vunpack.c.l.b16 %v116
    %v1315 = vunpack.c.h.b16 %v116
    %v1316 = vunpack.c.l.b16 %v117
    %v1317 = vunpack.c.h.b16 %v117
    %v1318 = vunpack.c.l.b16 %v118
    %v1319 = vunpack.c.h.b16 %v118
    %v1320 = vunpack.c.l.b16 %v119
    %v1321 = vunpack.c.h.b16 %v119
    %v1322 = vunpack.c.l.b16 %v120
    %v1323 = vunpack.c.h.b16 %v120
    %v1324 = vunpack.c.l.b16 %v121
    %v1325 = vunpack.c.h.b16 %v121
    %v1326 = vunpack.c.l.b16 %v122
    %v1327 = vunpack.c.h.b16 %v122
    %v1328 = vunpack.c.l.b16 %v123
    %v1329 = vunpack.c.h.b16 %v123
    %v1330 = vunpack.c.l.b16 %v124
    %v1331 = vunpack.c.h.b16 %v124
    %v1332 = vunpack.c.l.b16 %v125
    %v1333 = vunpack.c.h.b16 %v125
    %v1334 = vunpack.c.l.b16 %v126
    %v1335 = vunpack.c.h.b16 %v126
    %v1336 = vunpack.c.l.b16 %v127
    %v1337 = vunpack.c.h.b16 %v127
    %v1338 = vunpack.c.l.b16 %v128
    %v1339 = vunpack.c.h.b16 %v128
    %v1340 = vunpack.c.l.b16 %v129
    %v1341 = vunpack.c.h.b16 %v129
    %v1342 = vunpack.c.l.b16 %v130
    %v1343 = vunpack.c.h.b16 %v130
    %v1344 = vunpack.c.l.b16 %v131
    %v1345 = vunpack.c.h.b16 %v131
    %v1346 = vunpack.c.l.b16 %v132
    %v1347 = vunpack.c.h.b16 %v132
    %v1348 = vunpack.c.l.b16 %v133
    %v1349 = vunpack.c.h.b16 %v133
    %v1350 = vunpack.c.l.b16 %v134
    %v1351 = vunpack.c.h.b16 %v134
    %v1352 = vunpack.c.l.b16 %v135
    %v1353 = vunpack.c.h.b16 %v135
    %v1354 = vunpack.c.l.b16 %v136
    %v1355 = vunpack.c.h.b16 %v136
    %v1356 = vunpack.c.l.b16 %v137
    %v1357 = vunpack.c.h.b16 %v137
    %v1358 = vunpack.c.l.b16 %v138
    %v1359 = vunpack.c.h.b16 %v138
    %v1360 = vunpack.c.l.b16 %v139
    %v1361 = vunpack.c.h.b16 %v139
    %v1362 = vunpack.c.l.b16 %v140
    %v1363 = vunpack.c.h.b16 %v140
    %v1364 = vunpack.c.l.b16 %v141
    %v1365 = vunpack.c.h.b16 %v141
    %v1366 = vunpack.c.l.b16 %v142
    %v1367 = vunpack.c.h.b16 %v142
    %v1368 = vunpack.c.l.b16 %v143
    %v1369 = vunpack.c.h.b16 %v143
    %v1370 = vunpack.c.l.b16 %v144
    %v1371 = vunpack.c.h.b16 %v144
    %v1372 = vunpack.c.l.b16 %v145
    %v1373 = vunpack.c.h.b16 %v145
    %v1374 = vunpack.c.l.b16 %v146
    %v1375 = vunpack.c.h.b16 %v146
    %v1376 = vunpack.c.l.b16 %v147
    %v1377 = vunpack.c.h.b16 %v147
    %v1378 = vunpack.c.l.b16 %v148
    %v1379 = vunpack.c.h.b16 %v148
    %v1380 = vunpack.c.l.b16 %v149
    %v1381 = vunpack.c.h.b16 %v149
    %v1382 = vunpack.c.l.b16 %v150
    %v1383 = vunpack.c.h.b16 %v150
    %v1384 = vunpack.c.l.b16 %v151
    %v1385 = vunpack.c.h.b16 %v151
    %v1386 = vunpack.c.l.b16 %v152
    %v1387 = vunpack.c.h.b16 %v152
    %v1388 = vunpack.c.l.b16 %v153
    %v1389 = vunpack.c.h.b16 %v153
    %v1390 = vunpack.c.l.b16 %v154
    %v1391 = vunpack.c.h.b16 %v154
    %v1392 = vunpack.c.l.b16 %v155
    %v1393 = vunpack.c.h.b16 %v155
    %v1394 = vunpack.c.l.b16 %v156
    %v1395 = vunpack.c.h.b16 %v156
    %v1396 = vunpack.c.l.b16 %v157
    %v1397 = vunpack.c.h.b16 %v157
    %v1398 = vunpack.c.l.b16 %v158
    %v1399 = vunpack.c.h.b16 %v158
    %v1400 = vunpack.c.l.b16 %v159
    %v1401 = vunpack.c.h.b16 %v159
    %v1402 = vunpack.c.l.b16 %v160
    %v1403 = vunpack.c.h.b16 %v160
    %v1404 = vunpack.c.l.b16 %v161
    %v1405 = vunpack.c.h.b16 %v161
    %v1406 = vunpack.c.l.b16 %v162
    %v1407 = vunpack.c.h.b16 %v162
    %v1408 = vunpack.c.l.b16 %v163
    %v1409 = vunpack.c.h.b16 %v163
    %v1410 = vunpack.c.l.b16 %v164
    %v1411 = vunpack.c.h.b16 %v164
    %v1412 = vunpack.c.l.b16 %v165
    %v1413 = vunpack.c.h.b16 %v165
    %v1414 = vunpack.c.l.b16 %v166
    %v1415 = vunpack.c.h.b16 %v166
    %v1416 = vunpack.c.l.b16 %v167
    %v1417 = vunpack.c.h.b16 %v167
    %v1418 = vunpack.c.l.b16 %v168
    %v1419 = vunpack.c.h.b16 %v168
    %v1420 = vunpack.c.l.b16 %v169
    %v1421 = vunpack.c.h.b16 %v169
    %v1422 = vunpack.c.l.b16 %v170
    %v1423 = vunpack.c.h.b16 %v170
    %v1424 = vunpack.c.l.b16 %v171
    %v1425 = vunpack.c.h.b16 %v171
    %v1426 = vunpack.c.l.b16 %v172
    %v1427 = vunpack.c.h.b16 %v172
    %v1428 = vunpack.c.l.b16 %v173
    %v1429 = vunpack.c.h.b16 %v173
    %v1430 = vunpack.c.l.b16 %v174
    %v1431 = vunpack.c.h.b16 %v174
    %v1432 = vunpack.c.l.b16 %v175
    %v1433 = vunpack.c.h.b16 %v175
    %v1434 = vunpack.c.l.b16 %v176
    %v1435 = vunpack.c.h.b16 %v176
    %v1436 = vunpack.c.l.b16 %v177
    %v1437 = vunpack.c.h.b16 %v177
    %v1438 = vunpack.c.l.b16 %v178
    %v1439 = vunpack.c.h.b16 %v178
    %v1440 = vunpack.c.l.b16 %v179
    %v1441 = vunpack.c.h.b16 %v179
    %v1442 = vunpack.c.l.b16 %v180
    %v1443 = vunpack.c.h.b16 %v180
    %v1444 = vunpack.c.l.b16 %v181
    %v1445 = vunpack.c.h.b16 %v181
    %v1446 = vunpack.c.l.b16 %v182
    %v1447 = vunpack.c.h.b16 %v182
    %v1448 = vunpack.c.l.b16 %v183
    %v1449 = vunpack.c.h.b16 %v183
    %v1450 = vunpack.c.l.b16 %v184
    %v1451 = vunpack.c.h.b16 %v184
    %v1452 = vunpack.c.l.b16 %v185
    %v1453 = vunpack.c.h.b16 %v185
    %v1454 = vunpack.c.l.b16 %v186
    %v1455 = vunpack.c.h.b16 %v186
    %v1456 = vunpack.c.l.b16 %v187
    %v1457 = vunpack.c.h.b16 %v187
    %v1458 = vunpack.c.l.b16 %v188
    %v1459 = vunpack.c.h.b16 %v188
    %v1460 = vunpack.c.l.b16 %v189
    %v1461 = vunpack.c.h.b16 %v189
    %v1462 = vunpack.c.l.b16 %v190
    %v1463 = vunpack.c.h.b16 %v190
    %v1464 = vunpack.c.l.b16 %v191
    %v1465 = vunpack.c.h.b16 %v191
    %v1466 = vunpack.c.l.b16 %v192
    %v1467 = vunpack.c.h.b16 %v192
    %v1468 = vunpack.c.l.b16 %v193
    %v1469 = vunpack.c.h.b16 %v193
    %v1470 = vunpack.c.l.b16 %v194
    %v1471 = vunpack.c.h.b16 %v194
    %v1472 = vunpack.c.l.b16 %v195
    %v1473 = vunpack.c.h.b16 %v195
    %v1474 = vunpack.c.l.b16 %v196
    %v1475 = vunpack.c.h.b16 %v196
    %v1476 = vunpack.c.l.b16 %v197
    %v1477 = vunpack.c.h.b16 %v197
    %v1478 = vunpack.c.l.b16 %v198
    %v1479 = vunpack.c.h.b16 %v198
    %v1480 = vunpack.c.l.b16 %v199
    %v1481 = vunpack.c.h.b16 %v199
    %v1482 = vunpack.c.l.b16 %v200
    %v1483 = vunpack.c.h.b16 %v200
    %v1484 = vunpack.c.l.b16 %v201
    %v1485 = vunpack.c.h.b16 %v201
    %v1486 = vunpack.c.l.b16 %v202
    %v1487 = vunpack.c.h.b16 %v202
    %v1488 = vunpack.c.l.b16 %v203
    %v1489 = vunpack.c.h.b16 %v203
    %v1490 = vunpack.c.l.b16 %v204
    %v1491 = vunpack.c.h.b16 %v204
    %v1492 = vunpack.c.l.b16 %v205
    %v1493 = vunpack.c.h.b16 %v205
    %v1494 = vunpack.c.l.b16 %v206
    %v1495 = vunpack.c.h.b16 %v206
    %v1496 = vunpack.c.l.b16 %v207
    %v1497 = vunpack.c.h.b16 %v207
    %v1498 = vunpack.c.l.b16 %v208
    %v1499 = vunpack.c.h.b16 %v208
    %v1500 = vunpack.c.l.b16 %v209
    %v1501 = vunpack.c.h.b16 %v209
    %v1502 = vunpack.c.l.b16 %v210
    %v1503 = vunpack.c.h.b16 %v210
    %v1504 = vunpack.c.l.b16 %v211
    %v1505 = vunpack.c.h.b16 %v211
    %v1506 = vunpack.c.l.b16 %v212
    %v1507 = vunpack.c.h.b16 %v212
    %v1508 = vunpack.c.l.b16 %v213
    %v1509 = vunpack.c.h.b16 %v213
    %v1510 = vunpack.c.l.b16 %v214
    %v1511 = vunpack.c.h.b16 %v214
    %v1512 = vunpack.c.l.b16 %v215
    %v1513 = vunpack.c.h.b16 %v215
    %v1514 = vunpack.c.l.b16 %v216
    %v1515 = vunpack.c.h.b16 %v216
    %v1516 = vunpack.c.l.b16 %v217
    %v1517 = vunpack.c.h.b16 %v217
    %v1518 = vunpack.c.l.b16 %v218
    %v1519 = vunpack.c.h.b16 %v218
    %v1520 = vunpack.c.l.b16 %v219
    %v1521 = vunpack.c.h.b16 %v219
    %v1522 = vunpack.c.l.b16 %v220
    %v1523 = vunpack.c.h.b16 %v220
    %v1524 = vunpack.c.l.b16 %v221
    %v1525 = vunpack.c.h.b16 %v221
    %v1526 = vunpack.c.l.b16 %v222
    %v1527 = vunpack.c.h.b16 %v222
    %v1528 = vunpack.c.l.b16 %v223
    %v1529 = vunpack.c.h.b16 %v223
    %v1530 = vunpack.c.l.b16 %v224
    %v1531 = vunpack.c.h.b16 %v224
    %v1532 = vunpack.c.l.b16 %v225
    %v1533 = vunpack.c.h.b16 %v225
    %v1534 = vunpack.c.l.b16 %v226
    %v1535 = vunpack.c.h.b16 %v226
    %v1536 = vunpack.c.l.b16 %v227
    %v1537 = vunpack.c.h.b16 %v227
    %v1538 = vunpack.c.l.b16 %v228
    %v1539 = vunpack.c.h.b16 %v228
    %v1540 = vunpack.c.l.b16 %v229
    %v1541 = vunpack.c.h.b16 %v229
    %v1542 = vunpack.c.l.b16 %v230
    %v1543 = vunpack.c.h.b16 %v230
    %v1544 = vunpack.c.l.b16 %v231
    %v1545 = vunpack.c.h.b16 %v231
    %v1546 = vunpack.c.l.b16 %v232
    %v1547 = vunpack.c.h.b16 %v232
    %v1548 = vunpack.c.l.b16 %v233
    %v1549 = vunpack.c.h.b16 %v233
    %v1550 = vunpack.c.l.b16 %v234
    %v1551 = vunpack.c.h.b16 %v234
    %v1552 = vunpack.c.l.b16 %v235
    %v1553 = vunpack.c.h.b16 %v235
    %v1554 = vunpack.c.l.b16 %v236
    %v1555 = vunpack.c.h.b16 %v236
    %v1556 = vunpack.c.l.b16 %v237
    %v1557 = vunpack.c.h.b16 %v237
    %v1558 = vunpack.c.l.b16 %v238
    %v1559 = vunpack.c.h.b16 %v238
    %v1560 = vunpack.c.l.b16 %v239
    %v1561 = vunpack.c.h.b16 %v239
    %v1562 = vunpack.c.l.b16 %v240
    %v1563 = vunpack.c.h.b16 %v240
    %v1564 = vunpack.c.l.b16 %v241
    %v1565 = vunpack.c.h.b16 %v241
    %v1566 = vunpack.c.l.b16 %v242
    %v1567 = vunpack.c.h.b16 %v242
    %v1568 = vunpack.c.l.b16 %v243
    %v1569 = vunpack.c.h.b16 %v243
    %v1570 = vunpack.c.l.b16 %v244
    %v1571 = vunpack.c.h.b16 %v244
    %v1572 = vunpack.c.l.b16 %v245
    %v1573 = vunpack.c.h.b16 %v245
    %v1574 = vunpack.c.l.b16 %v246
    %v1575 = vunpack.c.h.b16 %v246
    %v1576 = vunpack.c.l.b16 %v247
    %v1577 = vunpack.c.h.b16 %v247
    %v1578 = vunpack.c.l.b16 %v248
    %v1579 = vunpack.c.h.b16 %v248
    %v1580 = vunpack.c.l.b16 %v249
    %v1581 = vunpack.c.h.b16 %v249
    %v1582 = vunpack.c.l.b16 %v250
    %v1583 = vunpack.c.h.b16 %v250
    %v1584 = vunpack.c.l.b16 %v251
    %v1585 = vunpack.c.h.b16 %v251
    %v1586 = vunpack.c.l.b16 %v252
    %v1587 = vunpack.c.h.b16 %v252
    %v1588 = vunpack.c.l.b16 %v253
    %v1589 = vunpack.c.h.b16 %v253
    %v1590 = vunpack.c.l.b16 %v254
    %v1591 = vunpack.c.h.b16 %v254
    %v1592 = vunpack.c.l.b16 %v255
    %v1593 = vunpack.c.h.b16 %v255
    %v1594 = vunpack.c.l.b16 %v256
    %v1595 = vunpack.c.h.b16 %v256
    %v1596 = vunpack.c.l.b16 %v257
    %v1597 = vunpack.c.h.b16 %v257
    %v1598 = vunpack.c.l.b16 %v258
    %v1599 = vunpack.c.h.b16 %v258
    %v1600 = vunpack.c.l.b16 %v259
    %v1601 = vunpack.c.h.b16 %v259
    %v1602 = vunpack.c.l.b16 %v260
    %v1603 = vunpack.c.h.b16 %v260
    %v1604 = vunpack.c.l.b16 %v261
    %v1605 = vunpack.c.h.b16 %v261
    %v1606 = vunpack.c.l.b16 %v262
    %v1607 = vunpack.c.h.b16 %v262
    %v1608 = vunpack.c.l.b16 %v263
    %v1609 = vunpack.c.h.b16 %v263
    %v1610 = vunpack.c.l.b16 %v264
    %v1611 = vunpack.c.h.b16 %v264
    %v1612 = vunpack.c.l.b16 %v265
    %v1613 = vunpack.c.h.b16 %v265
    %v1614 = vunpack.c.l.b16 %v266
    %v1615 = vunpack.c.h.b16 %v266
    %v1616 = vunpack.c.l.b16 %v267
    %v1617 = vunpack.c.h.b16 %v267
    %v1618 = vunpack.c.l.b16 %v268
    %v1619 = vunpack.c.h.b16 %v268
    %v1620 = vunpack.c.l.b16 %v269
    %v1621 = vunpack.c.h.b16 %v269
    %v1622 = vunpack.c.l.b16 %v270
    %v1623 = vunpack.c.h.b16 %v270
    %v1624 = vunpack.c.l.b16 %v271
    %v1625 = vunpack.c.h.b16 %v271
    %v1626 = vunpack.c.l.b16 %v272
    %v1627 = vunpack.c.h.b16 %v272
    %v1628 = vunpack.c.l.b16 %v273
    %v1629 = vunpack.c.h.b16 %v273
    %v1630 = vunpack.c.l.b16 %v274
    %v1631 = vunpack.c.h.b16 %v274
    %v1632 = vunpack.c.l.b16 %v275
    %v1633 = vunpack.c.h.b16 %v275
    %v1634 = vunpack.c.l.b16 %v276
    %v1635 = vunpack.c.h.b16 %v276
    %v1636 = vunpack.c.l.b16 %v277
    %v1637 = vunpack.c.h.b16 %v277
    %v1638 = vunpack.c.l.b16 %v278
    %v1639 = vunpack.c.h.b16 %v278
    %v1640 = vunpack.c.l.b16 %v279
    %v1641 = vunpack.c.h.b16 %v279
    %v1642 = vunpack.c.l.b16 %v280
    %v1643 = vunpack.c.h.b16 %v280
    %v1644 = vunpack.c.l.b16 %v281
    %v1645 = vunpack.c.h.b16 %v281
    %v1646 = vunpack.c.l.b16 %v282
    %v1647 = vunpack.c.h.b16 %v282
    %v1648 = vunpack.c.l.b16 %v283
    %v1649 = vunpack.c.h.b16 %v283
    %v1650 = vunpack.c.l.b16 %v284
    %v1651 = vunpack.c.h.b16 %v284
    %v1652 = vunpack.c.l.b16 %v285
    %v1653 = vunpack.c.h.b16 %v285
    %v1654 = vunpack.c.l.b16 %v286
    %v1655 = vunpack.c.h.b16 %v286
    %v1656 = vunpack.c.l.b16 %v287
    %v1657 = vunpack.c.h.b16 %v287
    %v1658 = vunpack.c.l.b16 %v288
    %v1659 = vunpack.c.h.b16 %v288
    %v1660 = vunpack.c.l.b16 %v289
    %v1661 = vunpack.c.h.b16 %v289
    %v1662 = vunpack.c.l.b16 %v290
    %v1663 = vunpack.c.h.b16 %v290
    %v1664 = vunpack.c.l.b16 %v291
    %v1665 = vunpack.c.h.b16 %v291
    %v1666 = vunpack.c.l.b16 %v292
    %v1667 = vunpack.c.h.b16 %v292
    %v1668 = vunpack.c.l.b16 %v293
    %v1669 = vunpack.c.h.b16 %v293
    %v1670 = vunpack.c.l.b16 %v294
    %v1671 = vunpack.c.h.b16 %v294
    %v1672 = vunpack.c.l.b16 %v295
    %v1673 = vunpack.c.h.b16 %v295
    %v1674 = vunpack.c.l.b16 %v296
    %v1675 = vunpack.c.h.b16 %v296
    %v1676 = vunpack.c.l.b16 %v297
    %v1677 = vunpack.c.h.b16 %v297
    %v1678 = vunpack.c.l.b16 %v298
    %v1679 = vunpack.c.h.b16 %v298
    %v1680 = vunpack.c.l.b16 %v299
    %v1681 = vunpack.c.h.b16 %v299
    %v1682 = vunpack.c.l.b16 %v300
    %v1683 = vunpack.c.h.b16 %v300
    %v1684 = vunpack.c.l.b16 %v301
    %v1685 = vunpack.c.h.b16 %v301
    %v1686 = vunpack.c.l.b16 %v302
    %v1687 = vunpack.c.h.b16 %v302
    %v1688 = vunpack.c.l.b16 %v303
    %v1689 = vunpack.c.h.b16 %v303
    %v1690 = vunpack.c.l.b16 %v304
    %v1691 = vunpack.c.h.b16 %v304
    %v1692 = vunpack.c.l.b16 %v305
    %v1693 = vunpack.c.h.b16 %v305
    %v1694 = vunpack.c.l.b16 %v306
    %v1695 = vunpack.c.h.b16 %v306
    %v1696 = vunpack.c.l.b16 %v307
    %v1697 = vunpack.c.h.b16 %v307
    %v1698 = vunpack.c.l.b16 %v308
    %v1699 = vunpack.c.h.b16 %v308
    %v1700 = vunpack.c.l.b16 %v309
    %v1701 = vunpack.c.h.b16 %v309
    %v1702 = vunpack.c.l.b16 %v310
    %v1703 = vunpack.c.h.b16 %v310
    %v1704 = vunpack.c.l.b16 %v311
    %v1705 = vunpack.c.h.b16 %v311
    %v1706 = vunpack.c.l.b16 %v312
    %v1707 = vunpack.c.h.b16 %v312
    %v1708 = vunpack.c.l.b16 %v313
    %v1709 = vunpack.c.h.b16 %v313
    %v1710 = vunpack.c.l.b16 %v314
    %v1711 = vunpack.c.h.b16 %v314
    %v1712 = vunpack.c.l.b16 %v315
    %v1713 = vunpack.c.h.b16 %v315
    %v1714 = vunpack.c.l.b16 %v316
    %v1715 = vunpack.c.h.b16 %v316
    %v1716 = vunpack.c.l.b16 %v317
    %v1717 = vunpack.c.h.b16 %v317
    %v1718 = vunpack.c.l.b16 %v318
    %v1719 = vunpack.c.h.b16 %v318
    %v1720 = vunpack.c.l.b16 %v319
    %v1721 = vunpack.c.h.b16 %v319
    %v1722 = vunpack.c.l.b16 %v320
    %v1723 = vunpack.c.h.b16 %v320
    %v1724 = vunpack.c.l.b16 %v321
    %v1725 = vunpack.c.h.b16 %v321
    %v1726 = vunpack.c.l.b16 %v322
    %v1727 = vunpack.c.h.b16 %v322
    %v1728 = vunpack.c.l.b16 %v323
    %v1729 = vunpack.c.h.b16 %v323
    %v1730 = vunpack.c.l.b16 %v324
    %v1731 = vunpack.c.h.b16 %v324
    %v1732 = vunpack.c.l.b16 %v325
    %v1733 = vunpack.c.h.b16 %v325
    %v1734 = vunpack.c.l.b16 %v326
    %v1735 = vunpack.c.h.b16 %v326
    %v1736 = vunpack.c.l.b16 %v327
    %v1737 = vunpack.c.h.b16 %v327
    %v1738 = vunpack.c.l.b16 %v328
    %v1739 = vunpack.c.h.b16 %v328
    %v1740 = vunpack.c.l.b16 %v329
    %v1741 = vunpack.c.h.b16 %v329
    %v1742 = vunpack.c.l.b16 %v330
    %v1743 = vunpack.c.h.b16 %v330
    %v1744 = vunpack.c.l.b16 %v331
    %v1745 = vunpack.c.h.b16 %v331
    %v1746 = vunpack.c.l.b16 %v332
    %v1747 = vunpack.c.h.b16 %v332
    %v1748 = vunpack.c.l.b16 %v333
    %v1749 = vunpack.c.h.b16 %v333
    %v1750 = vunpack.c.l.b16 %v334
    %v1751 = vunpack.c.h.b16 %v334
    %v1752 = vunpack.c.l.b16 %v335
    %v1753 = vunpack.c.h.b16 %v335
    %v1754 = vunpack.c.l.b16 %v336
    %v1755 = vunpack.c.h.b16 %v336
    %v1756 = vunpack.c.l.b16 %v337
    %v1757 = vunpack.c.h.b16 %v337
    %v1758 = vunpack.c.l.b16 %v338
    %v1759 = vunpack.c.h.b16 %v338
    %v1760 = vunpack.c.l.b16 %v339
    %v1761 = vunpack.c.h.b16 %v339
    %v1762 = vunpack.c.l.b16 %v340
    %v1763 = vunpack.c.h.b16 %v340
    %v1764 = vunpack.c.l.b16 %v341
    %v1765 = vunpack.c.h.b16 %v341
    %v1766 = vunpack.c.l.b16 %v342
    %v1767 = vunpack.c.h.b16 %v342
    %v1768 = vunpack.c.l.b16 %v343
    %v1769 = vunpack.c.h.b16 %v343
    %v1770 = vunpack.c.l.b16 %v344
    %v1771 = vunpack.c.h.b16 %v344
    %v1772 = vunpack.c.l.b16 %v345
    %v1773 = vunpack.c.h.b16 %v345
    %v1774 = vunpack.c.l.b16 %v346
    %v1775 = vunpack.c.h.b16 %v346
    %v1776 = vunpack.c.l.b16 %v347
    %v1777 = vunpack.c.h.b16 %v347
    %v1778 = vunpack.c.l.b16 %v348
    %v1779 = vunpack.c.h.b16 %v348
    %v1780 = vunpack.c.l.b16 %v349
    %v1781 = vunpack.c.h.b16 %v349
    %v1782 = vunpack.c.l.b16 %v350
    %v1783 = vunpack.c.h.b16 %v350
    %v1784 = vunpack.c.l.b16 %v351
    %v1785 = vunpack.c.h.b16 %v351
    %v1786 = vunpack.c.l.b16 %v352
    %v1787 = vunpack.c.h.b16 %v352
    %v1788 = vunpack.c.l.b16 %v353
    %v1789 = vunpack.c.h.b16 %v353
    %v1790 = vunpack.c.l.b16 %v354
    %v1791 = vunpack.c.h.b16 %v354
    %v1792 = vunpack.c.l.b16 %v355
    %v1793 = vunpack.c.h.b16 %v355
    %v1794 = vunpack.c.l.b16 %v356
    %v1795 = vunpack.c.h.b16 %v356
    %v1796 = vunpack.c.l.b16 %v357
    %v1797 = vunpack.c.h.b16 %v357
    %v1798 = vunpack.c.l.b16 %v358
    %v1799 = vunpack.c.h.b16 %v358
    %v1800 = vunpack.c.l.b16 %v359
    %v1801 = vunpack.c.h.b16 %v359
    %v1802 = vunpack.c.l.b16 %v360
    %v1803 = vunpack.c.h.b16 %v360
    %v1804 = vunpack.c.l.b16 %v361
    %v1805 = vunpack.c.h.b16 %v361
    %v1806 = vunpack.c.l.b16 %v362
    %v1807 = vunpack.c.h.b16 %v362
    %v1808 = vunpack.c.l.b16 %v363
    %v1809 = vunpack.c.h.b16 %v363
    %v1810 = vunpack.c.l.b16 %v364
    %v1811 = vunpack.c.h.b16 %v364
    %v1812 = vunpack.c.l.b16 %v365
    %v1813 = vunpack.c.h.b16 %v365
    %v1814 = vunpack.c.l.b16 %v366
    %v1815 = vunpack.c.h.b16 %v366
    %v1816 = vunpack.c.l.b16 %v367
    %v1817 = vunpack.c.h.b16 %v367
    %v1818 = vunpack.c.l.b16 %v368
    %v1819 = vunpack.c.h.b16 %v368
    %v1820 = vunpack.c.l.b16 %v369
    %v1821 = vunpack.c.h.b16 %v369
    %v1822 = vunpack.c.l.b16 %v370
    %v1823 = vunpack.c.h.b16 %v370
    %v1824 = vunpack.c.l.b16 %v371
    %v1825 = vunpack.c.h.b16 %v371
    %v1826 = vunpack.c.l.b16 %v372
    %v1827 = vunpack.c.h.b16 %v372
    %v1828 = vunpack.c.l.b16 %v373
    %v1829 = vunpack.c.h.b16 %v373
    %v1830 = vunpack.c.l.b16 %v374
    %v1831 = vunpack.c.h.b16 %v374
    %v1832 = vunpack.c.l.b16 %v375
    %v1833 = vunpack.c.h.b16 %v375
    %v1834 = vunpack.c.l.b16 %v376
    %v1835 = vunpack.c.h.b16 %v376
    %v1836 = vunpack.c.l.b16 %v377
    %v1837 = vunpack.c.h.b16 %v377
    %v1838 = vunpack.c.l.b16 %v378
    %v1839 = vunpack.c.h.b16 %v378
    %v1840 = vunpack.c.l.b16 %v379
    %v1841 = vunpack.c.h.b16 %v379
    %v1842 = vunpack.c.l.b16 %v380
    %v1843 = vunpack.c.h.b16 %v380
    %v1844 = vunpack.c.l.b16 %v381
    %v1845 = vunpack.c.h.b16 %v381
    %v1846 = vunpack.c.l.b16 %v382
    %v1847 = vunpack.c.h.b16 %v382
    %v1848 = vunpack.c.l.b16 %v383
    %v1849 = vunpack.c.h.b16 %v383
    %v1850 = vunpack.c.l.b16 %v384
    %v1851 = vunpack.c.h.b16 %v384
    %v1852 = vunpack.c.l.b16 %v385
    %v1853 = vunpack.c.h.b16 %v385
    %v1854 = vunpack.c.l.b16 %v386
    %v1855 = vunpack.c.h.b16 %v386
    %v1856 = vunpack.c.l.b16 %v387
    %v1857 = vunpack.c.h.b16 %v387
    %v1858 = vunpack.c.l.b16 %v388
    %v1859 = vunpack.c.h.b16 %v388
    %v1860 = vunpack.c.l.b16 %v389
    %v1861 = vunpack.c.h.b16 %v389
    %v1862 = vunpack.c.l.b16 %v390
    %v1863 = vunpack.c.h.b16 %v390
    %v1864 = vunpack.c.l.b16 %v391
    %v1865 = vunpack.c.h.b16 %v391
    %v1866 = vunpack.c.l.b16 %v392
    %v1867 = vunpack.c.h.b16 %v392
    %v1868 = vunpack.c.l.b16 %v393
    %v1869 = vunpack.c.h.b16 %v393
    %v1870 = vunpack.c.l.b16 %v394
    %v1871 = vunpack.c.h.b16 %v394
    %v1872 = vunpack.c.l.b16 %v395
    %v1873 = vunpack.c.h.b16 %v395
    %v1874 = vunpack.c.l.b16 %v396
    %v1875 = vunpack.c.h.b16 %v396
    %v1876 = vunpack.c.l.b16 %v397
    %v1877 = vunpack.c.h.b16 %v397
    %v1878 = vunpack.c.l.b16 %v398
    %v1879 = vunpack.c.h.b16 %v398
    %v1880 = vunpack.c.l.b16 %v399
    %v1881 = vunpack.c.h.b16 %v399
    %v1882 = vunpack.c.l.b16 %v400
    %v1883 = vunpack.c.h.b16 %v400
    %v1884 = vunpack.c.l.b16 %v401
    %v1885 = vunpack.c.h.b16 %v401
    %v1886 = vunpack.c.l.b16 %v402
    %v1887 = vunpack.c.h.b16 %v402
    %v1888 = vunpack.c.l.b16 %v403
    %v1889 = vunpack.c.h.b16 %v403
    %v1890 = vunpack.c.l.b16 %v404
    %v1891 = vunpack.c.h.b16 %v404
    %v1892 = vunpack.c.l.b16 %v405
    %v1893 = vunpack.c.h.b16 %v405
    %v1894 = vunpack.c.l.b16 %v406
    %v1895 = vunpack.c.h.b16 %v406
    %v1896 = vunpack.c.l.b16 %v407
    %v1897 = vunpack.c.h.b16 %v407
    %v1898 = vunpack.c.l.b16 %v408
    %v1899 = vunpack.c.h.b16 %v408
    %v1900 = vunpack.c.l.b16 %v409
    %v1901 = vunpack.c.h.b16 %v409
    %v1902 = vunpack.c.l.b16 %v410
    %v1903 = vunpack.c.h.b16 %v410
    %v1904 = vunpack.c.l.b16 %v411
    %v1905 = vunpack.c.h.b16 %v411
    %v1906 = vunpack.c.l.b16 %v412
    %v1907 = vunpack.c.h.b16 %v412
    %v1908 = vunpack.c.l.b16 %v413
    %v1909 = vunpack.c.h.b16 %v413
    %v1910 = vunpack.c.l.b16 %v414
    %v1911 = vunpack.c.h.b16 %v414
    %v1912 = vunpack.c.l.b16 %v415
    %v1913 = vunpack.c.h.b16 %v415
    %v1914 = vunpack.c.l.b16 %v416
    %v1915 = vunpack.c.h.b16 %v416
    %v1916 = vunpack.c.l.b16 %v417
    %v1917 = vunpack.c.h.b16 %v417
    %v1918 = vunpack.c.l.b16 %v418
    %v1919 = vunpack.c.h.b16 %v418
    %v1920 = vunpack.c.l.b16 %v419
    %v1921 = vunpack.c.h.b16 %v419
    %v1922 = vunpack.c.l.b16 %v420
    %v1923 = vunpack.c.h.b16 %v420
    %v1924 = vunpack.c.l.b16 %v421
    %v1925 = vunpack.c.h.b16 %v421
    %v1926 = vunpack.c.l.b16 %v422
    %v1927 = vunpack.c.h.b16 %v422
    %v1928 = vunpack.c.l.b16 %v423
    %v1929 = vunpack.c.h.b16 %v423
    %v1930 = vunpack.c.l.b16 %v424
    %v1931 = vunpack.c.h.b16 %v424
    %v1932 = vunpack.c.l.b16 %v425
    %v1933 = vunpack.c.h.b16 %v425
    %v1934 = vunpack.c.l.b16 %v426
    %v1935 = vunpack.c.h.b16 %v426
    %v1936 = vunpack.c.l.b16 %v427
    %v1937 = vunpack.c.h.b16 %v427
    %v1938 = vunpack.c.l.b16 %v428
    %v1939 = vunpack.c.h.b16 %v428
    %v1940 = vunpack.c.l.b16 %v429
    %v1941 = vunpack.c.h.b16 %v429
    %v1942 = vunpack.c.l.b16 %v430
    %v1943 = vunpack.c.h.b16 %v430
    %v1944 = vunpack.c.l.b16 %v431
    %v1945 = vunpack.c.h.b16 %v431
    %v1946 = vunpack.c.l.b16 %v432
    %v1947 = vunpack.c.h.b16 %v432
    %v1948 = vunpack.c.l.b16 %v433
    %v1949 = vunpack.c.h.b16 %v433
    %v1950 = vunpack.c.l.b16 %v434
    %v1951 = vunpack.c.h.b16 %v434
    %v1952 = vunpack.c.l.b16 %v435
    %v1953 = vunpack.c.h.b16 %v435
    %v1954 = vunpack.c.l.b16 %v436
    %v1955 = vunpack.c.h.b16 %v436
    %v1956 = vunpack.c.l.b16 %v437
    %v1957 = vunpack.c.h.b16 %v437
    %v1958 = vunpack.c.l.b16 %v438
    %v1959 = vunpack.c.h.b16 %v438
    %v1960 = vunpack.c.l.b16 %v439
    %v1961 = vunpack.c.h.b16 %v439
    %v1962 = vunpack.c.l.b16 %v440
    %v1963 = vunpack.c.h.b16 %v440
    %v1964 = vunpack.c.l.b16 %v441
    %v1965 = vunpack.c.h.b16 %v441
    %v1966 = vunpack.c.l.b16 %v442
    %v1967 = vunpack.c.h.b16 %v442
    %v1968 = vunpack.c.l.b16 %v443
    %v1969 = vunpack.c.h.b16 %v443
    %v1970 = vunpack.c.l.b16 %v444
    %v1971 = vunpack.c.h.b16 %v444
    %v1972 = vunpack.c.l.b16 %v445
    %v1973 = vunpack.c.h.b16 %v445
    %v1974 = vunpack.c.l.b16 %v446
    %v1975 = vunpack.c.h.b16 %v446
    %v1976 = vunpack.c.l.b16 %v447
    %v1977 = vunpack.c.h.b16 %v447
    %v1978 = vunpack.c.l.b16 %v448
    %v1979 = vunpack.c.h.b16 %v448
    %v1980 = vunpack.c.l.b16 %v449
    %v1981 = vunpack.c.h.b16 %v449
    %v1982 = vunpack.c.l.b16 %v450
    %v1983 = vunpack.c.h.b16 %v450
    %v1984 = vunpack.c.l.b16 %v451
    %v1985 = vunpack.c.h.b16 %v451
    %v1986 = vunpack.c.l.b16 %v452
    %v1987 = vunpack.c.h.b16 %v452
    %v1988 = vunpack.c.l.b16 %v453
    %v1989 = vunpack.c.h.b16 %v453
    %v1990 = vunpack.c.l.b16 %v454
    %v1991 = vunpack.c.h.b16 %v454
    %v1992 = vunpack.c.l.b16 %v455
    %v1993 = vunpack.c.h.b16 %v455
    %v1994 = vunpack.c.l.b16 %v456
    %v1995 = vunpack.c.h.b16 %v456
    %v1996 = vunpack.c.l.b16 %v457
    %v1997 = vunpack.c.h.b16 %v457
    %v1998 = vunpack.c.l.b16 %v458
    %v1999 = vunpack.c.h.b16 %v458
    %v2000 = vunpack.c.l.b16 %v459
    %v2001 = vunpack.c.h.b16 %v459
    %v2002 = vunpack.c.l.b16 %v460
    %v2003 = vunpack.c.h.b16 %v460
    %v2004 = vunpack.c.l.b16 %v461
    %v2005 = vunpack.c.h.b16 %v461
    %v2006 = vunpack.c.l.b16 %v462
    %v2007 = vunpack.c.h.b16 %v462
    %v2008 = vunpack.c.l.b16 %v463
    %v2009 = vunpack.c.h.b16 %v463
    %v2010 = vunpack.c.l.b16 %v464
    %v2011 = vunpack.c.h.b16 %v464
    %v2012 = vunpack.c.l.b16 %v465
    %v2013 = vunpack.c.h.b16 %v465
    %v2014 = vunpack.c.l.b16 %v466
    %v2015 = vunpack.c.h.b16 %v466
    %v2016 = vunpack.c.l.b16 %v467
    %v2017 = vunpack.c.h.b16 %v467
    %v2018 = vunpack.c.l.b16 %v468
    %v2019 = vunpack.c.h.b16 %v468
    %v2020 = vunpack.c.l.b16 %v469
    %v2021 = vunpack.c.h.b16 %v469
    %v2022 = vunpack.c.l.b16 %v470
    %v2023 = vunpack.c.h.b16 %v470
    %v2024 = vunpack.c.l.b16 %v471
    %v2025 = vunpack.c.h.b16 %v471
    %v2026 = vunpack.c.l.b16 %v472
    %v2027 = vunpack.c.h.b16 %v472
    %v2028 = vunpack.c.l.b16 %v473
    %v2029 = vunpack.c.h.b16 %v473
    %v2030 = vunpack.c.l.b16 %v474
    %v2031 = vunpack.c.h.b16 %v474
    %v2032 = vunpack.c.l.b16 %v475
    %v2033 = vunpack.c.h.b16 %v475
    %v2034 = vunpack.c.l.b16 %v476
    %v2035 = vunpack.c.h.b16 %v476
    %v2036 = vunpack.c.l.b16 %v477
    %v2037 = vunpack.c.h.b16 %v477
    %v2038 = vunpack.c.l.b16 %v478
    %v2039 = vunpack.c.h.b16 %v478
    %v2040 = vunpack.c.l.b16 %v479
    %v2041 = vunpack.c.h.b16 %v479
    %v2042 = vunpack.c.l.b16 %v480
    %v2043 = vunpack.c.h.b16 %v480
    %v2044 = vunpack.c.l.b16 %v481
    %v2045 = vunpack.c.h.b16 %v481
    %v2046 = vunpack.c.l.b16 %v482
    %v2047 = vunpack.c.h.b16 %v482
    %v2048 = vunpack.c.l.b16 %v483
    %v2049 = vunpack.c.h.b16 %v483
    %v2050 = vunpack.c.l.b16 %v484
    %v2051 = vunpack.c.h.b16 %v484
    %v2052 = vunpack.c.l.b16 %v485
    %v2053 = vunpack.c.h.b16 %v485
    %v2054 = vunpack.c.l.b16 %v486
    %v2055 = vunpack.c.h.b16 %v486
    %v2056 = vunpack.c.l.b16 %v487
    %v2057 = vunpack.c.h.b16 %v487
    %v2058 = vunpack.c.l.b16 %v488
    %v2059 = vunpack.c.h.b16 %v488
    %v2060 = vunpack.c.l.b16 %v489
    %v2061 = vunpack.c.h.b16 %v489
    %v2062 = vunpack.c.l.b16 %v490
    %v2063 = vunpack.c.h.b16 %v490
    %v2064 = vunpack.c.l.b16 %v491
    %v2065 = vunpack.c.h.b16 %v491
    %v2066 = vunpack.c.l.b16 %v492
    %v2067 = vunpack.c.h.b16 %v492
    %v2068 = vunpack.c.l.b16 %v493
    %v2069 = vunpack.c.h.b16 %v493
    %v2070 = vunpack.c.l.b16 %v494
    %v2071 = vunpack.c.h.b16 %v494
    %v2072 = vunpack.c.l.b16 %v495
    %v2073 = vunpack.c.h.b16 %v495
    %v2074 = vunpack.c.l.b16 %v496
    %v2075 = vunpack.c.h.b16 %v496
    %v2076 = vunpack.c.l.b16 %v497
    %v2077 = vunpack.c.h.b16 %v497
    %v2078 = vunpack.c.l.b16 %v498
    %v2079 = vunpack.c.h.b16 %v498
    %v2080 = vunpack.c.l.b16 %v499
    %v2081 = vunpack.c.h.b16 %v499
    %v2082 = vunpack.c.l.b16 %v500
    %v2083 = vunpack.c.h.b16 %v500
    %v2084 = vunpack.c.l.b16 %v501
    %v2085 = vunpack.c.h.b16 %v501
    %v2086 = vunpack.c.l.b16 %v502
    %v2087 = vunpack.c.h.b16 %v502
    %v2088 = vunpack.c.l.b16 %v503
    %v2089 = vunpack.c.h.b16 %v503
    %v2090 = vunpack.c.l.b16 %v504
    %v2091 = vunpack.c.h.b16 %v504
    %v2092 = vunpack.c.l.b16 %v505
    %v2093 = vunpack.c.h.b16 %v505
    %v2094 = vunpack.c.l.b16 %v506
    %v2095 = vunpack.c.h.b16 %v506
    %v2096 = vunpack.c.l.b16 %v507
    %v2097 = vunpack.c.h.b16 %v507
    %v2098 = vunpack.c.l.b16 %v508
    %v2099 = vunpack.c.h.b16 %v508
    %v2100 = vunpack.c.l.b16 %v509
    %v2101 = vunpack.c.h.b16 %v509
    %v2102 = vunpack.c.l.b16 %v510
    %v2103 = vunpack.c.h.b16 %v510
    %v2104 = vunpack.c.l.b16 %v511
    %v2105 = vunpack.c.h.b16 %v511
    %v2106 = vunpack.c.l.b16 %v512
    %v2107 = vunpack.c.h.b16 %v512
    %v2108 = vunpack.c.l.b16 %v513
    %v2109 = vunpack.c.h.b16 %v513
    %v2110 = vunpack.c.l.b16 %v514
    %v2111 = vunpack.c.h.b16 %v514
    %v2112 = vunpack.c.l.b16 %v515
    %v2113 = vunpack.c.h.b16 %v515
    %v2114 = vunpack.c.l.b16 %v516
    %v2115 = vunpack.c.h.b16 %v516
    %v2116 = vunpack.c.l.b16 %v517
    %v2117 = vunpack.c.h.b16 %v517
    %v2118 = vunpack.c.l.b16 %v518
    %v2119 = vunpack.c.h.b16 %v518
    %v2120 = vunpack.c.l.b16 %v519
    %v2121 = vunpack.c.h.b16 %v519
    %v2122 = vunpack.c.l.b16 %v520
    %v2123 = vunpack.c.h.b16 %v520
    %v2124 = vunpack.c.l.b16 %v521
    %v2125 = vunpack.c.h.b16 %v521
    %v2126 = vunpack.c.l.b16 %v522
    %v2127 = vunpack.c.h.b16 %v522
    %v2128 = vunpack.c.l.b16 %v523
    %v2129 = vunpack.c.h.b16 %v523
    %v2130 = vunpack.c.l.b16 %v524
    %v2131 = vunpack.c.h.b16 %v524
    %v2132 = vunpack.c.l.b16 %v525
    %v2133 = vunpack.c.h.b16 %v525
    %v2134 = vunpack.c.l.b16 %v526
    %v2135 = vunpack.c.h.b16 %v526
    %v2136 = vunpack.c.l.b16 %v527
    %v2137 = vunpack.c.h.b16 %v527
    %v2138 = vunpack.c.l.b16 %v528
    %v2139 = vunpack.c.h.b16 %v528
    %v2140 = vunpack.c.l.b16 %v529
    %v2141 = vunpack.c.h.b16 %v529
    %v2142 = vunpack.c.l.b16 %v530
    %v2143 = vunpack.c.h.b16 %v530
    %v2144 = vunpack.c.l.b16 %v531
    %v2145 = vunpack.c.h.b16 %v531
    %v2146 = vunpack.c.l.b16 %v532
    %v2147 = vunpack.c.h.b16 %v532
    %v2148 = vunpack.c.l.b16 %v533
    %v2149 = vunpack.c.h.b16 %v533
    %v2150 = vunpack.c.l.b16 %v534
    %v2151 = vunpack.c.h.b16 %v534
    %v2152 = vunpack.c.l.b16 %v535
    %v2153 = vunpack.c.h.b16 %v535
    %v2154 = vunpack.c.l.b16 %v536
    %v2155 = vunpack.c.h.b16 %v536
    %v2156 = vunpack.c.l.b16 %v537
    %v2157 = vunpack.c.h.b16 %v537
    %v2158 = vunpack.c.l.b16 %v538
    %v2159 = vunpack.c.h.b16 %v538
    %v2160 = vunpack.c.l.b16 %v539
    %v2161 = vunpack.c.h.b16 %v539
    %v2162 = vunpack.c.l.b16 %v540
    %v2163 = vunpack.c.h.b16 %v540
    %v2164 = vunpack.c.l.b16 %v541
    %v2165 = vunpack.c.h.b16 %v541
    %v2166 = vunpack.c.l.b16 %v542
    %v2167 = vunpack.c.h.b16 %v542
    %v2168 = vunpack.c.l.b16 %v543
    %v2169 = vunpack.c.h.b16 %v543
    %v2170 = vunpack.c.l.b16 %v544
    %v2171 = vunpack.c.h.b16 %v544
    %v2172 = vunpack.c.l.b16 %v545
    %v2173 = vunpack.c.h.b16 %v545
    %v2174 = vunpack.c.l.b16 %v546
    %v2175 = vunpack.c.h.b16 %v546
    %v2176 = vunpack.c.l.b16 %v547
    %v2177 = vunpack.c.h.b16 %v547
    %v2178 = vunpack.c.l.b16 %v548
    %v2179 = vunpack.c.h.b16 %v548
    %v2180 = vunpack.c.l.b16 %v549
    %v2181 = vunpack.c.h.b16 %v549
    %v2182 = vunpack.c.l.b16 %v550
    %v2183 = vunpack.c.h.b16 %v550
    %v2184 = vunpack.c.l.b16 %v551
    %v2185 = vunpack.c.h.b16 %v551
    %v2186 = vpack.c.b16 %v1170, %v1162
    %v2187 = vpack.c.b16 %v1171, %v1163
    %v2188 = vpack.c.b16 %v1172, %v1164
    %v2189 = vpack.c.b16 %v1173, %v1165
    %v2190 = vpack.c.b16 %v1174, %v1166
    %v2191 = vpack.c.b16 %v1175, %v1167
    %v2192 = vpack.c.b16 %v1176, %v1168
    %v2193 = vpack.c.b16 %v1177, %v1169
    %v2194 = vpack.c.b16 %v1186, %v1178
    %v2195 = vpack.c.b16 %v1187, %v1179
    %v2196 = vpack.c.b16 %v1188, %v1180
    %v2197 = vpack.c.b16 %v1189, %v1181
    %v2198 = vpack.c.b16 %v1190, %v1182
    %v2199 = vpack.c.b16 %v1191, %v1183
    %v2200 = vpack.c.b16 %v1192, %v1184
    %v2201 = vpack.c.b16 %v1193, %v1185
    %v2202 = vpack.c.b16 %v1202, %v1194
    %v2203 = vpack.c.b16 %v1203, %v1195
    %v2204 = vpack.c.b16 %v1204, %v1196
    %v2205 = vpack.c.b16 %v1205, %v1197
    %v2206 = vpack.c.b16 %v1206, %v1198
    %v2207 = vpack.c.b16 %v1207, %v1199
    %v2208 = vpack.c.b16 %v1208, %v1200
    %v2209 = vpack.c.b16 %v1209, %v1201
    %v2210 = vpack.c.b16 %v1218, %v1210
    %v2211 = vpack.c.b16 %v1219, %v1211
    %v2212 = vpack.c.b16 %v1220, %v1212
    %v2213 = vpack.c.b16 %v1221, %v1213
    %v2214 = vpack.c.b16 %v1222, %v1214
    %v2215 = vpack.c.b16 %v1223, %v1215
    %v2216 = vpack.c.b16 %v1224, %v1216
    %v2217 = vpack.c.b16 %v1225, %v1217
    %v2218 = vpack.c.b16 %v1234, %v1226
    %v2219 = vpack.c.b16 %v1235, %v1227
    %v2220 = vpack.c.b16 %v1236, %v1228
    %v2221 = vpack.c.b16 %v1237, %v1229
    %v2222 = vpack.c.b16 %v1238, %v1230
    %v2223 = vpack.c.b16 %v1239, %v1231
    %v2224 = vpack.c.b16 %v1240, %v1232
    %v2225 = vpack.c.b16 %v1241, %v1233
    %v2226 = vpack.c.b16 %v1250, %v1242
    %v2227 = vpack.c.b16 %v1251, %v1243
    %v2228 = vpack.c.b16 %v1252, %v1244
    %v2229 = vpack.c.b16 %v1253, %v1245
    %v2230 = vpack.c.b16 %v1254, %v1246
    %v2231 = vpack.c.b16 %v1255, %v1247
    %v2232 = vpack.c.b16 %v1256, %v1248
    %v2233 = vpack.c.b16 %v1257, %v1249
    %v2234 = vpack.c.b16 %v1266, %v1258
    %v2235 = vpack.c.b16 %v1267, %v1259
    %v2236 = vpack.c.b16 %v1268, %v1260
    %v2237 = vpack.c.b16 %v1269, %v1261
    %v2238 = vpack.c.b16 %v1270, %v1262
    %v2239 = vpack.c.b16 %v1271, %v1263
    %v2240 = vpack.c.b16 %v1272, %v1264
    %v2241 = vpack.c.b16 %v1273, %v1265
    %v2242 = vpack.c.b16 %v1282, %v1274
    %v2243 = vpack.c.b16 %v1283, %v1275
    %v2244 = vpack.c.b16 %v1284, %v1276
    %v2245 = vpack.c.b16 %v1285, %v1277
    %v2246 = vpack.c.b16 %v1286, %v1278
    %v2247 = vpack.c.b16 %v1287, %v1279
    %v2248 = vpack.c.b16 %v1288, %v1280
    %v2249 = vpack.c.b16 %v1289, %v1281
    %v2250 = vpack.c.b16 %v1298, %v1290
    %v2251 = vpack.c.b16 %v1299, %v1291
    %v2252 = vpack.c.b16 %v1300, %v1292
    %v2253 = vpack.c.b16 %v1301, %v1293
    %v2254 = vpack.c.b16 %v1302, %v1294
    %v2255 = vpack.c.b16 %v1303, %v1295
    %v2256 = vpack.c.b16 %v1304, %v1296
    %v2257 = vpack.c.b16 %v1305, %v1297
    %v2258 = vpack.c.b16 %v1314, %v1306
    %v2259 = vpack.c.b16 %v1315, %v1307
    %v2260 = vpack.c.b16 %v1316, %v1308
    %v2261 = vpack.c.b16 %v1317, %v1309
    %v2262 = vpack.c.b16 %v1318, %v1310
    %v2263 = vpack.c.b16 %v1319, %v1311
    %v2264 = vpack.c.b16 %v1320, %v1312
    %v2265 = vpack.c.b16 %v1321, %v1313
    %v2266 = vpack.c.b16 %v1330, %v1322
    %v2267 = vpack.c.b16 %v1331, %v1323
    %v2268 = vpack.c.b16 %v1332, %v1324
    %v2269 = vpack.c.b16 %v1333, %v1325
    %v2270 = vpack.c.b16 %v1334, %v1326
    %v2271 = vpack.c.b16 %v1335, %v1327
    %v2272 = vpack.c.b16 %v1336, %v1328
    %v2273 = vpack.c.b16 %v1337, %v1329
    %v2274 = vpack.c.b16 %v1346, %v1338
    %v2275 = vpack.c.b16 %v1347, %v1339
    %v2276 = vpack.c.b16 %v1348, %v1340
    %v2277 = vpack.c.b16 %v1349, %v1341
    %v2278 = vpack.c.b16 %v1350, %v1342
    %v2279 = vpack.c.b16 %v1351, %v1343
    %v2280 = vpack.c.b16 %v1352, %v1344
    %v2281 = vpack.c.b16 %v1353, %v1345
    %v2282 = vpack.c.b16 %v1362, %v1354
    %v2283 = vpack.c.b16 %v1363, %v1355
    %v2284 = vpack.c.b16 %v1364, %v1356
    %v2285 = vpack.c.b16 %v1365, %v1357
    %v2286 = vpack.c.b16 %v1366, %v1358
    %v2287 = vpack.c.b16 %v1367, %v1359
    %v2288 = vpack.c.b16 %v1368, %v1360
    %v2289 = vpack.c.b16 %v1369, %v1361
    %v2290 = vpack.c.b16 %v1378, %v1370
    %v2291 = vpack.c.b16 %v1379, %v1371
    %v2292 = vpack.c.b16 %v1380, %v1372
    %v2293 = vpack.c.b16 %v1381, %v1373
    %v2294 = vpack.c.b16 %v1382, %v1374
    %v2295 = vpack.c.b16 %v1383, %v1375
    %v2296 = vpack.c.b16 %v1384, %v1376
    %v2297 = vpack.c.b16 %v1385, %v1377
    %v2298 = vpack.c.b16 %v1394, %v1386
    %v2299 = vpack.c.b16 %v1395, %v1387
    %v2300 = vpack.c.b16 %v1396, %v1388
    %v2301 = vpack.c.b16 %v1397, %v1389
    %v2302 = vpack.c.b16 %v1398, %v1390
    %v2303 = vpack.c.b16 %v1399, %v1391
    %v2304 = vpack.c.b16 %v1400, %v1392
    %v2305 = vpack.c.b16 %v1401, %v1393
    %v2306 = vpack.c.b16 %v1410, %v1402
    %v2307 = vpack.c.b16 %v1411, %v1403
    %v2308 = vpack.c.b16 %v1412, %v1404
    %v2309 = vpack.c.b16 %v1413, %v1405
    %v2310 = vpack.c.b16 %v1414, %v1406
    %v2311 = vpack.c.b16 %v1415, %v1407
    %v2312 = vpack.c.b16 %v1416, %v1408
    %v2313 = vpack.c.b16 %v1417, %v1409
    %v2314 = vpack.c.b16 %v1426, %v1418
    %v2315 = vpack.c.b16 %v1427, %v1419
    %v2316 = vpack.c.b16 %v1428, %v1420
    %v2317 = vpack.c.b16 %v1429, %v1421
    %v2318 = vpack.c.b16 %v1430, %v1422
    %v2319 = vpack.c.b16 %v1431, %v1423
    %v2320 = vpack.c.b16 %v1432, %v1424
    %v2321 = vpack.c.b16 %v1433, %v1425
    %v2322 = vpack.c.b16 %v1442, %v1434
    %v2323 = vpack.c.b16 %v1443, %v1435
    %v2324 = vpack.c.b16 %v1444, %v1436
    %v2325 = vpack.c.b16 %v1445, %v1437
    %v2326 = vpack.c.b16 %v1446, %v1438
    %v2327 = vpack.c.b16 %v1447, %v1439
    %v2328 = vpack.c.b16 %v1448, %v1440
    %v2329 = vpack.c.b16 %v1449, %v1441
    %v2330 = vpack.c.b16 %v1458, %v1450
    %v2331 = vpack.c.b16 %v1459, %v1451
    %v2332 = vpack.c.b16 %v1460, %v1452
    %v2333 = vpack.c.b16 %v1461, %v1453
    %v2334 = vpack.c.b16 %v1462, %v1454
    %v2335 = vpack.c.b16 %v1463, %v1455
    %v2336 = vpack.c.b16 %v1464, %v1456
    %v2337 = vpack.c.b16 %v1465, %v1457
    %v2338 = vpack.c.b16 %v1474, %v1466
    %v2339 = vpack.c.b16 %v1475, %v1467
    %v2340 = vpack.c.b16 %v1476, %v1468
    %v2341 = vpack.c.b16 %v1477, %v1469
    %v2342 = vpack.c.b16 %v1478, %v1470
    %v2343 = vpack.c.b16 %v1479, %v1471
    %v2344 = vpack.c.b16 %v1480, %v1472
    %v2345 = vpack.c.b16 %v1481, %v1473
    %v2346 = vpack.c.b16 %v1490, %v1482
    %v2347 = vpack.c.b16 %v1491, %v1483
    %v2348 = vpack.c.b16 %v1492, %v1484
    %v2349 = vpack.c.b16 %v1493, %v1485
    %v2350 = vpack.c.b16 %v1494, %v1486
    %v2351 = vpack.c.b16 %v1495, %v1487
    %v2352 = vpack.c.b16 %v1496, %v1488
    %v2353 = vpack.c.b16 %v1497, %v1489
    %v2354 = vpack.c.b16 %v1506, %v1498
    %v2355 = vpack.c.b16 %v1507, %v1499
    %v2356 = vpack.c.b16 %v1508, %v1500
    %v2357 = vpack.c.b16 %v1509, %v1501
    %v2358 = vpack.c.b16 %v1510, %v1502
    %v2359 = vpack.c.b16 %v1511, %v1503
    %v2360 = vpack.c.b16 %v1512, %v1504
    %v2361 = vpack.c.b16 %v1513, %v1505
    %v2362 = vpack.c.b16 %v1522, %v1514
    %v2363 = vpack.c.b16 %v1523, %v1515
    %v2364 = vpack.c.b16 %v1524, %v1516
    %v2365 = vpack.c.b16 %v1525, %v1517
    %v2366 = vpack.c.b16 %v1526, %v1518
    %v2367 = vpack.c.b16 %v1527, %v1519
    %v2368 = vpack.c.b16 %v1528, %v1520
    %v2369 = vpack.c.b16 %v1529, %v1521
    %v2370 = vpack.c.b16 %v1538, %v1530
    %v2371 = vpack.c.b16 %v1539, %v1531
    %v2372 = vpack.c.b16 %v1540, %v1532
    %v2373 = vpack.c.b16 %v1541, %v1533
    %v2374 = vpack.c.b16 %v1542, %v1534
    %v2375 = vpack.c.b16 %v1543, %v1535
    %v2376 = vpack.c.b16 %v1544, %v1536
    %v2377 = vpack.c.b16 %v1545, %v1537
    %v2378 = vpack.c.b16 %v1554, %v1546
    %v2379 = vpack.c.b16 %v1555, %v1547
    %v2380 = vpack.c.b16 %v1556, %v1548
    %v2381 = vpack.c.b16 %v1557, %v1549
    %v2382 = vpack.c.b16 %v1558, %v1550
    %v2383 = vpack.c.b16 %v1559, %v1551
    %v2384 = vpack.c.b16 %v1560, %v1552
    %v2385 = vpack.c.b16 %v1561, %v1553
    %v2386 = vpack.c.b16 %v1570, %v1562
    %v2387 = vpack.c.b16 %v1571, %v1563
    %v2388 = vpack.c.b16 %v1572, %v1564
    %v2389 = vpack.c.b16 %v1573, %v1565
    %v2390 = vpack.c.b16 %v1574, %v1566
    %v2391 = vpack.c.b16 %v1575, %v1567
    %v2392 = vpack.c.b16 %v1576, %v1568
    %v2393 = vpack.c.b16 %v1577, %v1569
    %v2394 = vpack.c.b16 %v1586, %v1578
    %v2395 = vpack.c.b16 %v1587, %v1579
    %v2396 = vpack.c.b16 %v1588, %v1580
    %v2397 = vpack.c.b16 %v1589, %v1581
    %v2398 = vpack.c.b16 %v1590, %v1582
    %v2399 = vpack.c.b16 %v1591, %v1583
    %v2400 = vpack.c.b16 %v1592, %v1584
    %v2401 = vpack.c.b16 %v1593, %v1585
    %v2402 = vpack.c.b16 %v1602, %v1594
    %v2403 = vpack.c.b16 %v1603, %v1595
    %v2404 = vpack.c.b16 %v1604, %v1596
    %v2405 = vpack.c.b16 %v1605, %v1597
    %v2406 = vpack.c.b16 %v1606, %v1598
    %v2407 = vpack.c.b16 %v1607, %v1599
    %v2408 = vpack.c.b16 %v1608, %v1600
    %v2409 = vpack.c.b16 %v1609, %v1601
    %v2410 = vpack.c.b16 %v1618, %v1610
    %v2411 = vpack.c.b16 %v1619, %v1611
    %v2412 = vpack.c.b16 %v1620, %v1612
    %v2413 = vpack.c.b16 %v1621, %v1613
    %v2414 = vpack.c.b16 %v1622, %v1614
    %v2415 = vpack.c.b16 %v1623, %v1615
    %v2416 = vpack.c.b16 %v1624, %v1616
    %v2417 = vpack.c.b16 %v1625, %v1617
    %v2418 = vpack.c.b16 %v1634, %v1626
    %v2419 = vpack.c.b16 %v1635, %v1627
    %v2420 = vpack.c.b16 %v1636, %v1628
    %v2421 = vpack.c.b16 %v1637, %v1629
    %v2422 = vpack.c.b16 %v1638, %v1630
    %v2423 = vpack.c.b16 %v1639, %v1631
    %v2424 = vpack.c.b16 %v1640, %v1632
    %v2425 = vpack.c.b16 %v1641, %v1633
    %v2426 = vpack.c.b16 %v1650, %v1642
    %v2427 = vpack.c.b16 %v1651, %v1643
    %v2428 = vpack.c.b16 %v1652, %v1644
    %v2429 = vpack.c.b16 %v1653, %v1645
    %v2430 = vpack.c.b16 %v1654, %v1646
    %v2431 = vpack.c.b16 %v1655, %v1647
    %v2432 = vpack.c.b16 %v1656, %v1648
    %v2433 = vpack.c.b16 %v1657, %v1649
    %v2434 = vpack.c.b16 %v1666, %v1658
    %v2435 = vpack.c.b16 %v1667, %v1659
    %v2436 = vpack.c.b16 %v1668, %v1660
    %v2437 = vpack.c.b16 %v1669, %v1661
    %v2438 = vpack.c.b16 %v1670, %v1662
    %v2439 = vpack.c.b16 %v1671, %v1663
    %v2440 = vpack.c.b16 %v1672, %v1664
    %v2441 = vpack.c.b16 %v1673, %v1665
    %v2442 = vpack.c.b16 %v1682, %v1674
    %v2443 = vpack.c.b16 %v1683, %v1675
    %v2444 = vpack.c.b16 %v1684, %v1676
    %v2445 = vpack.c.b16 %v1685, %v1677
    %v2446 = vpack.c.b16 %v1686, %v1678
    %v2447 = vpack.c.b16 %v1687, %v1679
    %v2448 = vpack.c.b16 %v1688, %v1680
    %v2449 = vpack.c.b16 %v1689, %v1681
    %v2450 = vpack.c.b16 %v1698, %v1690
    %v2451 = vpack.c.b16 %v1699, %v1691
    %v2452 = vpack.c.b16 %v1700, %v1692
    %v2453 = vpack.c.b16 %v1701, %v1693
    %v2454 = vpack.c.b16 %v1702, %v1694
    %v2455 = vpack.c.b16 %v1703, %v1695
    %v2456 = vpack.c.b16 %v1704, %v1696
    %v2457 = vpack.c.b16 %v1705, %v1697
    %v2458 = vpack.c.b16 %v1714, %v1706
    %v2459 = vpack.c.b16 %v1715, %v1707
    %v2460 = vpack.c.b16 %v1716, %v1708
    %v2461 = vpack.c.b16 %v1717, %v1709
    %v2462 = vpack.c.b16 %v1718, %v1710
    %v2463 = vpack.c.b16 %v1719, %v1711
    %v2464 = vpack.c.b16 %v1720, %v1712
    %v2465 = vpack.c.b16 %v1721, %v1713
    %v2466 = vpack.c.b16 %v1730, %v1722
    %v2467 = vpack.c.b16 %v1731, %v1723
    %v2468 = vpack.c.b16 %v1732, %v1724
    %v2469 = vpack.c.b16 %v1733, %v1725
    %v2470 = vpack.c.b16 %v1734, %v1726
    %v2471 = vpack.c.b16 %v1735, %v1727
    %v2472 = vpack.c.b16 %v1736, %v1728
    %v2473 = vpack.c.b16 %v1737, %v1729
    %v2474 = vpack.c.b16 %v1746, %v1738
    %v2475 = vpack.c.b16 %v1747, %v1739
    %v2476 = vpack.c.b16 %v1748, %v1740
    %v2477 = vpack.c.b16 %v1749, %v1741
    %v2478 = vpack.c.b16 %v1750, %v1742
    %v2479 = vpack.c.b16 %v1751, %v1743
    %v2480 = vpack.c.b16 %v1752, %v1744
    %v2481 = vpack.c.b16 %v1753, %v1745
    %v2482 = vpack.c.b16 %v1762, %v1754
    %v2483 = vpack.c.b16 %v1763, %v1755
    %v2484 = vpack.c.b16 %v1764, %v1756
    %v2485 = vpack.c.b16 %v1765, %v1757
    %v2486 = vpack.c.b16 %v1766, %v1758
    %v2487 = vpack.c.b16 %v1767, %v1759
    %v2488 = vpack.c.b16 %v1768, %v1760
    %v2489 = vpack.c.b16 %v1769, %v1761
    %v2490 = vpack.c.b16 %v1778, %v1770
    %v2491 = vpack.c.b16 %v1779, %v1771
    %v2492 = vpack.c.b16 %v1780, %v1772
    %v2493 = vpack.c.b16 %v1781, %v1773
    %v2494 = vpack.c.b16 %v1782, %v1774
    %v2495 = vpack.c.b16 %v1783, %v1775
    %v2496 = vpack.c.b16 %v1784, %v1776
    %v2497 = vpack.c.b16 %v1785, %v1777
    %v2498 = vpack.c.b16 %v1794, %v1786
    %v2499 = vpack.c.b16 %v1795, %v1787
    %v2500 = vpack.c.b16 %v1796, %v1788
    %v2501 = vpack.c.b16 %v1797, %v1789
    %v2502 = vpack.c.b16 %v1798, %v1790
    %v2503 = vpack.c.b16 %v1799, %v1791
    %v2504 = vpack.c.b16 %v1800, %v1792
    %v2505 = vpack.c.b16 %v1801, %v1793
    %v2506 = vpack.c.b16 %v1810, %v1802
    %v2507 = vpack.c.b16 %v1811, %v1803
    %v2508 = vpack.c.b16 %v1812, %v1804
    %v2509 = vpack.c.b16 %v1813, %v1805
    %v2510 = vpack.c.b16 %v1814, %v1806
    %v2511 = vpack.c.b16 %v1815, %v1807
    %v2512 = vpack.c.b16 %v1816, %v1808
    %v2513 = vpack.c.b16 %v1817, %v1809
    %v2514 = vpack.c.b16 %v1826, %v1818
    %v2515 = vpack.c.b16 %v1827, %v1819
    %v2516 = vpack.c.b16 %v1828, %v1820
    %v2517 = vpack.c.b16 %v1829, %v1821
    %v2518 = vpack.c.b16 %v1830, %v1822
    %v2519 = vpack.c.b16 %v1831, %v1823
    %v2520 = vpack.c.b16 %v1832, %v1824
    %v2521 = vpack.c.b16 %v1833, %v1825
    %v2522 = vpack.c.b16 %v1842, %v1834
    %v2523 = vpack.c.b16 %v1843, %v1835
    %v2524 = vpack.c.b16 %v1844, %v1836
    %v2525 = vpack.c.b16 %v1845, %v1837
    %v2526 = vpack.c.b16 %v1846, %v1838
    %v2527 = vpack.c.b16 %v1847, %v1839
    %v2528 = vpack.c.b16 %v1848, %v1840
    %v2529 = vpack.c.b16 %v1849, %v1841
    %v2530 = vpack.c.b16 %v1858, %v1850
    %v2531 = vpack.c.b16 %v1859, %v1851
    %v2532 = vpack.c.b16 %v1860, %v1852
    %v2533 = vpack.c.b16 %v1861, %v1853
    %v2534 = vpack.c.b16 %v1862, %v1854
    %v2535 = vpack.c.b16 %v1863, %v1855
    %v2536 = vpack.c.b16 %v1864, %v1856
    %v2537 = vpack.c.b16 %v1865, %v1857
    %v2538 = vpack.c.b16 %v1874, %v1866
    %v2539 = vpack.c.b16 %v1875, %v1867
    %v2540 = vpack.c.b16 %v1876, %v1868
    %v2541 = vpack.c.b16 %v1877, %v1869
    %v2542 = vpack.c.b16 %v1878, %v1870
    %v2543 = vpack.c.b16 %v1879, %v1871
    %v2544 = vpack.c.b16 %v1880, %v1872
    %v2545 = vpack.c.b16 %v1881, %v1873
    %v2546 = vpack.c.b16 %v1890, %v1882
    %v2547 = vpack.c.b16 %v1891, %v1883
    %v2548 = vpack.c.b16 %v1892, %v1884
    %v2549 = vpack.c.b16 %v1893, %v1885
    %v2550 = vpack.c.b16 %v1894, %v1886
    %v2551 = vpack.c.b16 %v1895, %v1887
    %v2552 = vpack.c.b16 %v1896, %v1888
    %v2553 = vpack.c.b16 %v1897, %v1889
    %v2554 = vpack.c.b16 %v1906, %v1898
    %v2555 = vpack.c.b16 %v1907, %v1899
    %v2556 = vpack.c.b16 %v1908, %v1900
    %v2557 = vpack.c.b16 %v1909, %v1901
    %v2558 = vpack.c.b16 %v1910, %v1902
    %v2559 = vpack.c.b16 %v1911, %v1903
    %v2560 = vpack.c.b16 %v1912, %v1904
    %v2561 = vpack.c.b16 %v1913, %v1905
    %v2562 = vpack.c.b16 %v1922, %v1914
    %v2563 = vpack.c.b16 %v1923, %v1915
    %v2564 = vpack.c.b16 %v1924, %v1916
    %v2565 = vpack.c.b16 %v1925, %v1917
    %v2566 = vpack.c.b16 %v1926, %v1918
    %v2567 = vpack.c.b16 %v1927, %v1919
    %v2568 = vpack.c.b16 %v1928, %v1920
    %v2569 = vpack.c.b16 %v1929, %v1921
    %v2570 = vpack.c.b16 %v1938, %v1930
    %v2571 = vpack.c.b16 %v1939, %v1931
    %v2572 = vpack.c.b16 %v1940, %v1932
    %v2573 = vpack.c.b16 %v1941, %v1933
    %v2574 = vpack.c.b16 %v1942, %v1934
    %v2575 = vpack.c.b16 %v1943, %v1935
    %v2576 = vpack.c.b16 %v1944, %v1936
    %v2577 = vpack.c.b16 %v1945, %v1937
    %v2578 = vpack.c.b16 %v1954, %v1946
    %v2579 = vpack.c.b16 %v1955, %v1947
    %v2580 = vpack.c.b16 %v1956, %v1948
    %v2581 = vpack.c.b16 %v1957, %v1949
    %v2582 = vpack.c.b16 %v1958, %v1950
    %v2583 = vpack.c.b16 %v1959, %v1951
    %v2584 = vpack.c.b16 %v1960, %v1952
    %v2585 = vpack.c.b16 %v1961, %v1953
    %v2586 = vpack.c.b16 %v1970, %v1962
    %v2587 = vpack.c.b16 %v1971, %v1963
    %v2588 = vpack.c.b16 %v1972, %v1964
    %v2589 = vpack.c.b16 %v1973, %v1965
    %v2590 = vpack.c.b16 %v1974, %v1966
    %v2591 = vpack.c.b16 %v1975, %v1967
    %v2592 = vpack.c.b16 %v1976, %v1968
    %v2593 = vpack.c.b16 %v1977, %v1969
    %v2594 = vpack.c.b16 %v1986, %v1978
    %v2595 = vpack.c.b16 %v1987, %v1979
    %v2596 = vpack.c.b16 %v1988, %v1980
    %v2597 = vpack.c.b16 %v1989, %v1981
    %v2598 = vpack.c.b16 %v1990, %v1982
    %v2599 = vpack.c.b16 %v1991, %v1983
    %v2600 = vpack.c.b16 %v1992, %v1984
    %v2601 = vpack.c.b16 %v1993, %v1985
    %v2602 = vpack.c.b16 %v2002, %v1994
    %v2603 = vpack.c.b16 %v2003, %v1995
    %v2604 = vpack.c.b16 %v2004, %v1996
    %v2605 = vpack.c.b16 %v2005, %v1997
    %v2606 = vpack.c.b16 %v2006, %v1998
    %v2607 = vpack.c.b16 %v2007, %v1999
    %v2608 = vpack.c.b16 %v2008, %v2000
    %v2609 = vpack.c.b16 %v2009, %v2001
    %v2610 = vpack.c.b16 %v2018, %v2010
    %v2611 = vpack.c.b16 %v2019, %v2011
    %v2612 = vpack.c.b16 %v2020, %v2012
    %v2613 = vpack.c.b16 %v2021, %v2013
    %v2614 = vpack.c.b16 %v2022, %v2014
    %v2615 = vpack.c.b16 %v2023, %v2015
    %v2616 = vpack.c.b16 %v2024, %v2016
    %v2617 = vpack.c.b16 %v2025, %v2017
    %v2618 = vpack.c.b16 %v2034, %v2026
    %v2619 = vpack.c.b16 %v2035, %v2027
    %v2620 = vpack.c.b16 %v2036, %v2028
    %v2621 = vpack.c.b16 %v2037, %v2029
    %v2622 = vpack.c.b16 %v2038, %v2030
    %v2623 = vpack.c.b16 %v2039, %v2031
    %v2624 = vpack.c.b16 %v2040, %v2032
    %v2625 = vpack.c.b16 %v2041, %v2033
    %v2626 = vpack.c.b16 %v2050, %v2042
    %v2627 = vpack.c.b16 %v2051, %v2043
    %v2628 = vpack.c.b16 %v2052, %v2044
    %v2629 = vpack.c.b16 %v2053, %v2045
    %v2630 = vpack.c.b16 %v2054, %v2046
    %v2631 = vpack.c.b16 %v2055, %v2047
    %v2632 = vpack.c.b16 %v2056, %v2048
    %v2633 = vpack.c.b16 %v2057, %v2049
    %v2634 = vpack.c.b16 %v2066, %v2058
    %v2635 = vpack.c.b16 %v2067, %v2059
    %v2636 = vpack.c.b16 %v2068, %v2060
    %v2637 = vpack.c.b16 %v2069, %v2061
    %v2638 = vpack.c.b16 %v2070, %v2062
    %v2639 = vpack.c.b16 %v2071, %v2063
    %v2640 = vpack.c.b16 %v2072, %v2064
    %v2641 = vpack.c.b16 %v2073, %v2065
    %v2642 = vpack.c.b16 %v2082, %v2074
    %v2643 = vpack.c.b16 %v2083, %v2075
    %v2644 = vpack.c.b16 %v2084, %v2076
    %v2645 = vpack.c.b16 %v2085, %v2077
    %v2646 = vpack.c.b16 %v2086, %v2078
    %v2647 = vpack.c.b16 %v2087, %v2079
    %v2648 = vpack.c.b16 %v2088, %v2080
    %v2649 = vpack.c.b16 %v2089, %v2081
    %v2650 = vpack.c.b16 %v2098, %v2090
    %v2651 = vpack.c.b16 %v2099, %v2091
    %v2652 = vpack.c.b16 %v2100, %v2092
    %v2653 = vpack.c.b16 %v2101, %v2093
    %v2654 = vpack.c.b16 %v2102, %v2094
    %v2655 = vpack.c.b16 %v2103, %v2095
    %v2656 = vpack.c.b16 %v2104, %v2096
    %v2657 = vpack.c.b16 %v2105, %v2097
    %v2658 = vpack.c.b16 %v2114, %v2106
    %v2659 = vpack.c.b16 %v2115, %v2107
    %v2660 = vpack.c.b16 %v2116, %v2108
    %v2661 = vpack.c.b16 %v2117, %v2109
    %v2662 = vpack.c.b16 %v2118, %v2110
    %v2663 = vpack.c.b16 %v2119, %v2111
    %v2664 = vpack.c.b16 %v2120, %v2112
    %v2665 = vpack.c.b16 %v2121, %v2113
    %v2666 = vpack.c.b16 %v2130, %v2122
    %v2667 = vpack.c.b16 %v2131, %v2123
    %v2668 = vpack.c.b16 %v2132, %v2124
    %v2669 = vpack.c.b16 %v2133, %v2125
    %v2670 = vpack.c.b16 %v2134, %v2126
    %v2671 = vpack.c.b16 %v2135, %v2127
    %v2672 = vpack.c.b16 %v2136, %v2128
    %v2673 = vpack.c.b16 %v2137, %v2129
    %v2674 = vpack.c.b16 %v2146, %v2138
    %v2675 = vpack.c.b16 %v2147, %v2139
    %v2676 = vpack.c.b16 %v2148, %v2140
    %v2677 = vpack.c.b16 %v2149, %v2141
    %v2678 = vpack.c.b16 %v2150, %v2142
    %v2679 = vpack.c.b16 %v2151, %v2143
    %v2680 = vpack.c.b16 %v2152, %v2144
    %v2681 = vpack.c.b16 %v2153, %v2145
    %v2682 = vpack.c.b16 %v2162, %v2154
    %v2683 = vpack.c.b16 %v2163, %v2155
    %v2684 = vpack.c.b16 %v2164, %v2156
    %v2685 = vpack.c.b16 %v2165, %v2157
    %v2686 = vpack.c.b16 %v2166, %v2158
    %v2687 = vpack.c.b16 %v2167, %v2159
    %v2688 = vpack.c.b16 %v2168, %v2160
    %v2689 = vpack.c.b16 %v2169, %v2161
    %v2690 = vpack.c.b16 %v2178, %v2170
    %v2691 = vpack.c.b16 %v2179, %v2171
    %v2692 = vpack.c.b16 %v2180, %v2172
    %v2693 = vpack.c.b16 %v2181, %v2173
    %v2694 = vpack.c.b16 %v2182, %v2174
    %v2695 = vpack.c.b16 %v2183, %v2175
    %v2696 = vpack.c.b16 %v2184, %v2176
    %v2697 = vpack.c.b16 %v2185, %v2177
    %3210 = vmatpush.bf16.msra.mxu0 %v2242
    %3211 = vmatpush.bf16.msra.mxu0 %v2234
    %3212 = vmatpush.bf16.msra.mxu0 %v2226
    %3213 = vmatpush.bf16.msra.mxu0 %v2218
    %3214 = vmatpush.bf16.msra.mxu0 %v2210
    %3215 = vmatpush.bf16.msra.mxu0 %v2202
    %3216 = vmatpush.bf16.msra.mxu0 %v2194
    %3217 = vmatpush.bf16.msra.mxu0 %v2186
    %3218 = vmatmul.bf16.gmra.mxu0 %v618
    %v3219 = vpop.f32.mrf.mxu0
    %v3220 = vadd.f32 %v554, %v3219
    %v3221 = vpop.f32.mrf.mxu0
    %v3222 = vadd.f32 %v554, %v3221
    %3223 = vmatmul.bf16.gmra.mxu0 %v626
    %v3224 = vpop.f32.mrf.mxu0
    %v3225 = vadd.f32 %v554, %v3224
    %v3226 = vpop.f32.mrf.mxu0
    %v3227 = vadd.f32 %v554, %v3226
    %3228 = vdwg.mxu0
    %3229 = vmatpush.bf16.msra.mxu0 %v2306
    %3230 = vmatpush.bf16.msra.mxu0 %v2298
    %3231 = vmatpush.bf16.msra.mxu0 %v2290
    %3232 = vmatpush.bf16.msra.mxu0 %v2282
    %3233 = vmatpush.bf16.msra.mxu0 %v2274
    %3234 = vmatpush.bf16.msra.mxu0 %v2266
    %3235 = vmatpush.bf16.msra.mxu0 %v2258
    %3236 = vmatpush.bf16.msra.mxu0 %v2250
    %3237 = vmatmul.bf16.gmra.mxu0 %v619
    %v3238 = vpop.f32.mrf.mxu0
    %v3239 = vadd.f32 %v3220, %v3238
    %v3240 = vpop.f32.mrf.mxu0
    %v3241 = vadd.f32 %v3222, %v3240
    %3242 = vmatmul.bf16.gmra.mxu0 %v627
    %v3243 = vpop.f32.mrf.mxu0
    %v3244 = vadd.f32 %v3225, %v3243
    %v3245 = vpop.f32.mrf.mxu0
    %v3246 = vadd.f32 %v3227, %v3245
    %3247 = vdwg.mxu0
    %3248 = vmatpush.bf16.msra.mxu0 %v2370
    %3249 = vmatpush.bf16.msra.mxu0 %v2362
    %3250 = vmatpush.bf16.msra.mxu0 %v2354
    %3251 = vmatpush.bf16.msra.mxu0 %v2346
    %3252 = vmatpush.bf16.msra.mxu0 %v2338
    %3253 = vmatpush.bf16.msra.mxu0 %v2330
    %3254 = vmatpush.bf16.msra.mxu0 %v2322
    %3255 = vmatpush.bf16.msra.mxu0 %v2314
    %3256 = vmatmul.bf16.gmra.mxu0 %v620
    %v3257 = vpop.f32.mrf.mxu0
    %v3258 = vadd.f32 %v3239, %v3257
    %v3259 = vpop.f32.mrf.mxu0
    %v3260 = vadd.f32 %v3241, %v3259
    %3261 = vmatmul.bf16.gmra.mxu0 %v628
    %v3262 = vpop.f32.mrf.mxu0
    %v3263 = vadd.f32 %v3244, %v3262
    %v3264 = vpop.f32.mrf.mxu0
    %v3265 = vadd.f32 %v3246, %v3264
    %3266 = vdwg.mxu0
    %3267 = vmatpush.bf16.msra.mxu0 %v2434
    %3268 = vmatpush.bf16.msra.mxu0 %v2426
    %3269 = vmatpush.bf16.msra.mxu0 %v2418
    %3270 = vmatpush.bf16.msra.mxu0 %v2410
    %3271 = vmatpush.bf16.msra.mxu0 %v2402
    %3272 = vmatpush.bf16.msra.mxu0 %v2394
    %3273 = vmatpush.bf16.msra.mxu0 %v2386
    %3274 = vmatpush.bf16.msra.mxu0 %v2378
    %3275 = vmatmul.bf16.gmra.mxu0 %v621
    %v3276 = vpop.f32.mrf.mxu0
    %v3277 = vadd.f32 %v3258, %v3276
    %v3278 = vpop.f32.mrf.mxu0
    %v3279 = vadd.f32 %v3260, %v3278
    %3280 = vmatmul.bf16.gmra.mxu0 %v629
    %v3281 = vpop.f32.mrf.mxu0
    %v3282 = vadd.f32 %v3263, %v3281
    %v3283 = vpop.f32.mrf.mxu0
    %v3284 = vadd.f32 %v3265, %v3283
    %3285 = vdwg.mxu0
    %3286 = vmatpush.bf16.msra.mxu0 %v2498
    %3287 = vmatpush.bf16.msra.mxu0 %v2490
    %3288 = vmatpush.bf16.msra.mxu0 %v2482
    %3289 = vmatpush.bf16.msra.mxu0 %v2474
    %3290 = vmatpush.bf16.msra.mxu0 %v2466
    %3291 = vmatpush.bf16.msra.mxu0 %v2458
    %3292 = vmatpush.bf16.msra.mxu0 %v2450
    %3293 = vmatpush.bf16.msra.mxu0 %v2442
    %3294 = vmatmul.bf16.gmra.mxu0 %v622
    %v3295 = vpop.f32.mrf.mxu0
    %v3296 = vadd.f32 %v3277, %v3295
    %v3297 = vpop.f32.mrf.mxu0
    %v3298 = vadd.f32 %v3279, %v3297
    %3299 = vmatmul.bf16.gmra.mxu0 %v630
    %v3300 = vpop.f32.mrf.mxu0
    %v3301 = vadd.f32 %v3282, %v3300
    %v3302 = vpop.f32.mrf.mxu0
    %v3303 = vadd.f32 %v3284, %v3302
    %3304 = vdwg.mxu0
    %3305 = vmatpush.bf16.msra.mxu0 %v2562
    %3306 = vmatpush.bf16.msra.mxu0 %v2554
    %3307 = vmatpush.bf16.msra.mxu0 %v2546
    %3308 = vmatpush.bf16.msra.mxu0 %v2538
    %3309 = vmatpush.bf16.msra.mxu0 %v2530
    %3310 = vmatpush.bf16.msra.mxu0 %v2522
    %3311 = vmatpush.bf16.msra.mxu0 %v2514
    %3312 = vmatpush.bf16.msra.mxu0 %v2506
    %3313 = vmatmul.bf16.gmra.mxu0 %v623
    %v3314 = vpop.f32.mrf.mxu0
    %v3315 = vadd.f32 %v3296, %v3314
    %v3316 = vpop.f32.mrf.mxu0
    %v3317 = vadd.f32 %v3298, %v3316
    %3318 = vmatmul.bf16.gmra.mxu0 %v631
    %v3319 = vpop.f32.mrf.mxu0
    %v3320 = vadd.f32 %v3301, %v3319
    %v3321 = vpop.f32.mrf.mxu0
    %v3322 = vadd.f32 %v3303, %v3321
    %3323 = vdwg.mxu0
    %3324 = vmatpush.bf16.msra.mxu0 %v2626
    %3325 = vmatpush.bf16.msra.mxu0 %v2618
    %3326 = vmatpush.bf16.msra.mxu0 %v2610
    %3327 = vmatpush.bf16.msra.mxu0 %v2602
    %3328 = vmatpush.bf16.msra.mxu0 %v2594
    %3329 = vmatpush.bf16.msra.mxu0 %v2586
    %3330 = vmatpush.bf16.msra.mxu0 %v2578
    %3331 = vmatpush.bf16.msra.mxu0 %v2570
    %3332 = vmatmul.bf16.gmra.mxu0 %v624
    %v3333 = vpop.f32.mrf.mxu0
    %v3334 = vadd.f32 %v3315, %v3333
    %v3335 = vpop.f32.mrf.mxu0
    %v3336 = vadd.f32 %v3317, %v3335
    %3337 = vmatmul.bf16.gmra.mxu0 %v632
    %v3338 = vpop.f32.mrf.mxu0
    %v3339 = vadd.f32 %v3320, %v3338
    %v3340 = vpop.f32.mrf.mxu0
    %v3341 = vadd.f32 %v3322, %v3340
    %3342 = vdwg.mxu0
    %3343 = vmatpush.bf16.msra.mxu0 %v2690
    %3344 = vmatpush.bf16.msra.mxu0 %v2682
    %3345 = vmatpush.bf16.msra.mxu0 %v2674
    %3346 = vmatpush.bf16.msra.mxu0 %v2666
    %3347 = vmatpush.bf16.msra.mxu0 %v2658
    %3348 = vmatpush.bf16.msra.mxu0 %v2650
    %3349 = vmatpush.bf16.msra.mxu0 %v2642
    %3350 = vmatpush.bf16.msra.mxu0 %v2634
    %3351 = vmatmul.bf16.gmra.mxu0 %v625
    %v3352 = vpop.f32.mrf.mxu0
    %v3353 = vadd.f32 %v3334, %v3352
    %v3354 = vpop.f32.mrf.mxu0
    %v3355 = vadd.f32 %v3336, %v3354
    %3356 = vmatmul.bf16.gmra.mxu0 %v633
    %v3357 = vpop.f32.mrf.mxu0
    %v3358 = vadd.f32 %v3339, %v3357
    %v3359 = vpop.f32.mrf.mxu0
    %v3360 = vadd.f32 %v3341, %v3359
    %3361 = vdwg.mxu0
    %3362 = vmatpush.bf16.msra.mxu0 %v2243
    %3363 = vmatpush.bf16.msra.mxu0 %v2235
    %3364 = vmatpush.bf16.msra.mxu0 %v2227
    %3365 = vmatpush.bf16.msra.mxu0 %v2219
    %3366 = vmatpush.bf16.msra.mxu0 %v2211
    %3367 = vmatpush.bf16.msra.mxu0 %v2203
    %3368 = vmatpush.bf16.msra.mxu0 %v2195
    %3369 = vmatpush.bf16.msra.mxu0 %v2187
    %3370 = vmatmul.bf16.gmra.mxu0 %v618
    %v3371 = vpop.f32.mrf.mxu0
    %v3372 = vadd.f32 %v555, %v3371
    %v3373 = vpop.f32.mrf.mxu0
    %v3374 = vadd.f32 %v555, %v3373
    %3375 = vmatmul.bf16.gmra.mxu0 %v626
    %v3376 = vpop.f32.mrf.mxu0
    %v3377 = vadd.f32 %v555, %v3376
    %v3378 = vpop.f32.mrf.mxu0
    %v3379 = vadd.f32 %v555, %v3378
    %3380 = vdwg.mxu0
    %3381 = vmatpush.bf16.msra.mxu0 %v2307
    %3382 = vmatpush.bf16.msra.mxu0 %v2299
    %3383 = vmatpush.bf16.msra.mxu0 %v2291
    %3384 = vmatpush.bf16.msra.mxu0 %v2283
    %3385 = vmatpush.bf16.msra.mxu0 %v2275
    %3386 = vmatpush.bf16.msra.mxu0 %v2267
    %3387 = vmatpush.bf16.msra.mxu0 %v2259
    %3388 = vmatpush.bf16.msra.mxu0 %v2251
    %3389 = vmatmul.bf16.gmra.mxu0 %v619
    %v3390 = vpop.f32.mrf.mxu0
    %v3391 = vadd.f32 %v3372, %v3390
    %v3392 = vpop.f32.mrf.mxu0
    %v3393 = vadd.f32 %v3374, %v3392
    %3394 = vmatmul.bf16.gmra.mxu0 %v627
    %v3395 = vpop.f32.mrf.mxu0
    %v3396 = vadd.f32 %v3377, %v3395
    %v3397 = vpop.f32.mrf.mxu0
    %v3398 = vadd.f32 %v3379, %v3397
    %3399 = vdwg.mxu0
    %3400 = vmatpush.bf16.msra.mxu0 %v2371
    %3401 = vmatpush.bf16.msra.mxu0 %v2363
    %3402 = vmatpush.bf16.msra.mxu0 %v2355
    %3403 = vmatpush.bf16.msra.mxu0 %v2347
    %3404 = vmatpush.bf16.msra.mxu0 %v2339
    %3405 = vmatpush.bf16.msra.mxu0 %v2331
    %3406 = vmatpush.bf16.msra.mxu0 %v2323
    %3407 = vmatpush.bf16.msra.mxu0 %v2315
    %3408 = vmatmul.bf16.gmra.mxu0 %v620
    %v3409 = vpop.f32.mrf.mxu0
    %v3410 = vadd.f32 %v3391, %v3409
    %v3411 = vpop.f32.mrf.mxu0
    %v3412 = vadd.f32 %v3393, %v3411
    %3413 = vmatmul.bf16.gmra.mxu0 %v628
    %v3414 = vpop.f32.mrf.mxu0
    %v3415 = vadd.f32 %v3396, %v3414
    %v3416 = vpop.f32.mrf.mxu0
    %v3417 = vadd.f32 %v3398, %v3416
    %3418 = vdwg.mxu0
    %3419 = vmatpush.bf16.msra.mxu0 %v2435
    %3420 = vmatpush.bf16.msra.mxu0 %v2427
    %3421 = vmatpush.bf16.msra.mxu0 %v2419
    %3422 = vmatpush.bf16.msra.mxu0 %v2411
    %3423 = vmatpush.bf16.msra.mxu0 %v2403
    %3424 = vmatpush.bf16.msra.mxu0 %v2395
    %3425 = vmatpush.bf16.msra.mxu0 %v2387
    %3426 = vmatpush.bf16.msra.mxu0 %v2379
    %3427 = vmatmul.bf16.gmra.mxu0 %v621
    %v3428 = vpop.f32.mrf.mxu0
    %v3429 = vadd.f32 %v3410, %v3428
    %v3430 = vpop.f32.mrf.mxu0
    %v3431 = vadd.f32 %v3412, %v3430
    %3432 = vmatmul.bf16.gmra.mxu0 %v629
    %v3433 = vpop.f32.mrf.mxu0
    %v3434 = vadd.f32 %v3415, %v3433
    %v3435 = vpop.f32.mrf.mxu0
    %v3436 = vadd.f32 %v3417, %v3435
    %3437 = vdwg.mxu0
    %3438 = vmatpush.bf16.msra.mxu0 %v2499
    %3439 = vmatpush.bf16.msra.mxu0 %v2491
    %3440 = vmatpush.bf16.msra.mxu0 %v2483
    %3441 = vmatpush.bf16.msra.mxu0 %v2475
    %3442 = vmatpush.bf16.msra.mxu0 %v2467
    %3443 = vmatpush.bf16.msra.mxu0 %v2459
    %3444 = vmatpush.bf16.msra.mxu0 %v2451
    %3445 = vmatpush.bf16.msra.mxu0 %v2443
    %3446 = vmatmul.bf16.gmra.mxu0 %v622
    %v3447 = vpop.f32.mrf.mxu0
    %v3448 = vadd.f32 %v3429, %v3447
    %v3449 = vpop.f32.mrf.mxu0
    %v3450 = vadd.f32 %v3431, %v3449
    %3451 = vmatmul.bf16.gmra.mxu0 %v630
    %v3452 = vpop.f32.mrf.mxu0
    %v3453 = vadd.f32 %v3434, %v3452
    %v3454 = vpop.f32.mrf.mxu0
    %v3455 = vadd.f32 %v3436, %v3454
    %3456 = vdwg.mxu0
    %3457 = vmatpush.bf16.msra.mxu0 %v2563
    %3458 = vmatpush.bf16.msra.mxu0 %v2555
    %3459 = vmatpush.bf16.msra.mxu0 %v2547
    %3460 = vmatpush.bf16.msra.mxu0 %v2539
    %3461 = vmatpush.bf16.msra.mxu0 %v2531
    %3462 = vmatpush.bf16.msra.mxu0 %v2523
    %3463 = vmatpush.bf16.msra.mxu0 %v2515
    %3464 = vmatpush.bf16.msra.mxu0 %v2507
    %3465 = vmatmul.bf16.gmra.mxu0 %v623
    %v3466 = vpop.f32.mrf.mxu0
    %v3467 = vadd.f32 %v3448, %v3466
    %v3468 = vpop.f32.mrf.mxu0
    %v3469 = vadd.f32 %v3450, %v3468
    %3470 = vmatmul.bf16.gmra.mxu0 %v631
    %v3471 = vpop.f32.mrf.mxu0
    %v3472 = vadd.f32 %v3453, %v3471
    %v3473 = vpop.f32.mrf.mxu0
    %v3474 = vadd.f32 %v3455, %v3473
    %3475 = vdwg.mxu0
    %3476 = vmatpush.bf16.msra.mxu0 %v2627
    %3477 = vmatpush.bf16.msra.mxu0 %v2619
    %3478 = vmatpush.bf16.msra.mxu0 %v2611
    %3479 = vmatpush.bf16.msra.mxu0 %v2603
    %3480 = vmatpush.bf16.msra.mxu0 %v2595
    %3481 = vmatpush.bf16.msra.mxu0 %v2587
    %3482 = vmatpush.bf16.msra.mxu0 %v2579
    %3483 = vmatpush.bf16.msra.mxu0 %v2571
    %3484 = vmatmul.bf16.gmra.mxu0 %v624
    %v3485 = vpop.f32.mrf.mxu0
    %v3486 = vadd.f32 %v3467, %v3485
    %v3487 = vpop.f32.mrf.mxu0
    %v3488 = vadd.f32 %v3469, %v3487
    %3489 = vmatmul.bf16.gmra.mxu0 %v632
    %v3490 = vpop.f32.mrf.mxu0
    %v3491 = vadd.f32 %v3472, %v3490
    %v3492 = vpop.f32.mrf.mxu0
    %v3493 = vadd.f32 %v3474, %v3492
    %3494 = vdwg.mxu0
    %3495 = vmatpush.bf16.msra.mxu0 %v2691
    %3496 = vmatpush.bf16.msra.mxu0 %v2683
    %3497 = vmatpush.bf16.msra.mxu0 %v2675
    %3498 = vmatpush.bf16.msra.mxu0 %v2667
    %3499 = vmatpush.bf16.msra.mxu0 %v2659
    %3500 = vmatpush.bf16.msra.mxu0 %v2651
    %3501 = vmatpush.bf16.msra.mxu0 %v2643
    %3502 = vmatpush.bf16.msra.mxu0 %v2635
    %3503 = vmatmul.bf16.gmra.mxu0 %v625
    %v3504 = vpop.f32.mrf.mxu0
    %v3505 = vadd.f32 %v3486, %v3504
    %v3506 = vpop.f32.mrf.mxu0
    %v3507 = vadd.f32 %v3488, %v3506
    %3508 = vmatmul.bf16.gmra.mxu0 %v633
    %v3509 = vpop.f32.mrf.mxu0
    %v3510 = vadd.f32 %v3491, %v3509
    %v3511 = vpop.f32.mrf.mxu0
    %v3512 = vadd.f32 %v3493, %v3511
    %3513 = vdwg.mxu0
    %3514 = vmatpush.bf16.msra.mxu0 %v2244
    %3515 = vmatpush.bf16.msra.mxu0 %v2236
    %3516 = vmatpush.bf16.msra.mxu0 %v2228
    %3517 = vmatpush.bf16.msra.mxu0 %v2220
    %3518 = vmatpush.bf16.msra.mxu0 %v2212
    %3519 = vmatpush.bf16.msra.mxu0 %v2204
    %3520 = vmatpush.bf16.msra.mxu0 %v2196
    %3521 = vmatpush.bf16.msra.mxu0 %v2188
    %3522 = vmatmul.bf16.gmra.mxu0 %v618
    %v3523 = vpop.f32.mrf.mxu0
    %v3524 = vadd.f32 %v556, %v3523
    %v3525 = vpop.f32.mrf.mxu0
    %v3526 = vadd.f32 %v556, %v3525
    %3527 = vmatmul.bf16.gmra.mxu0 %v626
    %v3528 = vpop.f32.mrf.mxu0
    %v3529 = vadd.f32 %v556, %v3528
    %v3530 = vpop.f32.mrf.mxu0
    %v3531 = vadd.f32 %v556, %v3530
    %3532 = vdwg.mxu0
    %3533 = vmatpush.bf16.msra.mxu0 %v2308
    %3534 = vmatpush.bf16.msra.mxu0 %v2300
    %3535 = vmatpush.bf16.msra.mxu0 %v2292
    %3536 = vmatpush.bf16.msra.mxu0 %v2284
    %3537 = vmatpush.bf16.msra.mxu0 %v2276
    %3538 = vmatpush.bf16.msra.mxu0 %v2268
    %3539 = vmatpush.bf16.msra.mxu0 %v2260
    %3540 = vmatpush.bf16.msra.mxu0 %v2252
    %3541 = vmatmul.bf16.gmra.mxu0 %v619
    %v3542 = vpop.f32.mrf.mxu0
    %v3543 = vadd.f32 %v3524, %v3542
    %v3544 = vpop.f32.mrf.mxu0
    %v3545 = vadd.f32 %v3526, %v3544
    %3546 = vmatmul.bf16.gmra.mxu0 %v627
    %v3547 = vpop.f32.mrf.mxu0
    %v3548 = vadd.f32 %v3529, %v3547
    %v3549 = vpop.f32.mrf.mxu0
    %v3550 = vadd.f32 %v3531, %v3549
    %3551 = vdwg.mxu0
    %3552 = vmatpush.bf16.msra.mxu0 %v2372
    %3553 = vmatpush.bf16.msra.mxu0 %v2364
    %3554 = vmatpush.bf16.msra.mxu0 %v2356
    %3555 = vmatpush.bf16.msra.mxu0 %v2348
    %3556 = vmatpush.bf16.msra.mxu0 %v2340
    %3557 = vmatpush.bf16.msra.mxu0 %v2332
    %3558 = vmatpush.bf16.msra.mxu0 %v2324
    %3559 = vmatpush.bf16.msra.mxu0 %v2316
    %3560 = vmatmul.bf16.gmra.mxu0 %v620
    %v3561 = vpop.f32.mrf.mxu0
    %v3562 = vadd.f32 %v3543, %v3561
    %v3563 = vpop.f32.mrf.mxu0
    %v3564 = vadd.f32 %v3545, %v3563
    %3565 = vmatmul.bf16.gmra.mxu0 %v628
    %v3566 = vpop.f32.mrf.mxu0
    %v3567 = vadd.f32 %v3548, %v3566
    %v3568 = vpop.f32.mrf.mxu0
    %v3569 = vadd.f32 %v3550, %v3568
    %3570 = vdwg.mxu0
    %3571 = vmatpush.bf16.msra.mxu0 %v2436
    %3572 = vmatpush.bf16.msra.mxu0 %v2428
    %3573 = vmatpush.bf16.msra.mxu0 %v2420
    %3574 = vmatpush.bf16.msra.mxu0 %v2412
    %3575 = vmatpush.bf16.msra.mxu0 %v2404
    %3576 = vmatpush.bf16.msra.mxu0 %v2396
    %3577 = vmatpush.bf16.msra.mxu0 %v2388
    %3578 = vmatpush.bf16.msra.mxu0 %v2380
    %3579 = vmatmul.bf16.gmra.mxu0 %v621
    %v3580 = vpop.f32.mrf.mxu0
    %v3581 = vadd.f32 %v3562, %v3580
    %v3582 = vpop.f32.mrf.mxu0
    %v3583 = vadd.f32 %v3564, %v3582
    %3584 = vmatmul.bf16.gmra.mxu0 %v629
    %v3585 = vpop.f32.mrf.mxu0
    %v3586 = vadd.f32 %v3567, %v3585
    %v3587 = vpop.f32.mrf.mxu0
    %v3588 = vadd.f32 %v3569, %v3587
    %3589 = vdwg.mxu0
    %3590 = vmatpush.bf16.msra.mxu0 %v2500
    %3591 = vmatpush.bf16.msra.mxu0 %v2492
    %3592 = vmatpush.bf16.msra.mxu0 %v2484
    %3593 = vmatpush.bf16.msra.mxu0 %v2476
    %3594 = vmatpush.bf16.msra.mxu0 %v2468
    %3595 = vmatpush.bf16.msra.mxu0 %v2460
    %3596 = vmatpush.bf16.msra.mxu0 %v2452
    %3597 = vmatpush.bf16.msra.mxu0 %v2444
    %3598 = vmatmul.bf16.gmra.mxu0 %v622
    %v3599 = vpop.f32.mrf.mxu0
    %v3600 = vadd.f32 %v3581, %v3599
    %v3601 = vpop.f32.mrf.mxu0
    %v3602 = vadd.f32 %v3583, %v3601
    %3603 = vmatmul.bf16.gmra.mxu0 %v630
    %v3604 = vpop.f32.mrf.mxu0
    %v3605 = vadd.f32 %v3586, %v3604
    %v3606 = vpop.f32.mrf.mxu0
    %v3607 = vadd.f32 %v3588, %v3606
    %3608 = vdwg.mxu0
    %3609 = vmatpush.bf16.msra.mxu0 %v2564
    %3610 = vmatpush.bf16.msra.mxu0 %v2556
    %3611 = vmatpush.bf16.msra.mxu0 %v2548
    %3612 = vmatpush.bf16.msra.mxu0 %v2540
    %3613 = vmatpush.bf16.msra.mxu0 %v2532
    %3614 = vmatpush.bf16.msra.mxu0 %v2524
    %3615 = vmatpush.bf16.msra.mxu0 %v2516
    %3616 = vmatpush.bf16.msra.mxu0 %v2508
    %3617 = vmatmul.bf16.gmra.mxu0 %v623
    %v3618 = vpop.f32.mrf.mxu0
    %v3619 = vadd.f32 %v3600, %v3618
    %v3620 = vpop.f32.mrf.mxu0
    %v3621 = vadd.f32 %v3602, %v3620
    %3622 = vmatmul.bf16.gmra.mxu0 %v631
    %v3623 = vpop.f32.mrf.mxu0
    %v3624 = vadd.f32 %v3605, %v3623
    %v3625 = vpop.f32.mrf.mxu0
    %v3626 = vadd.f32 %v3607, %v3625
    %3627 = vdwg.mxu0
    %3628 = vmatpush.bf16.msra.mxu0 %v2628
    %3629 = vmatpush.bf16.msra.mxu0 %v2620
    %3630 = vmatpush.bf16.msra.mxu0 %v2612
    %3631 = vmatpush.bf16.msra.mxu0 %v2604
    %3632 = vmatpush.bf16.msra.mxu0 %v2596
    %3633 = vmatpush.bf16.msra.mxu0 %v2588
    %3634 = vmatpush.bf16.msra.mxu0 %v2580
    %3635 = vmatpush.bf16.msra.mxu0 %v2572
    %3636 = vmatmul.bf16.gmra.mxu0 %v624
    %v3637 = vpop.f32.mrf.mxu0
    %v3638 = vadd.f32 %v3619, %v3637
    %v3639 = vpop.f32.mrf.mxu0
    %v3640 = vadd.f32 %v3621, %v3639
    %3641 = vmatmul.bf16.gmra.mxu0 %v632
    %v3642 = vpop.f32.mrf.mxu0
    %v3643 = vadd.f32 %v3624, %v3642
    %v3644 = vpop.f32.mrf.mxu0
    %v3645 = vadd.f32 %v3626, %v3644
    %3646 = vdwg.mxu0
    %3647 = vmatpush.bf16.msra.mxu0 %v2692
    %3648 = vmatpush.bf16.msra.mxu0 %v2684
    %3649 = vmatpush.bf16.msra.mxu0 %v2676
    %3650 = vmatpush.bf16.msra.mxu0 %v2668
    %3651 = vmatpush.bf16.msra.mxu0 %v2660
    %3652 = vmatpush.bf16.msra.mxu0 %v2652
    %3653 = vmatpush.bf16.msra.mxu0 %v2644
    %3654 = vmatpush.bf16.msra.mxu0 %v2636
    %3655 = vmatmul.bf16.gmra.mxu0 %v625
    %v3656 = vpop.f32.mrf.mxu0
    %v3657 = vadd.f32 %v3638, %v3656
    %v3658 = vpop.f32.mrf.mxu0
    %v3659 = vadd.f32 %v3640, %v3658
    %3660 = vmatmul.bf16.gmra.mxu0 %v633
    %v3661 = vpop.f32.mrf.mxu0
    %v3662 = vadd.f32 %v3643, %v3661
    %v3663 = vpop.f32.mrf.mxu0
    %v3664 = vadd.f32 %v3645, %v3663
    %3665 = vdwg.mxu0
    %3666 = vmatpush.bf16.msra.mxu0 %v2245
    %3667 = vmatpush.bf16.msra.mxu0 %v2237
    %3668 = vmatpush.bf16.msra.mxu0 %v2229
    %3669 = vmatpush.bf16.msra.mxu0 %v2221
    %3670 = vmatpush.bf16.msra.mxu0 %v2213
    %3671 = vmatpush.bf16.msra.mxu0 %v2205
    %3672 = vmatpush.bf16.msra.mxu0 %v2197
    %3673 = vmatpush.bf16.msra.mxu0 %v2189
    %3674 = vmatmul.bf16.gmra.mxu0 %v618
    %v3675 = vpop.f32.mrf.mxu0
    %v3676 = vadd.f32 %v557, %v3675
    %v3677 = vpop.f32.mrf.mxu0
    %v3678 = vadd.f32 %v557, %v3677
    %3679 = vmatmul.bf16.gmra.mxu0 %v626
    %v3680 = vpop.f32.mrf.mxu0
    %v3681 = vadd.f32 %v557, %v3680
    %v3682 = vpop.f32.mrf.mxu0
    %v3683 = vadd.f32 %v557, %v3682
    %3684 = vdwg.mxu0
    %3685 = vmatpush.bf16.msra.mxu0 %v2309
    %3686 = vmatpush.bf16.msra.mxu0 %v2301
    %3687 = vmatpush.bf16.msra.mxu0 %v2293
    %3688 = vmatpush.bf16.msra.mxu0 %v2285
    %3689 = vmatpush.bf16.msra.mxu0 %v2277
    %3690 = vmatpush.bf16.msra.mxu0 %v2269
    %3691 = vmatpush.bf16.msra.mxu0 %v2261
    %3692 = vmatpush.bf16.msra.mxu0 %v2253
    %3693 = vmatmul.bf16.gmra.mxu0 %v619
    %v3694 = vpop.f32.mrf.mxu0
    %v3695 = vadd.f32 %v3676, %v3694
    %v3696 = vpop.f32.mrf.mxu0
    %v3697 = vadd.f32 %v3678, %v3696
    %3698 = vmatmul.bf16.gmra.mxu0 %v627
    %v3699 = vpop.f32.mrf.mxu0
    %v3700 = vadd.f32 %v3681, %v3699
    %v3701 = vpop.f32.mrf.mxu0
    %v3702 = vadd.f32 %v3683, %v3701
    %3703 = vdwg.mxu0
    %3704 = vmatpush.bf16.msra.mxu0 %v2373
    %3705 = vmatpush.bf16.msra.mxu0 %v2365
    %3706 = vmatpush.bf16.msra.mxu0 %v2357
    %3707 = vmatpush.bf16.msra.mxu0 %v2349
    %3708 = vmatpush.bf16.msra.mxu0 %v2341
    %3709 = vmatpush.bf16.msra.mxu0 %v2333
    %3710 = vmatpush.bf16.msra.mxu0 %v2325
    %3711 = vmatpush.bf16.msra.mxu0 %v2317
    %3712 = vmatmul.bf16.gmra.mxu0 %v620
    %v3713 = vpop.f32.mrf.mxu0
    %v3714 = vadd.f32 %v3695, %v3713
    %v3715 = vpop.f32.mrf.mxu0
    %v3716 = vadd.f32 %v3697, %v3715
    %3717 = vmatmul.bf16.gmra.mxu0 %v628
    %v3718 = vpop.f32.mrf.mxu0
    %v3719 = vadd.f32 %v3700, %v3718
    %v3720 = vpop.f32.mrf.mxu0
    %v3721 = vadd.f32 %v3702, %v3720
    %3722 = vdwg.mxu0
    %3723 = vmatpush.bf16.msra.mxu0 %v2437
    %3724 = vmatpush.bf16.msra.mxu0 %v2429
    %3725 = vmatpush.bf16.msra.mxu0 %v2421
    %3726 = vmatpush.bf16.msra.mxu0 %v2413
    %3727 = vmatpush.bf16.msra.mxu0 %v2405
    %3728 = vmatpush.bf16.msra.mxu0 %v2397
    %3729 = vmatpush.bf16.msra.mxu0 %v2389
    %3730 = vmatpush.bf16.msra.mxu0 %v2381
    %3731 = vmatmul.bf16.gmra.mxu0 %v621
    %v3732 = vpop.f32.mrf.mxu0
    %v3733 = vadd.f32 %v3714, %v3732
    %v3734 = vpop.f32.mrf.mxu0
    %v3735 = vadd.f32 %v3716, %v3734
    %3736 = vmatmul.bf16.gmra.mxu0 %v629
    %v3737 = vpop.f32.mrf.mxu0
    %v3738 = vadd.f32 %v3719, %v3737
    %v3739 = vpop.f32.mrf.mxu0
    %v3740 = vadd.f32 %v3721, %v3739
    %3741 = vdwg.mxu0
    %3742 = vmatpush.bf16.msra.mxu0 %v2501
    %3743 = vmatpush.bf16.msra.mxu0 %v2493
    %3744 = vmatpush.bf16.msra.mxu0 %v2485
    %3745 = vmatpush.bf16.msra.mxu0 %v2477
    %3746 = vmatpush.bf16.msra.mxu0 %v2469
    %3747 = vmatpush.bf16.msra.mxu0 %v2461
    %3748 = vmatpush.bf16.msra.mxu0 %v2453
    %3749 = vmatpush.bf16.msra.mxu0 %v2445
    %3750 = vmatmul.bf16.gmra.mxu0 %v622
    %v3751 = vpop.f32.mrf.mxu0
    %v3752 = vadd.f32 %v3733, %v3751
    %v3753 = vpop.f32.mrf.mxu0
    %v3754 = vadd.f32 %v3735, %v3753
    %3755 = vmatmul.bf16.gmra.mxu0 %v630
    %v3756 = vpop.f32.mrf.mxu0
    %v3757 = vadd.f32 %v3738, %v3756
    %v3758 = vpop.f32.mrf.mxu0
    %v3759 = vadd.f32 %v3740, %v3758
    %3760 = vdwg.mxu0
    %3761 = vmatpush.bf16.msra.mxu0 %v2565
    %3762 = vmatpush.bf16.msra.mxu0 %v2557
    %3763 = vmatpush.bf16.msra.mxu0 %v2549
    %3764 = vmatpush.bf16.msra.mxu0 %v2541
    %3765 = vmatpush.bf16.msra.mxu0 %v2533
    %3766 = vmatpush.bf16.msra.mxu0 %v2525
    %3767 = vmatpush.bf16.msra.mxu0 %v2517
    %3768 = vmatpush.bf16.msra.mxu0 %v2509
    %3769 = vmatmul.bf16.gmra.mxu0 %v623
    %v3770 = vpop.f32.mrf.mxu0
    %v3771 = vadd.f32 %v3752, %v3770
    %v3772 = vpop.f32.mrf.mxu0
    %v3773 = vadd.f32 %v3754, %v3772
    %3774 = vmatmul.bf16.gmra.mxu0 %v631
    %v3775 = vpop.f32.mrf.mxu0
    %v3776 = vadd.f32 %v3757, %v3775
    %v3777 = vpop.f32.mrf.mxu0
    %v3778 = vadd.f32 %v3759, %v3777
    %3779 = vdwg.mxu0
    %3780 = vmatpush.bf16.msra.mxu0 %v2629
    %3781 = vmatpush.bf16.msra.mxu0 %v2621
    %3782 = vmatpush.bf16.msra.mxu0 %v2613
    %3783 = vmatpush.bf16.msra.mxu0 %v2605
    %3784 = vmatpush.bf16.msra.mxu0 %v2597
    %3785 = vmatpush.bf16.msra.mxu0 %v2589
    %3786 = vmatpush.bf16.msra.mxu0 %v2581
    %3787 = vmatpush.bf16.msra.mxu0 %v2573
    %3788 = vmatmul.bf16.gmra.mxu0 %v624
    %v3789 = vpop.f32.mrf.mxu0
    %v3790 = vadd.f32 %v3771, %v3789
    %v3791 = vpop.f32.mrf.mxu0
    %v3792 = vadd.f32 %v3773, %v3791
    %3793 = vmatmul.bf16.gmra.mxu0 %v632
    %v3794 = vpop.f32.mrf.mxu0
    %v3795 = vadd.f32 %v3776, %v3794
    %v3796 = vpop.f32.mrf.mxu0
    %v3797 = vadd.f32 %v3778, %v3796
    %3798 = vdwg.mxu0
    %3799 = vmatpush.bf16.msra.mxu0 %v2693
    %3800 = vmatpush.bf16.msra.mxu0 %v2685
    %3801 = vmatpush.bf16.msra.mxu0 %v2677
    %3802 = vmatpush.bf16.msra.mxu0 %v2669
    %3803 = vmatpush.bf16.msra.mxu0 %v2661
    %3804 = vmatpush.bf16.msra.mxu0 %v2653
    %3805 = vmatpush.bf16.msra.mxu0 %v2645
    %3806 = vmatpush.bf16.msra.mxu0 %v2637
    %3807 = vmatmul.bf16.gmra.mxu0 %v625
    %v3808 = vpop.f32.mrf.mxu0
    %v3809 = vadd.f32 %v3790, %v3808
    %v3810 = vpop.f32.mrf.mxu0
    %v3811 = vadd.f32 %v3792, %v3810
    %3812 = vmatmul.bf16.gmra.mxu0 %v633
    %v3813 = vpop.f32.mrf.mxu0
    %v3814 = vadd.f32 %v3795, %v3813
    %v3815 = vpop.f32.mrf.mxu0
    %v3816 = vadd.f32 %v3797, %v3815
    %3817 = vdwg.mxu0
    %3818 = vmatpush.bf16.msra.mxu0 %v2246
    %3819 = vmatpush.bf16.msra.mxu0 %v2238
    %3820 = vmatpush.bf16.msra.mxu0 %v2230
    %3821 = vmatpush.bf16.msra.mxu0 %v2222
    %3822 = vmatpush.bf16.msra.mxu0 %v2214
    %3823 = vmatpush.bf16.msra.mxu0 %v2206
    %3824 = vmatpush.bf16.msra.mxu0 %v2198
    %3825 = vmatpush.bf16.msra.mxu0 %v2190
    %3826 = vmatmul.bf16.gmra.mxu0 %v618
    %v3827 = vpop.f32.mrf.mxu0
    %v3828 = vadd.f32 %v558, %v3827
    %v3829 = vpop.f32.mrf.mxu0
    %v3830 = vadd.f32 %v558, %v3829
    %3831 = vmatmul.bf16.gmra.mxu0 %v626
    %v3832 = vpop.f32.mrf.mxu0
    %v3833 = vadd.f32 %v558, %v3832
    %v3834 = vpop.f32.mrf.mxu0
    %v3835 = vadd.f32 %v558, %v3834
    %3836 = vdwg.mxu0
    %3837 = vmatpush.bf16.msra.mxu0 %v2310
    %3838 = vmatpush.bf16.msra.mxu0 %v2302
    %3839 = vmatpush.bf16.msra.mxu0 %v2294
    %3840 = vmatpush.bf16.msra.mxu0 %v2286
    %3841 = vmatpush.bf16.msra.mxu0 %v2278
    %3842 = vmatpush.bf16.msra.mxu0 %v2270
    %3843 = vmatpush.bf16.msra.mxu0 %v2262
    %3844 = vmatpush.bf16.msra.mxu0 %v2254
    %3845 = vmatmul.bf16.gmra.mxu0 %v619
    %v3846 = vpop.f32.mrf.mxu0
    %v3847 = vadd.f32 %v3828, %v3846
    %v3848 = vpop.f32.mrf.mxu0
    %v3849 = vadd.f32 %v3830, %v3848
    %3850 = vmatmul.bf16.gmra.mxu0 %v627
    %v3851 = vpop.f32.mrf.mxu0
    %v3852 = vadd.f32 %v3833, %v3851
    %v3853 = vpop.f32.mrf.mxu0
    %v3854 = vadd.f32 %v3835, %v3853
    %3855 = vdwg.mxu0
    %3856 = vmatpush.bf16.msra.mxu0 %v2374
    %3857 = vmatpush.bf16.msra.mxu0 %v2366
    %3858 = vmatpush.bf16.msra.mxu0 %v2358
    %3859 = vmatpush.bf16.msra.mxu0 %v2350
    %3860 = vmatpush.bf16.msra.mxu0 %v2342
    %3861 = vmatpush.bf16.msra.mxu0 %v2334
    %3862 = vmatpush.bf16.msra.mxu0 %v2326
    %3863 = vmatpush.bf16.msra.mxu0 %v2318
    %3864 = vmatmul.bf16.gmra.mxu0 %v620
    %v3865 = vpop.f32.mrf.mxu0
    %v3866 = vadd.f32 %v3847, %v3865
    %v3867 = vpop.f32.mrf.mxu0
    %v3868 = vadd.f32 %v3849, %v3867
    %3869 = vmatmul.bf16.gmra.mxu0 %v628
    %v3870 = vpop.f32.mrf.mxu0
    %v3871 = vadd.f32 %v3852, %v3870
    %v3872 = vpop.f32.mrf.mxu0
    %v3873 = vadd.f32 %v3854, %v3872
    %3874 = vdwg.mxu0
    %3875 = vmatpush.bf16.msra.mxu0 %v2438
    %3876 = vmatpush.bf16.msra.mxu0 %v2430
    %3877 = vmatpush.bf16.msra.mxu0 %v2422
    %3878 = vmatpush.bf16.msra.mxu0 %v2414
    %3879 = vmatpush.bf16.msra.mxu0 %v2406
    %3880 = vmatpush.bf16.msra.mxu0 %v2398
    %3881 = vmatpush.bf16.msra.mxu0 %v2390
    %3882 = vmatpush.bf16.msra.mxu0 %v2382
    %3883 = vmatmul.bf16.gmra.mxu0 %v621
    %v3884 = vpop.f32.mrf.mxu0
    %v3885 = vadd.f32 %v3866, %v3884
    %v3886 = vpop.f32.mrf.mxu0
    %v3887 = vadd.f32 %v3868, %v3886
    %3888 = vmatmul.bf16.gmra.mxu0 %v629
    %v3889 = vpop.f32.mrf.mxu0
    %v3890 = vadd.f32 %v3871, %v3889
    %v3891 = vpop.f32.mrf.mxu0
    %v3892 = vadd.f32 %v3873, %v3891
    %3893 = vdwg.mxu0
    %3894 = vmatpush.bf16.msra.mxu0 %v2502
    %3895 = vmatpush.bf16.msra.mxu0 %v2494
    %3896 = vmatpush.bf16.msra.mxu0 %v2486
    %3897 = vmatpush.bf16.msra.mxu0 %v2478
    %3898 = vmatpush.bf16.msra.mxu0 %v2470
    %3899 = vmatpush.bf16.msra.mxu0 %v2462
    %3900 = vmatpush.bf16.msra.mxu0 %v2454
    %3901 = vmatpush.bf16.msra.mxu0 %v2446
    %3902 = vmatmul.bf16.gmra.mxu0 %v622
    %v3903 = vpop.f32.mrf.mxu0
    %v3904 = vadd.f32 %v3885, %v3903
    %v3905 = vpop.f32.mrf.mxu0
    %v3906 = vadd.f32 %v3887, %v3905
    %3907 = vmatmul.bf16.gmra.mxu0 %v630
    %v3908 = vpop.f32.mrf.mxu0
    %v3909 = vadd.f32 %v3890, %v3908
    %v3910 = vpop.f32.mrf.mxu0
    %v3911 = vadd.f32 %v3892, %v3910
    %3912 = vdwg.mxu0
    %3913 = vmatpush.bf16.msra.mxu0 %v2566
    %3914 = vmatpush.bf16.msra.mxu0 %v2558
    %3915 = vmatpush.bf16.msra.mxu0 %v2550
    %3916 = vmatpush.bf16.msra.mxu0 %v2542
    %3917 = vmatpush.bf16.msra.mxu0 %v2534
    %3918 = vmatpush.bf16.msra.mxu0 %v2526
    %3919 = vmatpush.bf16.msra.mxu0 %v2518
    %3920 = vmatpush.bf16.msra.mxu0 %v2510
    %3921 = vmatmul.bf16.gmra.mxu0 %v623
    %v3922 = vpop.f32.mrf.mxu0
    %v3923 = vadd.f32 %v3904, %v3922
    %v3924 = vpop.f32.mrf.mxu0
    %v3925 = vadd.f32 %v3906, %v3924
    %3926 = vmatmul.bf16.gmra.mxu0 %v631
    %v3927 = vpop.f32.mrf.mxu0
    %v3928 = vadd.f32 %v3909, %v3927
    %v3929 = vpop.f32.mrf.mxu0
    %v3930 = vadd.f32 %v3911, %v3929
    %3931 = vdwg.mxu0
    %3932 = vmatpush.bf16.msra.mxu0 %v2630
    %3933 = vmatpush.bf16.msra.mxu0 %v2622
    %3934 = vmatpush.bf16.msra.mxu0 %v2614
    %3935 = vmatpush.bf16.msra.mxu0 %v2606
    %3936 = vmatpush.bf16.msra.mxu0 %v2598
    %3937 = vmatpush.bf16.msra.mxu0 %v2590
    %3938 = vmatpush.bf16.msra.mxu0 %v2582
    %3939 = vmatpush.bf16.msra.mxu0 %v2574
    %3940 = vmatmul.bf16.gmra.mxu0 %v624
    %v3941 = vpop.f32.mrf.mxu0
    %v3942 = vadd.f32 %v3923, %v3941
    %v3943 = vpop.f32.mrf.mxu0
    %v3944 = vadd.f32 %v3925, %v3943
    %3945 = vmatmul.bf16.gmra.mxu0 %v632
    %v3946 = vpop.f32.mrf.mxu0
    %v3947 = vadd.f32 %v3928, %v3946
    %v3948 = vpop.f32.mrf.mxu0
    %v3949 = vadd.f32 %v3930, %v3948
    %3950 = vdwg.mxu0
    %3951 = vmatpush.bf16.msra.mxu0 %v2694
    %3952 = vmatpush.bf16.msra.mxu0 %v2686
    %3953 = vmatpush.bf16.msra.mxu0 %v2678
    %3954 = vmatpush.bf16.msra.mxu0 %v2670
    %3955 = vmatpush.bf16.msra.mxu0 %v2662
    %3956 = vmatpush.bf16.msra.mxu0 %v2654
    %3957 = vmatpush.bf16.msra.mxu0 %v2646
    %3958 = vmatpush.bf16.msra.mxu0 %v2638
    %3959 = vmatmul.bf16.gmra.mxu0 %v625
    %v3960 = vpop.f32.mrf.mxu0
    %v3961 = vadd.f32 %v3942, %v3960
    %v3962 = vpop.f32.mrf.mxu0
    %v3963 = vadd.f32 %v3944, %v3962
    %3964 = vmatmul.bf16.gmra.mxu0 %v633
    %v3965 = vpop.f32.mrf.mxu0
    %v3966 = vadd.f32 %v3947, %v3965
    %v3967 = vpop.f32.mrf.mxu0
    %v3968 = vadd.f32 %v3949, %v3967
    %3969 = vdwg.mxu0
    %3970 = vmatpush.bf16.msra.mxu0 %v2247
    %3971 = vmatpush.bf16.msra.mxu0 %v2239
    %3972 = vmatpush.bf16.msra.mxu0 %v2231
    %3973 = vmatpush.bf16.msra.mxu0 %v2223
    %3974 = vmatpush.bf16.msra.mxu0 %v2215
    %3975 = vmatpush.bf16.msra.mxu0 %v2207
    %3976 = vmatpush.bf16.msra.mxu0 %v2199
    %3977 = vmatpush.bf16.msra.mxu0 %v2191
    %3978 = vmatmul.bf16.gmra.mxu0 %v618
    %v3979 = vpop.f32.mrf.mxu0
    %v3980 = vadd.f32 %v559, %v3979
    %v3981 = vpop.f32.mrf.mxu0
    %v3982 = vadd.f32 %v559, %v3981
    %3983 = vmatmul.bf16.gmra.mxu0 %v626
    %v3984 = vpop.f32.mrf.mxu0
    %v3985 = vadd.f32 %v559, %v3984
    %v3986 = vpop.f32.mrf.mxu0
    %v3987 = vadd.f32 %v559, %v3986
    %3988 = vdwg.mxu0
    %3989 = vmatpush.bf16.msra.mxu0 %v2311
    %3990 = vmatpush.bf16.msra.mxu0 %v2303
    %3991 = vmatpush.bf16.msra.mxu0 %v2295
    %3992 = vmatpush.bf16.msra.mxu0 %v2287
    %3993 = vmatpush.bf16.msra.mxu0 %v2279
    %3994 = vmatpush.bf16.msra.mxu0 %v2271
    %3995 = vmatpush.bf16.msra.mxu0 %v2263
    %3996 = vmatpush.bf16.msra.mxu0 %v2255
    %3997 = vmatmul.bf16.gmra.mxu0 %v619
    %v3998 = vpop.f32.mrf.mxu0
    %v3999 = vadd.f32 %v3980, %v3998
    %v4000 = vpop.f32.mrf.mxu0
    %v4001 = vadd.f32 %v3982, %v4000
    %4002 = vmatmul.bf16.gmra.mxu0 %v627
    %v4003 = vpop.f32.mrf.mxu0
    %v4004 = vadd.f32 %v3985, %v4003
    %v4005 = vpop.f32.mrf.mxu0
    %v4006 = vadd.f32 %v3987, %v4005
    %4007 = vdwg.mxu0
    %4008 = vmatpush.bf16.msra.mxu0 %v2375
    %4009 = vmatpush.bf16.msra.mxu0 %v2367
    %4010 = vmatpush.bf16.msra.mxu0 %v2359
    %4011 = vmatpush.bf16.msra.mxu0 %v2351
    %4012 = vmatpush.bf16.msra.mxu0 %v2343
    %4013 = vmatpush.bf16.msra.mxu0 %v2335
    %4014 = vmatpush.bf16.msra.mxu0 %v2327
    %4015 = vmatpush.bf16.msra.mxu0 %v2319
    %4016 = vmatmul.bf16.gmra.mxu0 %v620
    %v4017 = vpop.f32.mrf.mxu0
    %v4018 = vadd.f32 %v3999, %v4017
    %v4019 = vpop.f32.mrf.mxu0
    %v4020 = vadd.f32 %v4001, %v4019
    %4021 = vmatmul.bf16.gmra.mxu0 %v628
    %v4022 = vpop.f32.mrf.mxu0
    %v4023 = vadd.f32 %v4004, %v4022
    %v4024 = vpop.f32.mrf.mxu0
    %v4025 = vadd.f32 %v4006, %v4024
    %4026 = vdwg.mxu0
    %4027 = vmatpush.bf16.msra.mxu0 %v2439
    %4028 = vmatpush.bf16.msra.mxu0 %v2431
    %4029 = vmatpush.bf16.msra.mxu0 %v2423
    %4030 = vmatpush.bf16.msra.mxu0 %v2415
    %4031 = vmatpush.bf16.msra.mxu0 %v2407
    %4032 = vmatpush.bf16.msra.mxu0 %v2399
    %4033 = vmatpush.bf16.msra.mxu0 %v2391
    %4034 = vmatpush.bf16.msra.mxu0 %v2383
    %4035 = vmatmul.bf16.gmra.mxu0 %v621
    %v4036 = vpop.f32.mrf.mxu0
    %v4037 = vadd.f32 %v4018, %v4036
    %v4038 = vpop.f32.mrf.mxu0
    %v4039 = vadd.f32 %v4020, %v4038
    %4040 = vmatmul.bf16.gmra.mxu0 %v629
    %v4041 = vpop.f32.mrf.mxu0
    %v4042 = vadd.f32 %v4023, %v4041
    %v4043 = vpop.f32.mrf.mxu0
    %v4044 = vadd.f32 %v4025, %v4043
    %4045 = vdwg.mxu0
    %4046 = vmatpush.bf16.msra.mxu0 %v2503
    %4047 = vmatpush.bf16.msra.mxu0 %v2495
    %4048 = vmatpush.bf16.msra.mxu0 %v2487
    %4049 = vmatpush.bf16.msra.mxu0 %v2479
    %4050 = vmatpush.bf16.msra.mxu0 %v2471
    %4051 = vmatpush.bf16.msra.mxu0 %v2463
    %4052 = vmatpush.bf16.msra.mxu0 %v2455
    %4053 = vmatpush.bf16.msra.mxu0 %v2447
    %4054 = vmatmul.bf16.gmra.mxu0 %v622
    %v4055 = vpop.f32.mrf.mxu0
    %v4056 = vadd.f32 %v4037, %v4055
    %v4057 = vpop.f32.mrf.mxu0
    %v4058 = vadd.f32 %v4039, %v4057
    %4059 = vmatmul.bf16.gmra.mxu0 %v630
    %v4060 = vpop.f32.mrf.mxu0
    %v4061 = vadd.f32 %v4042, %v4060
    %v4062 = vpop.f32.mrf.mxu0
    %v4063 = vadd.f32 %v4044, %v4062
    %4064 = vdwg.mxu0
    %4065 = vmatpush.bf16.msra.mxu0 %v2567
    %4066 = vmatpush.bf16.msra.mxu0 %v2559
    %4067 = vmatpush.bf16.msra.mxu0 %v2551
    %4068 = vmatpush.bf16.msra.mxu0 %v2543
    %4069 = vmatpush.bf16.msra.mxu0 %v2535
    %4070 = vmatpush.bf16.msra.mxu0 %v2527
    %4071 = vmatpush.bf16.msra.mxu0 %v2519
    %4072 = vmatpush.bf16.msra.mxu0 %v2511
    %4073 = vmatmul.bf16.gmra.mxu0 %v623
    %v4074 = vpop.f32.mrf.mxu0
    %v4075 = vadd.f32 %v4056, %v4074
    %v4076 = vpop.f32.mrf.mxu0
    %v4077 = vadd.f32 %v4058, %v4076
    %4078 = vmatmul.bf16.gmra.mxu0 %v631
    %v4079 = vpop.f32.mrf.mxu0
    %v4080 = vadd.f32 %v4061, %v4079
    %v4081 = vpop.f32.mrf.mxu0
    %v4082 = vadd.f32 %v4063, %v4081
    %4083 = vdwg.mxu0
    %4084 = vmatpush.bf16.msra.mxu0 %v2631
    %4085 = vmatpush.bf16.msra.mxu0 %v2623
    %4086 = vmatpush.bf16.msra.mxu0 %v2615
    %4087 = vmatpush.bf16.msra.mxu0 %v2607
    %4088 = vmatpush.bf16.msra.mxu0 %v2599
    %4089 = vmatpush.bf16.msra.mxu0 %v2591
    %4090 = vmatpush.bf16.msra.mxu0 %v2583
    %4091 = vmatpush.bf16.msra.mxu0 %v2575
    %4092 = vmatmul.bf16.gmra.mxu0 %v624
    %v4093 = vpop.f32.mrf.mxu0
    %v4094 = vadd.f32 %v4075, %v4093
    %v4095 = vpop.f32.mrf.mxu0
    %v4096 = vadd.f32 %v4077, %v4095
    %4097 = vmatmul.bf16.gmra.mxu0 %v632
    %v4098 = vpop.f32.mrf.mxu0
    %v4099 = vadd.f32 %v4080, %v4098
    %v4100 = vpop.f32.mrf.mxu0
    %v4101 = vadd.f32 %v4082, %v4100
    %4102 = vdwg.mxu0
    %4103 = vmatpush.bf16.msra.mxu0 %v2695
    %4104 = vmatpush.bf16.msra.mxu0 %v2687
    %4105 = vmatpush.bf16.msra.mxu0 %v2679
    %4106 = vmatpush.bf16.msra.mxu0 %v2671
    %4107 = vmatpush.bf16.msra.mxu0 %v2663
    %4108 = vmatpush.bf16.msra.mxu0 %v2655
    %4109 = vmatpush.bf16.msra.mxu0 %v2647
    %4110 = vmatpush.bf16.msra.mxu0 %v2639
    %4111 = vmatmul.bf16.gmra.mxu0 %v625
    %v4112 = vpop.f32.mrf.mxu0
    %v4113 = vadd.f32 %v4094, %v4112
    %v4114 = vpop.f32.mrf.mxu0
    %v4115 = vadd.f32 %v4096, %v4114
    %4116 = vmatmul.bf16.gmra.mxu0 %v633
    %v4117 = vpop.f32.mrf.mxu0
    %v4118 = vadd.f32 %v4099, %v4117
    %v4119 = vpop.f32.mrf.mxu0
    %v4120 = vadd.f32 %v4101, %v4119
    %4121 = vdwg.mxu0
    %4122 = vmatpush.bf16.msra.mxu0 %v2248
    %4123 = vmatpush.bf16.msra.mxu0 %v2240
    %4124 = vmatpush.bf16.msra.mxu0 %v2232
    %4125 = vmatpush.bf16.msra.mxu0 %v2224
    %4126 = vmatpush.bf16.msra.mxu0 %v2216
    %4127 = vmatpush.bf16.msra.mxu0 %v2208
    %4128 = vmatpush.bf16.msra.mxu0 %v2200
    %4129 = vmatpush.bf16.msra.mxu0 %v2192
    %4130 = vmatmul.bf16.gmra.mxu0 %v618
    %v4131 = vpop.f32.mrf.mxu0
    %v4132 = vadd.f32 %v560, %v4131
    %v4133 = vpop.f32.mrf.mxu0
    %v4134 = vadd.f32 %v560, %v4133
    %4135 = vmatmul.bf16.gmra.mxu0 %v626
    %v4136 = vpop.f32.mrf.mxu0
    %v4137 = vadd.f32 %v560, %v4136
    %v4138 = vpop.f32.mrf.mxu0
    %v4139 = vadd.f32 %v560, %v4138
    %4140 = vdwg.mxu0
    %4141 = vmatpush.bf16.msra.mxu0 %v2312
    %4142 = vmatpush.bf16.msra.mxu0 %v2304
    %4143 = vmatpush.bf16.msra.mxu0 %v2296
    %4144 = vmatpush.bf16.msra.mxu0 %v2288
    %4145 = vmatpush.bf16.msra.mxu0 %v2280
    %4146 = vmatpush.bf16.msra.mxu0 %v2272
    %4147 = vmatpush.bf16.msra.mxu0 %v2264
    %4148 = vmatpush.bf16.msra.mxu0 %v2256
    %4149 = vmatmul.bf16.gmra.mxu0 %v619
    %v4150 = vpop.f32.mrf.mxu0
    %v4151 = vadd.f32 %v4132, %v4150
    %v4152 = vpop.f32.mrf.mxu0
    %v4153 = vadd.f32 %v4134, %v4152
    %4154 = vmatmul.bf16.gmra.mxu0 %v627
    %v4155 = vpop.f32.mrf.mxu0
    %v4156 = vadd.f32 %v4137, %v4155
    %v4157 = vpop.f32.mrf.mxu0
    %v4158 = vadd.f32 %v4139, %v4157
    %4159 = vdwg.mxu0
    %4160 = vmatpush.bf16.msra.mxu0 %v2376
    %4161 = vmatpush.bf16.msra.mxu0 %v2368
    %4162 = vmatpush.bf16.msra.mxu0 %v2360
    %4163 = vmatpush.bf16.msra.mxu0 %v2352
    %4164 = vmatpush.bf16.msra.mxu0 %v2344
    %4165 = vmatpush.bf16.msra.mxu0 %v2336
    %4166 = vmatpush.bf16.msra.mxu0 %v2328
    %4167 = vmatpush.bf16.msra.mxu0 %v2320
    %4168 = vmatmul.bf16.gmra.mxu0 %v620
    %v4169 = vpop.f32.mrf.mxu0
    %v4170 = vadd.f32 %v4151, %v4169
    %v4171 = vpop.f32.mrf.mxu0
    %v4172 = vadd.f32 %v4153, %v4171
    %4173 = vmatmul.bf16.gmra.mxu0 %v628
    %v4174 = vpop.f32.mrf.mxu0
    %v4175 = vadd.f32 %v4156, %v4174
    %v4176 = vpop.f32.mrf.mxu0
    %v4177 = vadd.f32 %v4158, %v4176
    %4178 = vdwg.mxu0
    %4179 = vmatpush.bf16.msra.mxu0 %v2440
    %4180 = vmatpush.bf16.msra.mxu0 %v2432
    %4181 = vmatpush.bf16.msra.mxu0 %v2424
    %4182 = vmatpush.bf16.msra.mxu0 %v2416
    %4183 = vmatpush.bf16.msra.mxu0 %v2408
    %4184 = vmatpush.bf16.msra.mxu0 %v2400
    %4185 = vmatpush.bf16.msra.mxu0 %v2392
    %4186 = vmatpush.bf16.msra.mxu0 %v2384
    %4187 = vmatmul.bf16.gmra.mxu0 %v621
    %v4188 = vpop.f32.mrf.mxu0
    %v4189 = vadd.f32 %v4170, %v4188
    %v4190 = vpop.f32.mrf.mxu0
    %v4191 = vadd.f32 %v4172, %v4190
    %4192 = vmatmul.bf16.gmra.mxu0 %v629
    %v4193 = vpop.f32.mrf.mxu0
    %v4194 = vadd.f32 %v4175, %v4193
    %v4195 = vpop.f32.mrf.mxu0
    %v4196 = vadd.f32 %v4177, %v4195
    %4197 = vdwg.mxu0
    %4198 = vmatpush.bf16.msra.mxu0 %v2504
    %4199 = vmatpush.bf16.msra.mxu0 %v2496
    %4200 = vmatpush.bf16.msra.mxu0 %v2488
    %4201 = vmatpush.bf16.msra.mxu0 %v2480
    %4202 = vmatpush.bf16.msra.mxu0 %v2472
    %4203 = vmatpush.bf16.msra.mxu0 %v2464
    %4204 = vmatpush.bf16.msra.mxu0 %v2456
    %4205 = vmatpush.bf16.msra.mxu0 %v2448
    %4206 = vmatmul.bf16.gmra.mxu0 %v622
    %v4207 = vpop.f32.mrf.mxu0
    %v4208 = vadd.f32 %v4189, %v4207
    %v4209 = vpop.f32.mrf.mxu0
    %v4210 = vadd.f32 %v4191, %v4209
    %4211 = vmatmul.bf16.gmra.mxu0 %v630
    %v4212 = vpop.f32.mrf.mxu0
    %v4213 = vadd.f32 %v4194, %v4212
    %v4214 = vpop.f32.mrf.mxu0
    %v4215 = vadd.f32 %v4196, %v4214
    %4216 = vdwg.mxu0
    %4217 = vmatpush.bf16.msra.mxu0 %v2568
    %4218 = vmatpush.bf16.msra.mxu0 %v2560
    %4219 = vmatpush.bf16.msra.mxu0 %v2552
    %4220 = vmatpush.bf16.msra.mxu0 %v2544
    %4221 = vmatpush.bf16.msra.mxu0 %v2536
    %4222 = vmatpush.bf16.msra.mxu0 %v2528
    %4223 = vmatpush.bf16.msra.mxu0 %v2520
    %4224 = vmatpush.bf16.msra.mxu0 %v2512
    %4225 = vmatmul.bf16.gmra.mxu0 %v623
    %v4226 = vpop.f32.mrf.mxu0
    %v4227 = vadd.f32 %v4208, %v4226
    %v4228 = vpop.f32.mrf.mxu0
    %v4229 = vadd.f32 %v4210, %v4228
    %4230 = vmatmul.bf16.gmra.mxu0 %v631
    %v4231 = vpop.f32.mrf.mxu0
    %v4232 = vadd.f32 %v4213, %v4231
    %v4233 = vpop.f32.mrf.mxu0
    %v4234 = vadd.f32 %v4215, %v4233
    %4235 = vdwg.mxu0
    %4236 = vmatpush.bf16.msra.mxu0 %v2632
    %4237 = vmatpush.bf16.msra.mxu0 %v2624
    %4238 = vmatpush.bf16.msra.mxu0 %v2616
    %4239 = vmatpush.bf16.msra.mxu0 %v2608
    %4240 = vmatpush.bf16.msra.mxu0 %v2600
    %4241 = vmatpush.bf16.msra.mxu0 %v2592
    %4242 = vmatpush.bf16.msra.mxu0 %v2584
    %4243 = vmatpush.bf16.msra.mxu0 %v2576
    %4244 = vmatmul.bf16.gmra.mxu0 %v624
    %v4245 = vpop.f32.mrf.mxu0
    %v4246 = vadd.f32 %v4227, %v4245
    %v4247 = vpop.f32.mrf.mxu0
    %v4248 = vadd.f32 %v4229, %v4247
    %4249 = vmatmul.bf16.gmra.mxu0 %v632
    %v4250 = vpop.f32.mrf.mxu0
    %v4251 = vadd.f32 %v4232, %v4250
    %v4252 = vpop.f32.mrf.mxu0
    %v4253 = vadd.f32 %v4234, %v4252
    %4254 = vdwg.mxu0
    %4255 = vmatpush.bf16.msra.mxu0 %v2696
    %4256 = vmatpush.bf16.msra.mxu0 %v2688
    %4257 = vmatpush.bf16.msra.mxu0 %v2680
    %4258 = vmatpush.bf16.msra.mxu0 %v2672
    %4259 = vmatpush.bf16.msra.mxu0 %v2664
    %4260 = vmatpush.bf16.msra.mxu0 %v2656
    %4261 = vmatpush.bf16.msra.mxu0 %v2648
    %4262 = vmatpush.bf16.msra.mxu0 %v2640
    %4263 = vmatmul.bf16.gmra.mxu0 %v625
    %v4264 = vpop.f32.mrf.mxu0
    %v4265 = vadd.f32 %v4246, %v4264
    %v4266 = vpop.f32.mrf.mxu0
    %v4267 = vadd.f32 %v4248, %v4266
    %4268 = vmatmul.bf16.gmra.mxu0 %v633
    %v4269 = vpop.f32.mrf.mxu0
    %v4270 = vadd.f32 %v4251, %v4269
    %v4271 = vpop.f32.mrf.mxu0
    %v4272 = vadd.f32 %v4253, %v4271
    %4273 = vdwg.mxu0
    %4274 = vmatpush.bf16.msra.mxu0 %v2249
    %4275 = vmatpush.bf16.msra.mxu0 %v2241
    %4276 = vmatpush.bf16.msra.mxu0 %v2233
    %4277 = vmatpush.bf16.msra.mxu0 %v2225
    %4278 = vmatpush.bf16.msra.mxu0 %v2217
    %4279 = vmatpush.bf16.msra.mxu0 %v2209
    %4280 = vmatpush.bf16.msra.mxu0 %v2201
    %4281 = vmatpush.bf16.msra.mxu0 %v2193
    %4282 = vmatmul.bf16.gmra.mxu0 %v618
    %v4283 = vpop.f32.mrf.mxu0
    %v4284 = vadd.f32 %v561, %v4283
    %v4285 = vpop.f32.mrf.mxu0
    %v4286 = vadd.f32 %v561, %v4285
    %4287 = vmatmul.bf16.gmra.mxu0 %v626
    %v4288 = vpop.f32.mrf.mxu0
    %v4289 = vadd.f32 %v561, %v4288
    %v4290 = vpop.f32.mrf.mxu0
    %v4291 = vadd.f32 %v561, %v4290
    %4292 = vdwg.mxu0
    %4293 = vmatpush.bf16.msra.mxu0 %v2313
    %4294 = vmatpush.bf16.msra.mxu0 %v2305
    %4295 = vmatpush.bf16.msra.mxu0 %v2297
    %4296 = vmatpush.bf16.msra.mxu0 %v2289
    %4297 = vmatpush.bf16.msra.mxu0 %v2281
    %4298 = vmatpush.bf16.msra.mxu0 %v2273
    %4299 = vmatpush.bf16.msra.mxu0 %v2265
    %4300 = vmatpush.bf16.msra.mxu0 %v2257
    %4301 = vmatmul.bf16.gmra.mxu0 %v619
    %v4302 = vpop.f32.mrf.mxu0
    %v4303 = vadd.f32 %v4284, %v4302
    %v4304 = vpop.f32.mrf.mxu0
    %v4305 = vadd.f32 %v4286, %v4304
    %4306 = vmatmul.bf16.gmra.mxu0 %v627
    %v4307 = vpop.f32.mrf.mxu0
    %v4308 = vadd.f32 %v4289, %v4307
    %v4309 = vpop.f32.mrf.mxu0
    %v4310 = vadd.f32 %v4291, %v4309
    %4311 = vdwg.mxu0
    %4312 = vmatpush.bf16.msra.mxu0 %v2377
    %4313 = vmatpush.bf16.msra.mxu0 %v2369
    %4314 = vmatpush.bf16.msra.mxu0 %v2361
    %4315 = vmatpush.bf16.msra.mxu0 %v2353
    %4316 = vmatpush.bf16.msra.mxu0 %v2345
    %4317 = vmatpush.bf16.msra.mxu0 %v2337
    %4318 = vmatpush.bf16.msra.mxu0 %v2329
    %4319 = vmatpush.bf16.msra.mxu0 %v2321
    %4320 = vmatmul.bf16.gmra.mxu0 %v620
    %v4321 = vpop.f32.mrf.mxu0
    %v4322 = vadd.f32 %v4303, %v4321
    %v4323 = vpop.f32.mrf.mxu0
    %v4324 = vadd.f32 %v4305, %v4323
    %4325 = vmatmul.bf16.gmra.mxu0 %v628
    %v4326 = vpop.f32.mrf.mxu0
    %v4327 = vadd.f32 %v4308, %v4326
    %v4328 = vpop.f32.mrf.mxu0
    %v4329 = vadd.f32 %v4310, %v4328
    %4330 = vdwg.mxu0
    %4331 = vmatpush.bf16.msra.mxu0 %v2441
    %4332 = vmatpush.bf16.msra.mxu0 %v2433
    %4333 = vmatpush.bf16.msra.mxu0 %v2425
    %4334 = vmatpush.bf16.msra.mxu0 %v2417
    %4335 = vmatpush.bf16.msra.mxu0 %v2409
    %4336 = vmatpush.bf16.msra.mxu0 %v2401
    %4337 = vmatpush.bf16.msra.mxu0 %v2393
    %4338 = vmatpush.bf16.msra.mxu0 %v2385
    %4339 = vmatmul.bf16.gmra.mxu0 %v621
    %v4340 = vpop.f32.mrf.mxu0
    %v4341 = vadd.f32 %v4322, %v4340
    %v4342 = vpop.f32.mrf.mxu0
    %v4343 = vadd.f32 %v4324, %v4342
    %4344 = vmatmul.bf16.gmra.mxu0 %v629
    %v4345 = vpop.f32.mrf.mxu0
    %v4346 = vadd.f32 %v4327, %v4345
    %v4347 = vpop.f32.mrf.mxu0
    %v4348 = vadd.f32 %v4329, %v4347
    %4349 = vdwg.mxu0
    %4350 = vmatpush.bf16.msra.mxu0 %v2505
    %4351 = vmatpush.bf16.msra.mxu0 %v2497
    %4352 = vmatpush.bf16.msra.mxu0 %v2489
    %4353 = vmatpush.bf16.msra.mxu0 %v2481
    %4354 = vmatpush.bf16.msra.mxu0 %v2473
    %4355 = vmatpush.bf16.msra.mxu0 %v2465
    %4356 = vmatpush.bf16.msra.mxu0 %v2457
    %4357 = vmatpush.bf16.msra.mxu0 %v2449
    %4358 = vmatmul.bf16.gmra.mxu0 %v622
    %v4359 = vpop.f32.mrf.mxu0
    %v4360 = vadd.f32 %v4341, %v4359
    %v4361 = vpop.f32.mrf.mxu0
    %v4362 = vadd.f32 %v4343, %v4361
    %4363 = vmatmul.bf16.gmra.mxu0 %v630
    %v4364 = vpop.f32.mrf.mxu0
    %v4365 = vadd.f32 %v4346, %v4364
    %v4366 = vpop.f32.mrf.mxu0
    %v4367 = vadd.f32 %v4348, %v4366
    %4368 = vdwg.mxu0
    %4369 = vmatpush.bf16.msra.mxu0 %v2569
    %4370 = vmatpush.bf16.msra.mxu0 %v2561
    %4371 = vmatpush.bf16.msra.mxu0 %v2553
    %4372 = vmatpush.bf16.msra.mxu0 %v2545
    %4373 = vmatpush.bf16.msra.mxu0 %v2537
    %4374 = vmatpush.bf16.msra.mxu0 %v2529
    %4375 = vmatpush.bf16.msra.mxu0 %v2521
    %4376 = vmatpush.bf16.msra.mxu0 %v2513
    %4377 = vmatmul.bf16.gmra.mxu0 %v623
    %v4378 = vpop.f32.mrf.mxu0
    %v4379 = vadd.f32 %v4360, %v4378
    %v4380 = vpop.f32.mrf.mxu0
    %v4381 = vadd.f32 %v4362, %v4380
    %4382 = vmatmul.bf16.gmra.mxu0 %v631
    %v4383 = vpop.f32.mrf.mxu0
    %v4384 = vadd.f32 %v4365, %v4383
    %v4385 = vpop.f32.mrf.mxu0
    %v4386 = vadd.f32 %v4367, %v4385
    %4387 = vdwg.mxu0
    %4388 = vmatpush.bf16.msra.mxu0 %v2633
    %4389 = vmatpush.bf16.msra.mxu0 %v2625
    %4390 = vmatpush.bf16.msra.mxu0 %v2617
    %4391 = vmatpush.bf16.msra.mxu0 %v2609
    %4392 = vmatpush.bf16.msra.mxu0 %v2601
    %4393 = vmatpush.bf16.msra.mxu0 %v2593
    %4394 = vmatpush.bf16.msra.mxu0 %v2585
    %4395 = vmatpush.bf16.msra.mxu0 %v2577
    %4396 = vmatmul.bf16.gmra.mxu0 %v624
    %v4397 = vpop.f32.mrf.mxu0
    %v4398 = vadd.f32 %v4379, %v4397
    %v4399 = vpop.f32.mrf.mxu0
    %v4400 = vadd.f32 %v4381, %v4399
    %4401 = vmatmul.bf16.gmra.mxu0 %v632
    %v4402 = vpop.f32.mrf.mxu0
    %v4403 = vadd.f32 %v4384, %v4402
    %v4404 = vpop.f32.mrf.mxu0
    %v4405 = vadd.f32 %v4386, %v4404
    %4406 = vdwg.mxu0
    %4407 = vmatpush.bf16.msra.mxu0 %v2697
    %4408 = vmatpush.bf16.msra.mxu0 %v2689
    %4409 = vmatpush.bf16.msra.mxu0 %v2681
    %4410 = vmatpush.bf16.msra.mxu0 %v2673
    %4411 = vmatpush.bf16.msra.mxu0 %v2665
    %4412 = vmatpush.bf16.msra.mxu0 %v2657
    %4413 = vmatpush.bf16.msra.mxu0 %v2649
    %4414 = vmatpush.bf16.msra.mxu0 %v2641
    %4415 = vmatmul.bf16.gmra.mxu0 %v625
    %v4416 = vpop.f32.mrf.mxu0
    %v4417 = vadd.f32 %v4398, %v4416
    %v4418 = vpop.f32.mrf.mxu0
    %v4419 = vadd.f32 %v4400, %v4418
    %4420 = vmatmul.bf16.gmra.mxu0 %v633
    %v4421 = vpop.f32.mrf.mxu0
    %v4422 = vadd.f32 %v4403, %v4421
    %v4423 = vpop.f32.mrf.mxu0
    %v4424 = vadd.f32 %v4405, %v4423
    %4425 = vdwg.mxu0
    %v4426 = vld [vmem:[%s3] sm:$0xff]
    %v4427 = vld [vmem:[%s3 + $0x8] sm:$0xff]
    %v4428 = vld [vmem:[%s3 + $0x10] sm:$0xff]
    %v4429 = vld [vmem:[%s3 + $0x18] sm:$0xff]
    %v4430 = vld [vmem:[%s3 + $0x20] sm:$0xff]
    %v4431 = vld [vmem:[%s3 + $0x28] sm:$0xff]
    %v4432 = vld [vmem:[%s3 + $0x30] sm:$0xff]
    %v4433 = vld [vmem:[%s3 + $0x38] sm:$0xff]
    %v4434 = vld [vmem:[%s3 + $0x40] sm:$0xff]
    %v4435 = vld [vmem:[%s3 + $0x48] sm:$0xff]
    %v4436 = vld [vmem:[%s3 + $0x50] sm:$0xff]
    %v4437 = vld [vmem:[%s3 + $0x58] sm:$0xff]
    %v4438 = vld [vmem:[%s3 + $0x60] sm:$0xff]
    %v4439 = vld [vmem:[%s3 + $0x68] sm:$0xff]
    %v4440 = vld [vmem:[%s3 + $0x70] sm:$0xff]
    %v4441 = vld [vmem:[%s3 + $0x78] sm:$0xff]
    %v4442 = vmul.f32 %v3353, %v4426
    %v4443 = vmul.f32 %v3505, %v4427
    %v4444 = vmul.f32 %v3657, %v4428
    %v4445 = vmul.f32 %v3809, %v4429
    %v4446 = vmul.f32 %v3355, %v4430
    %v4447 = vmul.f32 %v3507, %v4431
    %v4448 = vmul.f32 %v3659, %v4432
    %v4449 = vmul.f32 %v3811, %v4433
    %v4450 = vmul.f32 %v3358, %v4434
    %v4451 = vmul.f32 %v3510, %v4435
    %v4452 = vmul.f32 %v3662, %v4436
    %v4453 = vmul.f32 %v3814, %v4437
    %v4454 = vmul.f32 %v3360, %v4438
    %v4455 = vmul.f32 %v3512, %v4439
    %v4456 = vmul.f32 %v3664, %v4440
    %v4457 = vmul.f32 %v3816, %v4441
    %v4458 = vld [vmem:[%s4] sm:$0xff]
    %v4459 = vld [vmem:[%s4 + $0x8] sm:$0xff]
    %v4460 = vld [vmem:[%s4 + $0x10] sm:$0xff]
    %v4461 = vld [vmem:[%s4 + $0x18] sm:$0xff]
    %v4462 = vld [vmem:[%s4 + $0x20] sm:$0xff]
    %v4463 = vld [vmem:[%s4 + $0x28] sm:$0xff]
    %v4464 = vld [vmem:[%s4 + $0x30] sm:$0xff]
    %v4465 = vld [vmem:[%s4 + $0x38] sm:$0xff]
    %v4466 = vld [vmem:[%s4 + $0x40] sm:$0xff]
    %v4467 = vld [vmem:[%s4 + $0x48] sm:$0xff]
    %v4468 = vld [vmem:[%s4 + $0x50] sm:$0xff]
    %v4469 = vld [vmem:[%s4 + $0x58] sm:$0xff]
    %v4470 = vld [vmem:[%s4 + $0x60] sm:$0xff]
    %v4471 = vld [vmem:[%s4 + $0x68] sm:$0xff]
    %v4472 = vld [vmem:[%s4 + $0x70] sm:$0xff]
    %v4473 = vld [vmem:[%s4 + $0x78] sm:$0xff]
    %v4474 = vmul.f32 %v3961, %v4458
    %v4475 = vmul.f32 %v4113, %v4459
    %v4476 = vmul.f32 %v4265, %v4460
    %v4477 = vmul.f32 %v4417, %v4461
    %v4478 = vmul.f32 %v3963, %v4462
    %v4479 = vmul.f32 %v4115, %v4463
    %v4480 = vmul.f32 %v4267, %v4464
    %v4481 = vmul.f32 %v4419, %v4465
    %v4482 = vmul.f32 %v3966, %v4466
    %v4483 = vmul.f32 %v4118, %v4467
    %v4484 = vmul.f32 %v4270, %v4468
    %v4485 = vmul.f32 %v4422, %v4469
    %v4486 = vmul.f32 %v3968, %v4470
    %v4487 = vmul.f32 %v4120, %v4471
    %v4488 = vmul.f32 %v4272, %v4472
    %v4489 = vmul.f32 %v4424, %v4473
    %v4490 = vadd.f32 %v4442, %v4474
    %v4491 = vadd.f32 %v4443, %v4475
    %v4492 = vadd.f32 %v4444, %v4476
    %v4493 = vadd.f32 %v4445, %v4477
    %v4494 = vadd.f32 %v4446, %v4478
    %v4495 = vadd.f32 %v4447, %v4479
    %v4496 = vadd.f32 %v4448, %v4480
    %v4497 = vadd.f32 %v4449, %v4481
    %v4498 = vadd.f32 %v4450, %v4482
    %v4499 = vadd.f32 %v4451, %v4483
    %v4500 = vadd.f32 %v4452, %v4484
    %v4501 = vadd.f32 %v4453, %v4485
    %v4502 = vadd.f32 %v4454, %v4486
    %v4503 = vadd.f32 %v4455, %v4487
    %v4504 = vadd.f32 %v4456, %v4488
    %v4505 = vadd.f32 %v4457, %v4489
    %vm4506 = vcmask 523264
    %4507 = vst.msk [vmem:[#allocation2] sm:$0xff] %vm4506, 0.0
    %4508 = vst.msk [vmem:[#allocation2 + $0x8] sm:$0xff] %vm4506, 0.0
    %4509 = vst.msk [vmem:[#allocation2 + $0x10] sm:$0xff] %vm4506, 0.0
    %4510 = vst.msk [vmem:[#allocation2 + $0x18] sm:$0xff] %vm4506, 0.0
    %4511 = vst.msk [vmem:[#allocation2 + $0x20] sm:$0xff] %vm4506, 0.0
    %4512 = vst.msk [vmem:[#allocation2 + $0x28] sm:$0xff] %vm4506, 0.0
    %4513 = vst.msk [vmem:[#allocation2 + $0x30] sm:$0xff] %vm4506, 0.0
    %4514 = vst.msk [vmem:[#allocation2 + $0x38] sm:$0xff] %vm4506, 0.0
    %4515 = vst.msk [vmem:[#allocation2 + $0x40] sm:$0xff] %vm4506, 0.0
    %4516 = vst.msk [vmem:[#allocation2 + $0x48] sm:$0xff] %vm4506, 0.0
    %4517 = vst.msk [vmem:[#allocation2 + $0x50] sm:$0xff] %vm4506, 0.0
    %4518 = vst.msk [vmem:[#allocation2 + $0x58] sm:$0xff] %vm4506, 0.0
    %4519 = vst.msk [vmem:[#allocation2 + $0x60] sm:$0xff] %vm4506, 0.0
    %4520 = vst.msk [vmem:[#allocation2 + $0x68] sm:$0xff] %vm4506, 0.0
    %4521 = vst.msk [vmem:[#allocation2 + $0x70] sm:$0xff] %vm4506, 0.0
    %4522 = vst.msk [vmem:[#allocation2 + $0x78] sm:$0xff] %vm4506, 0.0
    %v4523 = vld [vmem:[%s5] sm:$0xff]
    %v4524 = vld [vmem:[%s5 + $0x8] sm:$0xff]
    %4527 = vrot.lane.b32.xlu0 %v4490, 64
    %v4528 = vpop.permute.xlu0 %4527
    %4529 = vrot.lane.b32.xlu0 %v4494, 64
    %v4530 = vpop.permute.xlu0 %4529
    %4533 = vst.msk [vmem:[#allocation2] sm:$0xff] %vm4506, %v4528
    %4534 = vst.msk [vmem:[#allocation2 + $0x8] sm:$0xff] %vm4506, %v4530
    %v4535 = vld [vmem:[#allocation2] sm:$0xff]
    %v4536 = vld [vmem:[#allocation2 + $0x8] sm:$0xff]
    %v4537 = vld [vmem:[#allocation2 + $0x10] sm:$0xff]
    %v4538 = vld [vmem:[#allocation2 + $0x18] sm:$0xff]
    %v4539 = vld [vmem:[#allocation2 + $0x20] sm:$0xff]
    %v4540 = vld [vmem:[#allocation2 + $0x28] sm:$0xff]
    %v4541 = vld [vmem:[#allocation2 + $0x30] sm:$0xff]
    %v4542 = vld [vmem:[#allocation2 + $0x38] sm:$0xff]
    %v4543 = vld [vmem:[#allocation2 + $0x40] sm:$0xff]
    %v4544 = vld [vmem:[#allocation2 + $0x48] sm:$0xff]
    %v4545 = vld [vmem:[#allocation2 + $0x50] sm:$0xff]
    %v4546 = vld [vmem:[#allocation2 + $0x58] sm:$0xff]
    %v4547 = vld [vmem:[#allocation2 + $0x60] sm:$0xff]
    %v4548 = vld [vmem:[#allocation2 + $0x68] sm:$0xff]
    %v4549 = vld [vmem:[#allocation2 + $0x70] sm:$0xff]
    %v4550 = vld [vmem:[#allocation2 + $0x78] sm:$0xff]
    %v4551 = vsel %vm4506, %v4490, 0
    %v4553 = vsel %vm4506, %v4494, 0
    %v4556 = vsel %vm4506, %v4535, 0
    %v4559 = vsel %vm4506, %v4536, 0
    %v4562 = vsel %vm4506, %v4537, 0
    %v4565 = vsel %vm4506, %v4538, 0
    %v4568 = vsel %vm4506, %v4539, 0
    %v4571 = vsel %vm4506, %v4540, 0
    %v4574 = vsel %vm4506, %v4541, 0
    %v4577 = vsel %vm4506, %v4542, 0
    %v4580 = vsel %vm4506, %v4543, 0
    %v4583 = vsel %vm4506, %v4544, 0
    %v4586 = vsel %vm4506, %v4545, 0
    %v4589 = vsel %vm4506, %v4546, 0
    %v4592 = vsel %vm4506, %v4547, 0
    %v4595 = vsel %vm4506, %v4548, 0
    %v4598 = vsel %vm4506, %v4549, 0
    %v4601 = vsel %vm4506, %v4550, 0
    %4603 = vmatpush.xpose.msra.mxu0 %v4601
    %4604 = vmatpush.xpose.msra.mxu0 %v4598
    %4605 = vmatpush.xpose.msra.mxu0 %v4595
    %4606 = vmatpush.xpose.msra.mxu0 %v4592
    %4607 = vmatpush.xpose.msra.mxu0 %v4589
    %4608 = vmatpush.xpose.msra.mxu0 %v4586
    %4609 = vmatpush.xpose.msra.mxu0 %v4583
    %4610 = vmatpush.xpose.msra.mxu0 %v4580
    %4611 = vmatpush.xpose.msra.mxu0 %v4577
    %4612 = vmatpush.xpose.msra.mxu0 %v4574
    %4613 = vmatpush.xpose.msra.mxu0 %v4571
    %4614 = vmatpush.xpose.msra.mxu0 %v4568
    %4615 = vmatpush.xpose.msra.mxu0 %v4565
    %4616 = vmatpush.xpose.msra.mxu0 %v4562
    %4617 = vmatpush.xpose.msra.mxu0 %v4559
    %4618 = vmatpush.xpose.msra.mxu0 %v4556
    %4619 = vmatmul.f32.gmra.mxu0 %v4551
    %v4620 = vpop.f32.mrf.mxu0
    %v4621 = vadd.f32 %v4523, %v4620
    %4622 = vmatmul.f32.gmra.mxu0 %v4553
    %v4623 = vpop.f32.mrf.mxu0
    %v4624 = vadd.f32 %v4524, %v4623
    %4625 = vdwg.mxu0
    %4626 = vst [vmem:[#allocation3] sm:$0xff] %v4621
    %4627 = vst [vmem:[#allocation3 + $0x8] sm:$0xff] %v4624
    %4630 = vrot.lane.b32.xlu0 %v4491, 64
    %v4631 = vpop.permute.xlu0 %4630
    %4632 = vrot.lane.b32.xlu0 %v4495, 64
    %v4633 = vpop.permute.xlu0 %4632
    %4636 = vst.msk [vmem:[#allocation2] sm:$0xff] %vm4506, %v4631
    %4637 = vst.msk [vmem:[#allocation2 + $0x8] sm:$0xff] %vm4506, %v4633
    %v4638 = vld [vmem:[#allocation2] sm:$0xff]
    %v4639 = vld [vmem:[#allocation2 + $0x8] sm:$0xff]
    %v4640 = vld [vmem:[#allocation2 + $0x10] sm:$0xff]
    %v4641 = vld [vmem:[#allocation2 + $0x18] sm:$0xff]
    %v4642 = vld [vmem:[#allocation2 + $0x20] sm:$0xff]
    %v4643 = vld [vmem:[#allocation2 + $0x28] sm:$0xff]
    %v4644 = vld [vmem:[#allocation2 + $0x30] sm:$0xff]
    %v4645 = vld [vmem:[#allocation2 + $0x38] sm:$0xff]
    %v4646 = vld [vmem:[#allocation2 + $0x40] sm:$0xff]
    %v4647 = vld [vmem:[#allocation2 + $0x48] sm:$0xff]
    %v4648 = vld [vmem:[#allocation2 + $0x50] sm:$0xff]
    %v4649 = vld [vmem:[#allocation2 + $0x58] sm:$0xff]
    %v4650 = vld [vmem:[#allocation2 + $0x60] sm:$0xff]
    %v4651 = vld [vmem:[#allocation2 + $0x68] sm:$0xff]
    %v4652 = vld [vmem:[#allocation2 + $0x70] sm:$0xff]
    %v4653 = vld [vmem:[#allocation2 + $0x78] sm:$0xff]
    %v4654 = vsel %vm4506, %v4491, 0
    %v4656 = vsel %vm4506, %v4495, 0
    %v4659 = vsel %vm4506, %v4638, 0
    %v4662 = vsel %vm4506, %v4639, 0
    %v4665 = vsel %vm4506, %v4640, 0
    %v4668 = vsel %vm4506, %v4641, 0
    %v4671 = vsel %vm4506, %v4642, 0
    %v4674 = vsel %vm4506, %v4643, 0
    %v4677 = vsel %vm4506, %v4644, 0
    %v4680 = vsel %vm4506, %v4645, 0
    %v4683 = vsel %vm4506, %v4646, 0
    %v4686 = vsel %vm4506, %v4647, 0
    %v4689 = vsel %vm4506, %v4648, 0
    %v4692 = vsel %vm4506, %v4649, 0
    %v4695 = vsel %vm4506, %v4650, 0
    %v4698 = vsel %vm4506, %v4651, 0
    %v4701 = vsel %vm4506, %v4652, 0
    %v4704 = vsel %vm4506, %v4653, 0
    %4706 = vmatpush.xpose.msra.mxu0 %v4704
    %4707 = vmatpush.xpose.msra.mxu0 %v4701
    %4708 = vmatpush.xpose.msra.mxu0 %v4698
    %4709 = vmatpush.xpose.msra.mxu0 %v4695
    %4710 = vmatpush.xpose.msra.mxu0 %v4692
    %4711 = vmatpush.xpose.msra.mxu0 %v4689
    %4712 = vmatpush.xpose.msra.mxu0 %v4686
    %4713 = vmatpush.xpose.msra.mxu0 %v4683
    %4714 = vmatpush.xpose.msra.mxu0 %v4680
    %4715 = vmatpush.xpose.msra.mxu0 %v4677
    %4716 = vmatpush.xpose.msra.mxu0 %v4674
    %4717 = vmatpush.xpose.msra.mxu0 %v4671
    %4718 = vmatpush.xpose.msra.mxu0 %v4668
    %4719 = vmatpush.xpose.msra.mxu0 %v4665
    %4720 = vmatpush.xpose.msra.mxu0 %v4662
    %4721 = vmatpush.xpose.msra.mxu0 %v4659
    %4722 = vmatmul.f32.gmra.mxu0 %v4654
    %v4723 = vpop.f32.mrf.mxu0
    %v4724 = vadd.f32 %v4523, %v4723
    %4725 = vmatmul.f32.gmra.mxu0 %v4656
    %v4726 = vpop.f32.mrf.mxu0
    %v4727 = vadd.f32 %v4524, %v4726
    %4728 = vdwg.mxu0
    %s4729 = scalar_lea.vmem [#allocation3], 16
    %4730 = vst [vmem:[%s4729] sm:$0xff] %v4724
    %4731 = vst [vmem:[%s4729 + $0x8] sm:$0xff] %v4727
    %4734 = vrot.lane.b32.xlu0 %v4492, 64
    %v4735 = vpop.permute.xlu0 %4734
    %4736 = vrot.lane.b32.xlu0 %v4496, 64
    %v4737 = vpop.permute.xlu0 %4736
    %4740 = vst.msk [vmem:[#allocation2] sm:$0xff] %vm4506, %v4735
    %4741 = vst.msk [vmem:[#allocation2 + $0x8] sm:$0xff] %vm4506, %v4737
    %v4742 = vld [vmem:[#allocation2] sm:$0xff]
    %v4743 = vld [vmem:[#allocation2 + $0x8] sm:$0xff]
    %v4744 = vld [vmem:[#allocation2 + $0x10] sm:$0xff]
    %v4745 = vld [vmem:[#allocation2 + $0x18] sm:$0xff]
    %v4746 = vld [vmem:[#allocation2 + $0x20] sm:$0xff]
    %v4747 = vld [vmem:[#allocation2 + $0x28] sm:$0xff]
    %v4748 = vld [vmem:[#allocation2 + $0x30] sm:$0xff]
    %v4749 = vld [vmem:[#allocation2 + $0x38] sm:$0xff]
    %v4750 = vld [vmem:[#allocation2 + $0x40] sm:$0xff]
    %v4751 = vld [vmem:[#allocation2 + $0x48] sm:$0xff]
    %v4752 = vld [vmem:[#allocation2 + $0x50] sm:$0xff]
    %v4753 = vld [vmem:[#allocation2 + $0x58] sm:$0xff]
    %v4754 = vld [vmem:[#allocation2 + $0x60] sm:$0xff]
    %v4755 = vld [vmem:[#allocation2 + $0x68] sm:$0xff]
    %v4756 = vld [vmem:[#allocation2 + $0x70] sm:$0xff]
    %v4757 = vld [vmem:[#allocation2 + $0x78] sm:$0xff]
    %v4758 = vsel %vm4506, %v4492, 0
    %v4760 = vsel %vm4506, %v4496, 0
    %v4763 = vsel %vm4506, %v4742, 0
    %v4766 = vsel %vm4506, %v4743, 0
    %v4769 = vsel %vm4506, %v4744, 0
    %v4772 = vsel %vm4506, %v4745, 0
    %v4775 = vsel %vm4506, %v4746, 0
    %v4778 = vsel %vm4506, %v4747, 0
    %v4781 = vsel %vm4506, %v4748, 0
    %v4784 = vsel %vm4506, %v4749, 0
    %v4787 = vsel %vm4506, %v4750, 0
    %v4790 = vsel %vm4506, %v4751, 0
    %v4793 = vsel %vm4506, %v4752, 0
    %v4796 = vsel %vm4506, %v4753, 0
    %v4799 = vsel %vm4506, %v4754, 0
    %v4802 = vsel %vm4506, %v4755, 0
    %v4805 = vsel %vm4506, %v4756, 0
    %v4808 = vsel %vm4506, %v4757, 0
    %4810 = vmatpush.xpose.msra.mxu0 %v4808
    %4811 = vmatpush.xpose.msra.mxu0 %v4805
    %4812 = vmatpush.xpose.msra.mxu0 %v4802
    %4813 = vmatpush.xpose.msra.mxu0 %v4799
    %4814 = vmatpush.xpose.msra.mxu0 %v4796
    %4815 = vmatpush.xpose.msra.mxu0 %v4793
    %4816 = vmatpush.xpose.msra.mxu0 %v4790
    %4817 = vmatpush.xpose.msra.mxu0 %v4787
    %4818 = vmatpush.xpose.msra.mxu0 %v4784
    %4819 = vmatpush.xpose.msra.mxu0 %v4781
    %4820 = vmatpush.xpose.msra.mxu0 %v4778
    %4821 = vmatpush.xpose.msra.mxu0 %v4775
    %4822 = vmatpush.xpose.msra.mxu0 %v4772
    %4823 = vmatpush.xpose.msra.mxu0 %v4769
    %4824 = vmatpush.xpose.msra.mxu0 %v4766
    %4825 = vmatpush.xpose.msra.mxu0 %v4763
    %4826 = vmatmul.f32.gmra.mxu0 %v4758
    %v4827 = vpop.f32.mrf.mxu0
    %v4828 = vadd.f32 %v4523, %v4827
    %4829 = vmatmul.f32.gmra.mxu0 %v4760
    %v4830 = vpop.f32.mrf.mxu0
    %v4831 = vadd.f32 %v4524, %v4830
    %4832 = vdwg.mxu0
    %s4833 = scalar_lea.vmem [#allocation3], 32
    %4834 = vst [vmem:[%s4833] sm:$0xff] %v4828
    %4835 = vst [vmem:[%s4833 + $0x8] sm:$0xff] %v4831
    %4838 = vrot.lane.b32.xlu0 %v4493, 64
    %v4839 = vpop.permute.xlu0 %4838
    %4840 = vrot.lane.b32.xlu0 %v4497, 64
    %v4841 = vpop.permute.xlu0 %4840
    %4844 = vst.msk [vmem:[#allocation2] sm:$0xff] %vm4506, %v4839
    %4845 = vst.msk [vmem:[#allocation2 + $0x8] sm:$0xff] %vm4506, %v4841
    %v4846 = vld [vmem:[#allocation2] sm:$0xff]
    %v4847 = vld [vmem:[#allocation2 + $0x8] sm:$0xff]
    %v4848 = vld [vmem:[#allocation2 + $0x10] sm:$0xff]
    %v4849 = vld [vmem:[#allocation2 + $0x18] sm:$0xff]
    %v4850 = vld [vmem:[#allocation2 + $0x20] sm:$0xff]
    %v4851 = vld [vmem:[#allocation2 + $0x28] sm:$0xff]
    %v4852 = vld [vmem:[#allocation2 + $0x30] sm:$0xff]
    %v4853 = vld [vmem:[#allocation2 + $0x38] sm:$0xff]
    %v4854 = vld [vmem:[#allocation2 + $0x40] sm:$0xff]
    %v4855 = vld [vmem:[#allocation2 + $0x48] sm:$0xff]
    %v4856 = vld [vmem:[#allocation2 + $0x50] sm:$0xff]
    %v4857 = vld [vmem:[#allocation2 + $0x58] sm:$0xff]
    %v4858 = vld [vmem:[#allocation2 + $0x60] sm:$0xff]
    %v4859 = vld [vmem:[#allocation2 + $0x68] sm:$0xff]
    %v4860 = vld [vmem:[#allocation2 + $0x70] sm:$0xff]
    %v4861 = vld [vmem:[#allocation2 + $0x78] sm:$0xff]
    %v4862 = vsel %vm4506, %v4493, 0
    %v4864 = vsel %vm4506, %v4497, 0
    %v4867 = vsel %vm4506, %v4846, 0
    %v4870 = vsel %vm4506, %v4847, 0
    %v4873 = vsel %vm4506, %v4848, 0
    %v4876 = vsel %vm4506, %v4849, 0
    %v4879 = vsel %vm4506, %v4850, 0
    %v4882 = vsel %vm4506, %v4851, 0
    %v4885 = vsel %vm4506, %v4852, 0
    %v4888 = vsel %vm4506, %v4853, 0
    %v4891 = vsel %vm4506, %v4854, 0
    %v4894 = vsel %vm4506, %v4855, 0
    %v4897 = vsel %vm4506, %v4856, 0
    %v4900 = vsel %vm4506, %v4857, 0
    %v4903 = vsel %vm4506, %v4858, 0
    %v4906 = vsel %vm4506, %v4859, 0
    %v4909 = vsel %vm4506, %v4860, 0
    %v4912 = vsel %vm4506, %v4861, 0
    %4914 = vmatpush.xpose.msra.mxu0 %v4912
    %4915 = vmatpush.xpose.msra.mxu0 %v4909
    %4916 = vmatpush.xpose.msra.mxu0 %v4906
    %4917 = vmatpush.xpose.msra.mxu0 %v4903
    %4918 = vmatpush.xpose.msra.mxu0 %v4900
    %4919 = vmatpush.xpose.msra.mxu0 %v4897
    %4920 = vmatpush.xpose.msra.mxu0 %v4894
    %4921 = vmatpush.xpose.msra.mxu0 %v4891
    %4922 = vmatpush.xpose.msra.mxu0 %v4888
    %4923 = vmatpush.xpose.msra.mxu0 %v4885
    %4924 = vmatpush.xpose.msra.mxu0 %v4882
    %4925 = vmatpush.xpose.msra.mxu0 %v4879
    %4926 = vmatpush.xpose.msra.mxu0 %v4876
    %4927 = vmatpush.xpose.msra.mxu0 %v4873
    %4928 = vmatpush.xpose.msra.mxu0 %v4870
    %4929 = vmatpush.xpose.msra.mxu0 %v4867
    %4930 = vmatmul.f32.gmra.mxu0 %v4862
    %v4931 = vpop.f32.mrf.mxu0
    %v4932 = vadd.f32 %v4523, %v4931
    %4933 = vmatmul.f32.gmra.mxu0 %v4864
    %v4934 = vpop.f32.mrf.mxu0
    %v4935 = vadd.f32 %v4524, %v4934
    %4936 = vdwg.mxu0
    %s4937 = scalar_lea.vmem [#allocation3], 48
    %4938 = vst [vmem:[%s4937] sm:$0xff] %v4932
    %4939 = vst [vmem:[%s4937 + $0x8] sm:$0xff] %v4935
    %s4940 = scalar_lea.vmem %s5, 16
    %v4941 = vld [vmem:[%s4940] sm:$0xff]
    %v4942 = vld [vmem:[%s4940 + $0x8] sm:$0xff]
    %4945 = vrot.lane.b32.xlu0 %v4498, 64
    %v4946 = vpop.permute.xlu0 %4945
    %4947 = vrot.lane.b32.xlu0 %v4502, 64
    %v4948 = vpop.permute.xlu0 %4947
    %4951 = vst.msk [vmem:[#allocation2] sm:$0xff] %vm4506, %v4946
    %4952 = vst.msk [vmem:[#allocation2 + $0x8] sm:$0xff] %vm4506, %v4948
    %v4953 = vld [vmem:[#allocation2] sm:$0xff]
    %v4954 = vld [vmem:[#allocation2 + $0x8] sm:$0xff]
    %v4955 = vld [vmem:[#allocation2 + $0x10] sm:$0xff]
    %v4956 = vld [vmem:[#allocation2 + $0x18] sm:$0xff]
    %v4957 = vld [vmem:[#allocation2 + $0x20] sm:$0xff]
    %v4958 = vld [vmem:[#allocation2 + $0x28] sm:$0xff]
    %v4959 = vld [vmem:[#allocation2 + $0x30] sm:$0xff]
    %v4960 = vld [vmem:[#allocation2 + $0x38] sm:$0xff]
    %v4961 = vld [vmem:[#allocation2 + $0x40] sm:$0xff]
    %v4962 = vld [vmem:[#allocation2 + $0x48] sm:$0xff]
    %v4963 = vld [vmem:[#allocation2 + $0x50] sm:$0xff]
    %v4964 = vld [vmem:[#allocation2 + $0x58] sm:$0xff]
    %v4965 = vld [vmem:[#allocation2 + $0x60] sm:$0xff]
    %v4966 = vld [vmem:[#allocation2 + $0x68] sm:$0xff]
    %v4967 = vld [vmem:[#allocation2 + $0x70] sm:$0xff]
    %v4968 = vld [vmem:[#allocation2 + $0x78] sm:$0xff]
    %v4969 = vsel %vm4506, %v4498, 0
    %v4971 = vsel %vm4506, %v4502, 0
    %v4974 = vsel %vm4506, %v4953, 0
    %v4977 = vsel %vm4506, %v4954, 0
    %v4980 = vsel %vm4506, %v4955, 0
    %v4983 = vsel %vm4506, %v4956, 0
    %v4986 = vsel %vm4506, %v4957, 0
    %v4989 = vsel %vm4506, %v4958, 0
    %v4992 = vsel %vm4506, %v4959, 0
    %v4995 = vsel %vm4506, %v4960, 0
    %v4998 = vsel %vm4506, %v4961, 0
    %v5001 = vsel %vm4506, %v4962, 0
    %v5004 = vsel %vm4506, %v4963, 0
    %v5007 = vsel %vm4506, %v4964, 0
    %v5010 = vsel %vm4506, %v4965, 0
    %v5013 = vsel %vm4506, %v4966, 0
    %v5016 = vsel %vm4506, %v4967, 0
    %v5019 = vsel %vm4506, %v4968, 0
    %5021 = vmatpush.xpose.msra.mxu0 %v5019
    %5022 = vmatpush.xpose.msra.mxu0 %v5016
    %5023 = vmatpush.xpose.msra.mxu0 %v5013
    %5024 = vmatpush.xpose.msra.mxu0 %v5010
    %5025 = vmatpush.xpose.msra.mxu0 %v5007
    %5026 = vmatpush.xpose.msra.mxu0 %v5004
    %5027 = vmatpush.xpose.msra.mxu0 %v5001
    %5028 = vmatpush.xpose.msra.mxu0 %v4998
    %5029 = vmatpush.xpose.msra.mxu0 %v4995
    %5030 = vmatpush.xpose.msra.mxu0 %v4992
    %5031 = vmatpush.xpose.msra.mxu0 %v4989
    %5032 = vmatpush.xpose.msra.mxu0 %v4986
    %5033 = vmatpush.xpose.msra.mxu0 %v4983
    %5034 = vmatpush.xpose.msra.mxu0 %v4980
    %5035 = vmatpush.xpose.msra.mxu0 %v4977
    %5036 = vmatpush.xpose.msra.mxu0 %v4974
    %5037 = vmatmul.f32.gmra.mxu0 %v4969
    %v5038 = vpop.f32.mrf.mxu0
    %v5039 = vadd.f32 %v4941, %v5038
    %5040 = vmatmul.f32.gmra.mxu0 %v4971
    %v5041 = vpop.f32.mrf.mxu0
    %v5042 = vadd.f32 %v4942, %v5041
    %5043 = vdwg.mxu0
    %s5044 = scalar_lea.vmem [#allocation3], 64
    %5045 = vst [vmem:[%s5044] sm:$0xff] %v5039
    %5046 = vst [vmem:[%s5044 + $0x8] sm:$0xff] %v5042
    %5049 = vrot.lane.b32.xlu0 %v4499, 64
    %v5050 = vpop.permute.xlu0 %5049
    %5051 = vrot.lane.b32.xlu0 %v4503, 64
    %v5052 = vpop.permute.xlu0 %5051
    %5055 = vst.msk [vmem:[#allocation2] sm:$0xff] %vm4506, %v5050
    %5056 = vst.msk [vmem:[#allocation2 + $0x8] sm:$0xff] %vm4506, %v5052
    %v5057 = vld [vmem:[#allocation2] sm:$0xff]
    %v5058 = vld [vmem:[#allocation2 + $0x8] sm:$0xff]
    %v5059 = vld [vmem:[#allocation2 + $0x10] sm:$0xff]
    %v5060 = vld [vmem:[#allocation2 + $0x18] sm:$0xff]
    %v5061 = vld [vmem:[#allocation2 + $0x20] sm:$0xff]
    %v5062 = vld [vmem:[#allocation2 + $0x28] sm:$0xff]
    %v5063 = vld [vmem:[#allocation2 + $0x30] sm:$0xff]
    %v5064 = vld [vmem:[#allocation2 + $0x38] sm:$0xff]
    %v5065 = vld [vmem:[#allocation2 + $0x40] sm:$0xff]
    %v5066 = vld [vmem:[#allocation2 + $0x48] sm:$0xff]
    %v5067 = vld [vmem:[#allocation2 + $0x50] sm:$0xff]
    %v5068 = vld [vmem:[#allocation2 + $0x58] sm:$0xff]
    %v5069 = vld [vmem:[#allocation2 + $0x60] sm:$0xff]
    %v5070 = vld [vmem:[#allocation2 + $0x68] sm:$0xff]
    %v5071 = vld [vmem:[#allocation2 + $0x70] sm:$0xff]
    %v5072 = vld [vmem:[#allocation2 + $0x78] sm:$0xff]
    %v5073 = vsel %vm4506, %v4499, 0
    %v5075 = vsel %vm4506, %v4503, 0
    %v5078 = vsel %vm4506, %v5057, 0
    %v5081 = vsel %vm4506, %v5058, 0
    %v5084 = vsel %vm4506, %v5059, 0
    %v5087 = vsel %vm4506, %v5060, 0
    %v5090 = vsel %vm4506, %v5061, 0
    %v5093 = vsel %vm4506, %v5062, 0
    %v5096 = vsel %vm4506, %v5063, 0
    %v5099 = vsel %vm4506, %v5064, 0
    %v5102 = vsel %vm4506, %v5065, 0
    %v5105 = vsel %vm4506, %v5066, 0
    %v5108 = vsel %vm4506, %v5067, 0
    %v5111 = vsel %vm4506, %v5068, 0
    %v5114 = vsel %vm4506, %v5069, 0
    %v5117 = vsel %vm4506, %v5070, 0
    %v5120 = vsel %vm4506, %v5071, 0
    %v5123 = vsel %vm4506, %v5072, 0
    %5125 = vmatpush.xpose.msra.mxu0 %v5123
    %5126 = vmatpush.xpose.msra.mxu0 %v5120
    %5127 = vmatpush.xpose.msra.mxu0 %v5117
    %5128 = vmatpush.xpose.msra.mxu0 %v5114
    %5129 = vmatpush.xpose.msra.mxu0 %v5111
    %5130 = vmatpush.xpose.msra.mxu0 %v5108
    %5131 = vmatpush.xpose.msra.mxu0 %v5105
    %5132 = vmatpush.xpose.msra.mxu0 %v5102
    %5133 = vmatpush.xpose.msra.mxu0 %v5099
    %5134 = vmatpush.xpose.msra.mxu0 %v5096
    %5135 = vmatpush.xpose.msra.mxu0 %v5093
    %5136 = vmatpush.xpose.msra.mxu0 %v5090
    %5137 = vmatpush.xpose.msra.mxu0 %v5087
    %5138 = vmatpush.xpose.msra.mxu0 %v5084
    %5139 = vmatpush.xpose.msra.mxu0 %v5081
    %5140 = vmatpush.xpose.msra.mxu0 %v5078
    %5141 = vmatmul.f32.gmra.mxu0 %v5073
    %v5142 = vpop.f32.mrf.mxu0
    %v5143 = vadd.f32 %v4941, %v5142
    %5144 = vmatmul.f32.gmra.mxu0 %v5075
    %v5145 = vpop.f32.mrf.mxu0
    %v5146 = vadd.f32 %v4942, %v5145
    %5147 = vdwg.mxu0
    %s5148 = scalar_lea.vmem [#allocation3], 80
    %5149 = vst [vmem:[%s5148] sm:$0xff] %v5143
    %5150 = vst [vmem:[%s5148 + $0x8] sm:$0xff] %v5146
    %5153 = vrot.lane.b32.xlu0 %v4500, 64
    %v5154 = vpop.permute.xlu0 %5153
    %5155 = vrot.lane.b32.xlu0 %v4504, 64
    %v5156 = vpop.permute.xlu0 %5155
    %5159 = vst.msk [vmem:[#allocation2] sm:$0xff] %vm4506, %v5154
    %5160 = vst.msk [vmem:[#allocation2 + $0x8] sm:$0xff] %vm4506, %v5156
    %v5161 = vld [vmem:[#allocation2] sm:$0xff]
    %v5162 = vld [vmem:[#allocation2 + $0x8] sm:$0xff]
    %v5163 = vld [vmem:[#allocation2 + $0x10] sm:$0xff]
    %v5164 = vld [vmem:[#allocation2 + $0x18] sm:$0xff]
    %v5165 = vld [vmem:[#allocation2 + $0x20] sm:$0xff]
    %v5166 = vld [vmem:[#allocation2 + $0x28] sm:$0xff]
    %v5167 = vld [vmem:[#allocation2 + $0x30] sm:$0xff]
    %v5168 = vld [vmem:[#allocation2 + $0x38] sm:$0xff]
    %v5169 = vld [vmem:[#allocation2 + $0x40] sm:$0xff]
    %v5170 = vld [vmem:[#allocation2 + $0x48] sm:$0xff]
    %v5171 = vld [vmem:[#allocation2 + $0x50] sm:$0xff]
    %v5172 = vld [vmem:[#allocation2 + $0x58] sm:$0xff]
    %v5173 = vld [vmem:[#allocation2 + $0x60] sm:$0xff]
    %v5174 = vld [vmem:[#allocation2 + $0x68] sm:$0xff]
    %v5175 = vld [vmem:[#allocation2 + $0x70] sm:$0xff]
    %v5176 = vld [vmem:[#allocation2 + $0x78] sm:$0xff]
    %v5177 = vsel %vm4506, %v4500, 0
    %v5179 = vsel %vm4506, %v4504, 0
    %v5182 = vsel %vm4506, %v5161, 0
    %v5185 = vsel %vm4506, %v5162, 0
    %v5188 = vsel %vm4506, %v5163, 0
    %v5191 = vsel %vm4506, %v5164, 0
    %v5194 = vsel %vm4506, %v5165, 0
    %v5197 = vsel %vm4506, %v5166, 0
    %v5200 = vsel %vm4506, %v5167, 0
    %v5203 = vsel %vm4506, %v5168, 0
    %v5206 = vsel %vm4506, %v5169, 0
    %v5209 = vsel %vm4506, %v5170, 0
    %v5212 = vsel %vm4506, %v5171, 0
    %v5215 = vsel %vm4506, %v5172, 0
    %v5218 = vsel %vm4506, %v5173, 0
    %v5221 = vsel %vm4506, %v5174, 0
    %v5224 = vsel %vm4506, %v5175, 0
    %v5227 = vsel %vm4506, %v5176, 0
    %5229 = vmatpush.xpose.msra.mxu0 %v5227
    %5230 = vmatpush.xpose.msra.mxu0 %v5224
    %5231 = vmatpush.xpose.msra.mxu0 %v5221
    %5232 = vmatpush.xpose.msra.mxu0 %v5218
    %5233 = vmatpush.xpose.msra.mxu0 %v5215
    %5234 = vmatpush.xpose.msra.mxu0 %v5212
    %5235 = vmatpush.xpose.msra.mxu0 %v5209
    %5236 = vmatpush.xpose.msra.mxu0 %v5206
    %5237 = vmatpush.xpose.msra.mxu0 %v5203
    %5238 = vmatpush.xpose.msra.mxu0 %v5200
    %5239 = vmatpush.xpose.msra.mxu0 %v5197
    %5240 = vmatpush.xpose.msra.mxu0 %v5194
    %5241 = vmatpush.xpose.msra.mxu0 %v5191
    %5242 = vmatpush.xpose.msra.mxu0 %v5188
    %5243 = vmatpush.xpose.msra.mxu0 %v5185
    %5244 = vmatpush.xpose.msra.mxu0 %v5182
    %5245 = vmatmul.f32.gmra.mxu0 %v5177
    %v5246 = vpop.f32.mrf.mxu0
    %v5247 = vadd.f32 %v4941, %v5246
    %5248 = vmatmul.f32.gmra.mxu0 %v5179
    %v5249 = vpop.f32.mrf.mxu0
    %v5250 = vadd.f32 %v4942, %v5249
    %5251 = vdwg.mxu0
    %s5252 = scalar_lea.vmem [#allocation3], 96
    %5253 = vst [vmem:[%s5252] sm:$0xff] %v5247
    %5254 = vst [vmem:[%s5252 + $0x8] sm:$0xff] %v5250
    %5257 = vrot.lane.b32.xlu0 %v4501, 64
    %v5258 = vpop.permute.xlu0 %5257
    %5259 = vrot.lane.b32.xlu0 %v4505, 64
    %v5260 = vpop.permute.xlu0 %5259
    %5263 = vst.msk [vmem:[#allocation2] sm:$0xff] %vm4506, %v5258
    %5264 = vst.msk [vmem:[#allocation2 + $0x8] sm:$0xff] %vm4506, %v5260
    %v5265 = vld [vmem:[#allocation2] sm:$0xff]
    %v5266 = vld [vmem:[#allocation2 + $0x8] sm:$0xff]
    %v5267 = vld [vmem:[#allocation2 + $0x10] sm:$0xff]
    %v5268 = vld [vmem:[#allocation2 + $0x18] sm:$0xff]
    %v5269 = vld [vmem:[#allocation2 + $0x20] sm:$0xff]
    %v5270 = vld [vmem:[#allocation2 + $0x28] sm:$0xff]
    %v5271 = vld [vmem:[#allocation2 + $0x30] sm:$0xff]
    %v5272 = vld [vmem:[#allocation2 + $0x38] sm:$0xff]
    %v5273 = vld [vmem:[#allocation2 + $0x40] sm:$0xff]
    %v5274 = vld [vmem:[#allocation2 + $0x48] sm:$0xff]
    %v5275 = vld [vmem:[#allocation2 + $0x50] sm:$0xff]
    %v5276 = vld [vmem:[#allocation2 + $0x58] sm:$0xff]
    %v5277 = vld [vmem:[#allocation2 + $0x60] sm:$0xff]
    %v5278 = vld [vmem:[#allocation2 + $0x68] sm:$0xff]
    %v5279 = vld [vmem:[#allocation2 + $0x70] sm:$0xff]
    %v5280 = vld [vmem:[#allocation2 + $0x78] sm:$0xff]
    %v5281 = vsel %vm4506, %v4501, 0
    %v5283 = vsel %vm4506, %v4505, 0
    %v5286 = vsel %vm4506, %v5265, 0
    %v5289 = vsel %vm4506, %v5266, 0
    %v5292 = vsel %vm4506, %v5267, 0
    %v5295 = vsel %vm4506, %v5268, 0
    %v5298 = vsel %vm4506, %v5269, 0
    %v5301 = vsel %vm4506, %v5270, 0
    %v5304 = vsel %vm4506, %v5271, 0
    %v5307 = vsel %vm4506, %v5272, 0
    %v5310 = vsel %vm4506, %v5273, 0
    %v5313 = vsel %vm4506, %v5274, 0
    %v5316 = vsel %vm4506, %v5275, 0
    %v5319 = vsel %vm4506, %v5276, 0
    %v5322 = vsel %vm4506, %v5277, 0
    %v5325 = vsel %vm4506, %v5278, 0
    %v5328 = vsel %vm4506, %v5279, 0
    %v5331 = vsel %vm4506, %v5280, 0
    %5333 = vmatpush.xpose.msra.mxu0 %v5331
    %5334 = vmatpush.xpose.msra.mxu0 %v5328
    %5335 = vmatpush.xpose.msra.mxu0 %v5325
    %5336 = vmatpush.xpose.msra.mxu0 %v5322
    %5337 = vmatpush.xpose.msra.mxu0 %v5319
    %5338 = vmatpush.xpose.msra.mxu0 %v5316
    %5339 = vmatpush.xpose.msra.mxu0 %v5313
    %5340 = vmatpush.xpose.msra.mxu0 %v5310
    %5341 = vmatpush.xpose.msra.mxu0 %v5307
    %5342 = vmatpush.xpose.msra.mxu0 %v5304
    %5343 = vmatpush.xpose.msra.mxu0 %v5301
    %5344 = vmatpush.xpose.msra.mxu0 %v5298
    %5345 = vmatpush.xpose.msra.mxu0 %v5295
    %5346 = vmatpush.xpose.msra.mxu0 %v5292
    %5347 = vmatpush.xpose.msra.mxu0 %v5289
    %5348 = vmatpush.xpose.msra.mxu0 %v5286
    %5349 = vmatmul.f32.gmra.mxu0 %v5281
    %v5350 = vpop.f32.mrf.mxu0
    %v5351 = vadd.f32 %v4941, %v5350
    %5352 = vmatmul.f32.gmra.mxu0 %v5283
    %v5353 = vpop.f32.mrf.mxu0
    %v5354 = vadd.f32 %v4942, %v5353
    %5355 = vdwg.mxu0
    %s5356 = scalar_lea.vmem [#allocation3], 112
    %5357 = vst [vmem:[%s5356] sm:$0xff] %v5351
    %5358 = vst [vmem:[%s5356 + $0x8] sm:$0xff] %v5354
    // Predicated region
    $region26: #{gpnet1_forward.1} parent=1 // pred_check
      _
    $region27: #{gpnet1_forward.1} parent=1 // pred_check_branch
      %5360 = sbr.rel (0) target = $region29
    $region28: #{gpnet1_forward.1} parent=1 // pred_region
      %5362 = vsyncadd [#allocation4], 0
      %s5363 = sshll.u32 [#allocation3], 4
      %s5364 = int_to_ptr.vmem [resolvable:$true] %s5363
      %s5365 = sshll.u32 %s6, 4
      %s5366 = int_to_ptr.hbm [resolvable:$true] %s5365
      %5371 = dma.vmem_to_hbm [thread:$0]  %s5364, 2048, %s5366, [#allocation4], 128, 128, 8
    $region29: #{gpnet1_forward.1} parent=1 // pred_fallthru
      _
    // Predicated region
    $region30: #{gpnet1_forward.1} parent=1 // pred_check
      _
    $region31: #{gpnet1_forward.1} parent=1 // pred_check_branch
      %5373 = sbr.rel (0) target = $region33
    $region32: #{gpnet1_forward.1} parent=1 // pred_region
      %5375 = dma.done [#allocation4], 2048
    $region33: #{gpnet1_forward.1} parent=1 // pred_fallthru
      _
    %5376 = vsyncpa [#allocation4], 1

</llo_original>
